<compile_context>
chip_gen: v6e
topology: v6e:2x2x1
jax: 0.10.0
libtpu: 0.0.40
codegen_flags: <defaults>
</compile_context>

<pallas_src>
import functools

import jax
import jax.numpy as jnp
from jax.experimental import pallas as pl
from jax.experimental.pallas import tpu as pltpu


# ------------------------------ tiling helper -------------------------------

def _pick_row_tile(M, W, Wpad, Cin, Chid, K, budget_bytes=20 * 1024 * 1024):
    """Largest row (B*H) tile that divides M and keeps the per-tile VMEM
    footprint under a conservative budget (fits v7x/v6e 32 MiB scoped default
    and v5e's 16 MiB with double-buffering headroom)."""
    per_row = (
        2 * Wpad * Cin * 2           # x block (bf16), double-buffered
        + 2 * W * Chid * 4           # h-seq output block (f32), double-buffered
        + W * Chid * 4               # resident c output block (f32)
        + Wpad * Chid * 4            # h halo scratch (f32)
        + W * K * (Cin + Chid) * 2   # im2col slab (bf16)
        + 2 * W * 4 * Chid * 4       # gate temporaries (f32)
    )
    max_rows = max(8, budget_bytes // max(per_row, 1))
    if M <= max_rows:
        return M
    # Prefer nice power-of-two divisors.
    for c in (4096, 2048, 1024, 512, 256, 128, 64, 32, 16, 8):
        if c <= max_rows and M % c == 0:
            return c
    # Otherwise the largest divisor of M that fits (bounded host-side search).
    for c in range(int(min(M, max_rows)), 0, -1):
        if M % c == 0:
            return c
    return M


# ----------------------------- Pallas kernel --------------------------------

def _make_layer_kernel(TM, W, K, Cin, Chid):
    pad = K // 2

    def kernel(x_ref, w_ref, b_ref, hseq_ref, c_ref, hpad_ref):
        t = pl.program_id(1)

        @pl.when(t == 0)
        def _init():
            # Zero h (including halo columns) and c at the start of each M tile.
            hpad_ref[...] = jnp.zeros_like(hpad_ref)
            c_ref[...] = jnp.zeros_like(c_ref)

        # gates = Conv2d(cat([x, h], C), kernel=(1,K), pad=(0,K//2)) + bias,
        # as ONE fused bf16 MXU contraction of depth K*(Cin+Chid), f32 acc.
        x = x_ref[...]                                   # (TM, Wpad, Cin) bf16
        h = hpad_ref[...].astype(jnp.bfloat16)           # (TM, Wpad, Chid)
        cols = [x[:, k:k + W, :].reshape(TM * W, Cin) for k in range(K)]
        cols += [h[:, k:k + W, :].reshape(TM * W, Chid) for k in range(K)]
        slab = jnp.concatenate(cols, axis=1)             # (TM*W, K*(Cin+Chid))
        acc = jnp.dot(slab, w_ref[...], preferred_element_type=jnp.float32)
        acc = acc + b_ref[...]                           # (TM*W, 4*Chid) f32

        # LSTM gate math in f32 (VPU/EUP).
        i = jax.nn.sigmoid(acc[:, 0 * Chid:1 * Chid])
        f = jax.nn.sigmoid(acc[:, 1 * Chid:2 * Chid])
        o = jax.nn.sigmoid(acc[:, 2 * Chid:3 * Chid])
        g = jnp.tanh(acc[:, 3 * Chid:4 * Chid])

        c_prev = c_ref[...].reshape(TM * W, Chid)
        c_next = f * c_prev + i * g
        h_next = o * jnp.tanh(c_next)

        # State update + streamed output.
        h3 = h_next.reshape(TM, W, Chid)
        c_ref[...] = c_next.reshape(TM, W, Chid)   # VMEM resident, HBM once/M-tile
        hpad_ref[:, pad:pad + W, :] = h3           # interior only; halo stays zero
        hseq_ref[...] = h3

    return kernel


@functools.lru_cache(maxsize=None)
def _make_layer_call(T, M, TM, W, K, Cin, Chid):
    pad = K // 2
    Wpad = W + 2 * pad
    Kc = K * (Cin + Chid)
    num_m = pl.cdiv(M, TM)

    return pl.pallas_call(
        _make_layer_kernel(TM, W, K, Cin, Chid),
        out_shape=(
            jax.ShapeDtypeStruct((T, M, W, Chid), jnp.float32),   # h over time
            jax.ShapeDtypeStruct((M, W, Chid), jnp.float32),      # final c
        ),
        grid_spec=pltpu.PrefetchScalarGridSpec(
            num_scalar_prefetch=0,
            grid=(num_m, T),
            in_specs=[
                # x_t streams per (m, t); leading T dim squeezed out of the ref.
                pl.BlockSpec((None, TM, Wpad, Cin), lambda m, t: (t, m, 0, 0)),
                # Fused weight + bias: constant index -> DMA'd once, VMEM resident.
                pl.BlockSpec((Kc, 4 * Chid), lambda m, t: (0, 0)),
                pl.BlockSpec((1, 4 * Chid), lambda m, t: (0, 0)),
            ],
            out_specs=(
                pl.BlockSpec((None, TM, W, Chid), lambda m, t: (t, m, 0, 0)),
                # Constant in t: stays VMEM resident across the recurrence.
                pl.BlockSpec((TM, W, Chid), lambda m, t: (m, 0, 0)),
            ),
            scratch_shapes=[pltpu.VMEM((TM, Wpad, Chid), jnp.float32)],
        ),
        compiler_params=pltpu.CompilerParams(
            dimension_semantics=("parallel", "arbitrary"),
            vmem_limit_bytes=32 * 1024 * 1024,
        ),
    )


def _conv_lstm_layer_pallas(xp, w_all, b, T, M, W, K, Cin, Chid):
    Wpad = W + 2 * (K // 2)
    TM = _pick_row_tile(M, W, Wpad, Cin, Chid, K)
    return _make_layer_call(T, M, TM, W, K, Cin, Chid)(xp, w_all, b)


# --------------------------- pure-JAX reference -----------------------------

def _conv_lstm_layer_ref(xp, w_all, b, T, M, W, K, Cin, Chid):
    """Same math as the kernel (bf16 matmul operands, f32 accumulation)."""
    pad = K // 2

    def step(carry, x_t):
        h, c = carry                                          # (M, W, Chid) f32
        hp = jnp.pad(h, ((0, 0), (pad, pad), (0, 0))).astype(jnp.bfloat16)
        cols = [x_t[:, k:k + W, :].reshape(M * W, Cin) for k in range(K)]
        cols += [hp[:, k:k + W, :].reshape(M * W, Chid) for k in range(K)]
        slab = jnp.concatenate(cols, axis=1)
        acc = jnp.dot(slab, w_all, preferred_element_type=jnp.float32) + b
        i = jax.nn.sigmoid(acc[:, 0 * Chid:1 * Chid])
        f = jax.nn.sigmoid(acc[:, 1 * Chid:2 * Chid])
        o = jax.nn.sigmoid(acc[:, 2 * Chid:3 * Chid])
        g = jnp.tanh(acc[:, 3 * Chid:4 * Chid])
        c_next = f * c.reshape(M * W, Chid) + i * g
        h_next = (o * jnp.tanh(c_next)).reshape(M, W, Chid)
        return (h_next, c_next.reshape(M, W, Chid)), h_next

    h0 = jnp.zeros((M, W, Chid), jnp.float32)
    c0 = jnp.zeros((M, W, Chid), jnp.float32)
    (_, c_last), hs = jax.lax.scan(step, (h0, c0), xp)
    return hs, c_last


# ------------------------------ forward pass --------------------------------

def conv_lstm_forward(x, params, hidden_dims, K, use_pallas=True):
    """x: (B, T, C, H, W).  Returns ([last layer output (B,T,Chid,H,W)],
    [(h_last, c_last)]) matching ConvLSTM(batch_first=True,
    return_all_layers=False)."""
    B, T, C, H, W = x.shape
    pad = K // 2
    M = B * H

    # NCHW -> kernel layout once: (T, M=B*H, W, C).  Kept across layers.
    cur = jnp.transpose(x.astype(jnp.float32), (1, 0, 3, 4, 2)).reshape(T, M, W, C)
    last_h = last_c = None

    for layer_idx, (w_all, b) in enumerate(params):
        Chid = hidden_dims[layer_idx]
        Cin = cur.shape[-1]
        # Pre-pad the W axis once per layer; bf16 halves HBM/VMEM traffic of x.
        xp = jnp.pad(cur, ((0, 0), (0, 0), (pad, pad), (0, 0))).astype(jnp.bfloat16)
        layer_fn = _conv_lstm_layer_pallas if use_pallas else _conv_lstm_layer_ref
        hseq, c_last = layer_fn(xp, w_all, b, T, M, W, K, Cin, Chid)
        cur = hseq                       # (T, M, W, Chid) f32
        last_h, last_c = hseq[-1], c_last

    Chid = hidden_dims[-1]
    out = jnp.transpose(cur.reshape(T, B, H, W, Chid), (1, 0, 4, 2, 3))
    h_out = jnp.transpose(last_h.reshape(B, H, W, Chid), (0, 3, 1, 2))
    c_out = jnp.transpose(last_c.reshape(B, H, W, Chid), (0, 3, 1, 2))
    return [out], [(h_out, c_out)]


# ------------------------------ parameters ----------------------------------

def init_params(key, input_dim, hidden_dim, kernel_size, n_conv):
    """Deterministic init mimicking Conv2d(cur_in+hid, 4*hid, (1, K)) per layer.
    Weight is pre-fused to (K*(Cin+Chid), 4*Chid) in bf16 (im2col column order:
    x taps k=0..K-1 then h taps k=0..K-1)."""
    hidden_dims = [hidden_dim] * n_conv
    params = []
    cur_in = input_dim
    for l in range(n_conv):
        key, kw, kb = jax.random.split(key, 3)
        Chid = hidden_dims[l]
        fan_in = (cur_in + Chid) * 1 * kernel_size
        bound = 1.0 / (fan_in ** 0.5)
        w = jax.random.uniform(kw, (4 * Chid, cur_in + Chid, 1, kernel_size),
                               minval=-bound, maxval=bound, dtype=jnp.float32)
        bias = jax.random.uniform(kb, (4 * Chid,),
                                  minval=-bound, maxval=bound, dtype=jnp.float32)
        # (Cout, Cin_total, 1, K) -> rows [wx_k0; wx_k1; ...; wh_k0; wh_k1; ...]
        wx = jnp.transpose(w[:, :cur_in, 0, :], (2, 1, 0)).reshape(
            kernel_size * cur_in, 4 * Chid)
        wh = jnp.transpose(w[:, cur_in:, 0, :], (2, 1, 0)).reshape(
            kernel_size * Chid, 4 * Chid)
        w_all = jnp.concatenate([wx, wh], axis=0).astype(jnp.bfloat16)
        params.append((w_all, bias.reshape(1, 4 * Chid)))
        cur_in = Chid
    return params, tuple(hidden_dims)


# TODO(synk): the Loss module / train_step / valid_step are training-time glue
# (loss unspecified in the reference) and are not part of the kernel; only the
# forward pass is implemented.

if __name__ == "__main__":
    B, T, H, W = 2, 8, 4, 16
    input_dim, hidden_dim, kernel_size, n_conv = 4, 8, 3, 2

    key = jax.random.PRNGKey(0)
    kx, kp = jax.random.split(key)
    x = jax.random.normal(kx, (B, T, input_dim, H, W), dtype=jnp.float32)
    params, hidden_dims = init_params(kp, input_dim, hidden_dim, kernel_size, n_conv)

    fwd = jax.jit(functools.partial(conv_lstm_forward,
                                    hidden_dims=hidden_dims, K=kernel_size))
    layer_outs, last_states = fwd(x, params)
    jax.block_until_ready((layer_outs, last_states))

    # Sanity-check against a pure-JAX reference of the same (bf16-matmul) math.
    ref_outs, ref_states = conv_lstm_forward(x, params, hidden_dims, kernel_size,
                                             use_pallas=False)
    assert layer_outs[0].shape == (B, T, hidden_dim, H, W)
    assert last_states[0][0].shape == (B, hidden_dim, H, W)
    assert jnp.allclose(layer_outs[0], ref_outs[0], atol=1e-2, rtol=1e-2)
    assert jnp.allclose(last_states[0][0], ref_states[0][0], atol=1e-2, rtol=1e-2)
    assert jnp.allclose(last_states[0][1], ref_states[0][1], atol=1e-2, rtol=1e-2)

    print("KERNEL_OK")
</pallas_src>

<mosaic_0001>
module attributes {stable_mosaic.version = 11 : i64} {
  func.func @kernel(%arg0: i32, %arg1: i32, %arg2: memref<1x8x18x4xbf16, #tpu.memory_space<vmem>>, %arg3: memref<36x32xbf16, #tpu.memory_space<vmem>>, %arg4: memref<1x32xf32, #tpu.memory_space<vmem>>, %arg5: memref<1x8x16x8xf32, #tpu.memory_space<vmem>>, %arg6: memref<8x16x8xf32, #tpu.memory_space<vmem>>, %arg7: memref<8x18x8xf32, #tpu.memory_space<vmem>>) attributes {dimension_semantics = [#tpu.dimension_semantics<parallel>, #tpu.dimension_semantics<arbitrary>], iteration_bounds = array<i64: 1, 8>, scalar_prefetch = 0 : i64, scratch_operands = 1 : i64, tpu.core_type = #tpu.core_type<tc>, window_params = [{transform_indices = @transform_0, window_bounds = array<i64: 1, 8, 18, 4>}, {pipeline_mode = #tpu.pipeline_mode<synchronous>, transform_indices = @transform_1, window_bounds = array<i64: 36, 32>}, {pipeline_mode = #tpu.pipeline_mode<synchronous>, transform_indices = @transform_2, window_bounds = array<i64: 1, 32>}, {transform_indices = @transform_3, window_bounds = array<i64: 1, 8, 16, 8>}, {transform_indices = @transform_4, window_bounds = array<i64: 8, 16, 8>}]} {
    %c0_i32 = arith.constant 0 : i32
    %0 = arith.cmpi eq, %arg1, %c0_i32 : i32
    %1 = arith.extui %0 : i1 to i32
    %c0_i32_0 = arith.constant 0 : i32
    %2 = arith.cmpi ne, %1, %c0_i32_0 : i32
    scf.if %2 {
      %cst_26 = arith.constant 0.000000e+00 : f32
      %59 = vector.broadcast %cst_26 : f32 to vector<8x18x8xf32>
      %c0_27 = arith.constant 0 : index
      %c0_28 = arith.constant 0 : index
      %c0_29 = arith.constant 0 : index
      %60 = vector.load %arg7[%c0_27, %c0_28, %c0_29] : memref<8x18x8xf32, #tpu.memory_space<vmem>>, vector<8x18x8xf32>
      tpu.vector_store %arg7[%c0_27, %c0_28, %c0_29], %59 {strides = array<i32>} : memref<8x18x8xf32, #tpu.memory_space<vmem>>, vector<8x18x8xf32>,
      %cst_30 = arith.constant 0.000000e+00 : f32
      %61 = vector.broadcast %cst_30 : f32 to vector<8x16x8xf32>
      %c0_31 = arith.constant 0 : index
      %c0_32 = arith.constant 0 : index
      %c0_33 = arith.constant 0 : index
      %62 = vector.load %arg6[%c0_31, %c0_32, %c0_33] : memref<8x16x8xf32, #tpu.memory_space<vmem>>, vector<8x16x8xf32>
      tpu.vector_store %arg6[%c0_31, %c0_32, %c0_33], %61 {strides = array<i32>} : memref<8x16x8xf32, #tpu.memory_space<vmem>>, vector<8x16x8xf32>,
    } else {
    }
    %c0 = arith.constant 0 : index
    %c0_1 = arith.constant 0 : index
    %c0_2 = arith.constant 0 : index
    %c0_3 = arith.constant 0 : index
    %3 = vector.load %arg2[%c0, %c0_1, %c0_2, %c0_3] : memref<1x8x18x4xbf16, #tpu.memory_space<vmem>>, vector<1x8x18x4xbf16>
    %4 = vector.shape_cast %3 : vector<1x8x18x4xbf16> to vector<8x18x4xbf16>
    %c0_4 = arith.constant 0 : index
    %c0_5 = arith.constant 0 : index
    %c0_6 = arith.constant 0 : index
    %5 = vector.load %arg7[%c0_4, %c0_5, %c0_6] : memref<8x18x8xf32, #tpu.memory_space<vmem>>, vector<8x18x8xf32>
    %6 = arith.truncf %5 : vector<8x18x8xf32> to vector<8x18x8xbf16>
    %7 = vector.extract_strided_slice %4 {offsets = [0, 0, 0], sizes = [8, 16, 4], strides = [1, 1, 1]} : vector<8x18x4xbf16> to vector<8x16x4xbf16>
    %8 = vector.shape_cast %7 : vector<8x16x4xbf16> to vector<128x4xbf16>
    %9 = vector.extract_strided_slice %4 {offsets = [0, 1, 0], sizes = [8, 16, 4], strides = [1, 1, 1]} : vector<8x18x4xbf16> to vector<8x16x4xbf16>
    %10 = vector.shape_cast %9 : vector<8x16x4xbf16> to vector<128x4xbf16>
    %11 = vector.extract_strided_slice %4 {offsets = [0, 2, 0], sizes = [8, 16, 4], strides = [1, 1, 1]} : vector<8x18x4xbf16> to vector<8x16x4xbf16>
    %12 = vector.shape_cast %11 : vector<8x16x4xbf16> to vector<128x4xbf16>
    %13 = vector.extract_strided_slice %6 {offsets = [0, 0, 0], sizes = [8, 16, 8], strides = [1, 1, 1]} : vector<8x18x8xbf16> to vector<8x16x8xbf16>
    %14 = vector.shape_cast %13 : vector<8x16x8xbf16> to vector<128x8xbf16>
    %15 = vector.extract_strided_slice %6 {offsets = [0, 1, 0], sizes = [8, 16, 8], strides = [1, 1, 1]} : vector<8x18x8xbf16> to vector<8x16x8xbf16>
    %16 = vector.shape_cast %15 : vector<8x16x8xbf16> to vector<128x8xbf16>
    %17 = vector.extract_strided_slice %6 {offsets = [0, 2, 0], sizes = [8, 16, 8], strides = [1, 1, 1]} : vector<8x18x8xbf16> to vector<8x16x8xbf16>
    %18 = vector.shape_cast %17 : vector<8x16x8xbf16> to vector<128x8xbf16>
    %19 = tpu.concatenate %8, %10, %12, %14, %16, %18 in 1 : vector<128x4xbf16>, vector<128x4xbf16>, vector<128x4xbf16>, vector<128x8xbf16>, vector<128x8xbf16>, vector<128x8xbf16> -> vector<128x36xbf16>
    %c0_7 = arith.constant 0 : index
    %c0_8 = arith.constant 0 : index
    %20 = vector.load %arg3[%c0_7, %c0_8] : memref<36x32xbf16, #tpu.memory_space<vmem>>, vector<36x32xbf16>
    %cst = arith.constant dense<0.000000e+00> : vector<128x32xf32>
    %21 = tpu.matmul %19, %20, %cst {dimension_numbers = #tpu.dot_dimension_numbers<[1], [0], [0], [1], [0, 0, 1, 1], [], []>} : vector<128x36xbf16>, vector<36x32xbf16>, vector<128x32xf32> -> vector<128x32xf32>
    %c0_9 = arith.constant 0 : index
    %c0_10 = arith.constant 0 : index
    %22 = vector.load %arg4[%c0_9, %c0_10] : memref<1x32xf32, #tpu.memory_space<vmem>>, vector<1x32xf32>
    %23 = vector.broadcast %22 : vector<1x32xf32> to vector<128x32xf32>
    %24 = arith.addf %21, %23 : vector<128x32xf32>
    %25 = vector.extract_strided_slice %24 {offsets = [0, 0], sizes = [128, 8], strides = [1, 1]} : vector<128x32xf32> to vector<128x8xf32>
    %26 = arith.negf %25 : vector<128x8xf32>
    %27 = math.exp %26 : vector<128x8xf32>
    %cst_11 = arith.constant 1.000000e+00 : f32
    %28 = vector.broadcast %cst_11 : f32 to vector<128x8xf32>
    %29 = arith.addf %28, %27 : vector<128x8xf32>
    %30 = arith.divf %28, %29 : vector<128x8xf32>
    %31 = vector.extract_strided_slice %24 {offsets = [0, 8], sizes = [128, 8], strides = [1, 1]} : vector<128x32xf32> to vector<128x8xf32>
    %32 = arith.negf %31 : vector<128x8xf32>
    %33 = math.exp %32 : vector<128x8xf32>
    %cst_12 = arith.constant 1.000000e+00 : f32
    %34 = vector.broadcast %cst_12 : f32 to vector<128x8xf32>
    %35 = arith.addf %34, %33 : vector<128x8xf32>
    %36 = arith.divf %34, %35 : vector<128x8xf32>
    %37 = vector.extract_strided_slice %24 {offsets = [0, 16], sizes = [128, 8], strides = [1, 1]} : vector<128x32xf32> to vector<128x8xf32>
    %38 = arith.negf %37 : vector<128x8xf32>
    %39 = math.exp %38 : vector<128x8xf32>
    %cst_13 = arith.constant 1.000000e+00 : f32
    %40 = vector.broadcast %cst_13 : f32 to vector<128x8xf32>
    %41 = arith.addf %40, %39 : vector<128x8xf32>
    %42 = arith.divf %40, %41 : vector<128x8xf32>
    %43 = vector.extract_strided_slice %24 {offsets = [0, 24], sizes = [128, 8], strides = [1, 1]} : vector<128x32xf32> to vector<128x8xf32>
    %44 = math.tanh %43 : vector<128x8xf32>
    %c0_14 = arith.constant 0 : index
    %c0_15 = arith.constant 0 : index
    %c0_16 = arith.constant 0 : index
    %45 = vector.load %arg6[%c0_14, %c0_15, %c0_16] : memref<8x16x8xf32, #tpu.memory_space<vmem>>, vector<8x16x8xf32>
    %46 = vector.shape_cast %45 : vector<8x16x8xf32> to vector<128x8xf32>
    %47 = arith.mulf %36, %46 : vector<128x8xf32>
    %48 = arith.mulf %30, %44 : vector<128x8xf32>
    %49 = arith.addf %47, %48 : vector<128x8xf32>
    %50 = math.tanh %49 : vector<128x8xf32>
    %51 = arith.mulf %42, %50 : vector<128x8xf32>
    %52 = vector.shape_cast %51 : vector<128x8xf32> to vector<8x16x8xf32>
    %53 = vector.shape_cast %49 : vector<128x8xf32> to vector<8x16x8xf32>
    %c0_17 = arith.constant 0 : index
    %c0_18 = arith.constant 0 : index
    %c0_19 = arith.constant 0 : index
    %54 = vector.load %arg6[%c0_17, %c0_18, %c0_19] : memref<8x16x8xf32, #tpu.memory_space<vmem>>, vector<8x16x8xf32>
    tpu.vector_store %arg6[%c0_17, %c0_18, %c0_19], %53 {strides = array<i32>} : memref<8x16x8xf32, #tpu.memory_space<vmem>>, vector<8x16x8xf32>,
    %c0_20 = arith.constant 0 : index
    %c1 = arith.constant 1 : index
    %c0_21 = arith.constant 0 : index
    %55 = vector.load %arg7[%c0_20, %c1, %c0_21] : memref<8x18x8xf32, #tpu.memory_space<vmem>>, vector<8x16x8xf32>
    tpu.vector_store %arg7[%c0_20, %c1, %c0_21], %52 {strides = array<i32>} : memref<8x18x8xf32, #tpu.memory_space<vmem>>, vector<8x16x8xf32>,
    %c0_22 = arith.constant 0 : index
    %c0_23 = arith.constant 0 : index
    %c0_24 = arith.constant 0 : index
    %c0_25 = arith.constant 0 : index
    %56 = vector.load %arg5[%c0_22, %c0_23, %c0_24, %c0_25] : memref<1x8x16x8xf32, #tpu.memory_space<vmem>>, vector<1x8x16x8xf32>
    %57 = vector.shape_cast %56 : vector<1x8x16x8xf32> to vector<8x16x8xf32>
    %58 = vector.shape_cast %52 : vector<8x16x8xf32> to vector<1x8x16x8xf32>
    tpu.vector_store %arg5[%c0_22, %c0_23, %c0_24, %c0_25], %58 {strides = array<i32>} : memref<1x8x16x8xf32, #tpu.memory_space<vmem>>, vector<1x8x16x8xf32>,
    return
  }
  func.func @transform_0(%arg0: i32, %arg1: i32) -> (i32, i32, i32, i32) {
    %c0_i32 = arith.constant 0 : i32
    %c0_i32_0 = arith.constant 0 : i32
    %c0_i32_1 = arith.constant 0 : i32
    return %arg1, %arg0, %c0_i32, %c0_i32_0 : i32, i32, i32, i32
  }
  func.func @transform_1(%arg0: i32, %arg1: i32) -> (i32, i32) {
    %c0_i32 = arith.constant 0 : i32
    %c0_i32_0 = arith.constant 0 : i32
    %c0_i32_1 = arith.constant 0 : i32
    return %c0_i32, %c0_i32_0 : i32, i32
  }
  func.func @transform_2(%arg0: i32, %arg1: i32) -> (i32, i32) {
    %c0_i32 = arith.constant 0 : i32
    %c0_i32_0 = arith.constant 0 : i32
    %c0_i32_1 = arith.constant 0 : i32
    return %c0_i32, %c0_i32_0 : i32, i32
  }
  func.func @transform_3(%arg0: i32, %arg1: i32) -> (i32, i32, i32, i32) {
    %c0_i32 = arith.constant 0 : i32
    %c0_i32_0 = arith.constant 0 : i32
    %c0_i32_1 = arith.constant 0 : i32
    return %arg1, %arg0, %c0_i32, %c0_i32_0 : i32, i32, i32, i32
  }
  func.func @transform_4(%arg0: i32, %arg1: i32) -> (i32, i32, i32) {
    %c0_i32 = arith.constant 0 : i32
    %c0_i32_0 = arith.constant 0 : i32
    %c0_i32_1 = arith.constant 0 : i32
    return %arg0, %c0_i32, %c0_i32_0 : i32, i32, i32
  }
}

module attributes {stable_mosaic.version = 11 : i64} {
  func.func @kernel(%arg0: i32, %arg1: i32, %arg2: memref<1x8x18x8xbf16, #tpu.memory_space<vmem>>, %arg3: memref<48x32xbf16, #tpu.memory_space<vmem>>, %arg4: memref<1x32xf32, #tpu.memory_space<vmem>>, %arg5: memref<1x8x16x8xf32, #tpu.memory_space<vmem>>, %arg6: memref<8x16x8xf32, #tpu.memory_space<vmem>>, %arg7: memref<8x18x8xf32, #tpu.memory_space<vmem>>) attributes {dimension_semantics = [#tpu.dimension_semantics<parallel>, #tpu.dimension_semantics<arbitrary>], iteration_bounds = array<i64: 1, 8>, scalar_prefetch = 0 : i64, scratch_operands = 1 : i64, tpu.core_type = #tpu.core_type<tc>, window_params = [{transform_indices = @transform_0, window_bounds = array<i64: 1, 8, 18, 8>}, {pipeline_mode = #tpu.pipeline_mode<synchronous>, transform_indices = @transform_1, window_bounds = array<i64: 48, 32>}, {pipeline_mode = #tpu.pipeline_mode<synchronous>, transform_indices = @transform_2, window_bounds = array<i64: 1, 32>}, {transform_indices = @transform_3, window_bounds = array<i64: 1, 8, 16, 8>}, {transform_indices = @transform_4, window_bounds = array<i64: 8, 16, 8>}]} {
    %c0_i32 = arith.constant 0 : i32
    %0 = arith.cmpi eq, %arg1, %c0_i32 : i32
    %1 = arith.extui %0 : i1 to i32
    %c0_i32_0 = arith.constant 0 : i32
    %2 = arith.cmpi ne, %1, %c0_i32_0 : i32
    scf.if %2 {
      %cst_26 = arith.constant 0.000000e+00 : f32
      %59 = vector.broadcast %cst_26 : f32 to vector<8x18x8xf32>
      %c0_27 = arith.constant 0 : index
      %c0_28 = arith.constant 0 : index
      %c0_29 = arith.constant 0 : index
      %60 = vector.load %arg7[%c0_27, %c0_28, %c0_29] : memref<8x18x8xf32, #tpu.memory_space<vmem>>, vector<8x18x8xf32>
      tpu.vector_store %arg7[%c0_27, %c0_28, %c0_29], %59 {strides = array<i32>} : memref<8x18x8xf32, #tpu.memory_space<vmem>>, vector<8x18x8xf32>,
      %cst_30 = arith.constant 0.000000e+00 : f32
      %61 = vector.broadcast %cst_30 : f32 to vector<8x16x8xf32>
      %c0_31 = arith.constant 0 : index
      %c0_32 = arith.constant 0 : index
      %c0_33 = arith.constant 0 : index
      %62 = vector.load %arg6[%c0_31, %c0_32, %c0_33] : memref<8x16x8xf32, #tpu.memory_space<vmem>>, vector<8x16x8xf32>
      tpu.vector_store %arg6[%c0_31, %c0_32, %c0_33], %61 {strides = array<i32>} : memref<8x16x8xf32, #tpu.memory_space<vmem>>, vector<8x16x8xf32>,
    } else {
    }
    %c0 = arith.constant 0 : index
    %c0_1 = arith.constant 0 : index
    %c0_2 = arith.constant 0 : index
    %c0_3 = arith.constant 0 : index
    %3 = vector.load %arg2[%c0, %c0_1, %c0_2, %c0_3] : memref<1x8x18x8xbf16, #tpu.memory_space<vmem>>, vector<1x8x18x8xbf16>
    %4 = vector.shape_cast %3 : vector<1x8x18x8xbf16> to vector<8x18x8xbf16>
    %c0_4 = arith.constant 0 : index
    %c0_5 = arith.constant 0 : index
    %c0_6 = arith.constant 0 : index
    %5 = vector.load %arg7[%c0_4, %c0_5, %c0_6] : memref<8x18x8xf32, #tpu.memory_space<vmem>>, vector<8x18x8xf32>
    %6 = arith.truncf %5 : vector<8x18x8xf32> to vector<8x18x8xbf16>
    %7 = vector.extract_strided_slice %4 {offsets = [0, 0, 0], sizes = [8, 16, 8], strides = [1, 1, 1]} : vector<8x18x8xbf16> to vector<8x16x8xbf16>
    %8 = vector.shape_cast %7 : vector<8x16x8xbf16> to vector<128x8xbf16>
    %9 = vector.extract_strided_slice %4 {offsets = [0, 1, 0], sizes = [8, 16, 8], strides = [1, 1, 1]} : vector<8x18x8xbf16> to vector<8x16x8xbf16>
    %10 = vector.shape_cast %9 : vector<8x16x8xbf16> to vector<128x8xbf16>
    %11 = vector.extract_strided_slice %4 {offsets = [0, 2, 0], sizes = [8, 16, 8], strides = [1, 1, 1]} : vector<8x18x8xbf16> to vector<8x16x8xbf16>
    %12 = vector.shape_cast %11 : vector<8x16x8xbf16> to vector<128x8xbf16>
    %13 = vector.extract_strided_slice %6 {offsets = [0, 0, 0], sizes = [8, 16, 8], strides = [1, 1, 1]} : vector<8x18x8xbf16> to vector<8x16x8xbf16>
    %14 = vector.shape_cast %13 : vector<8x16x8xbf16> to vector<128x8xbf16>
    %15 = vector.extract_strided_slice %6 {offsets = [0, 1, 0], sizes = [8, 16, 8], strides = [1, 1, 1]} : vector<8x18x8xbf16> to vector<8x16x8xbf16>
    %16 = vector.shape_cast %15 : vector<8x16x8xbf16> to vector<128x8xbf16>
    %17 = vector.extract_strided_slice %6 {offsets = [0, 2, 0], sizes = [8, 16, 8], strides = [1, 1, 1]} : vector<8x18x8xbf16> to vector<8x16x8xbf16>
    %18 = vector.shape_cast %17 : vector<8x16x8xbf16> to vector<128x8xbf16>
    %19 = tpu.concatenate %8, %10, %12, %14, %16, %18 in 1 : vector<128x8xbf16>, vector<128x8xbf16>, vector<128x8xbf16>, vector<128x8xbf16>, vector<128x8xbf16>, vector<128x8xbf16> -> vector<128x48xbf16>
    %c0_7 = arith.constant 0 : index
    %c0_8 = arith.constant 0 : index
    %20 = vector.load %arg3[%c0_7, %c0_8] : memref<48x32xbf16, #tpu.memory_space<vmem>>, vector<48x32xbf16>
    %cst = arith.constant dense<0.000000e+00> : vector<128x32xf32>
    %21 = tpu.matmul %19, %20, %cst {dimension_numbers = #tpu.dot_dimension_numbers<[1], [0], [0], [1], [0, 0, 1, 1], [], []>} : vector<128x48xbf16>, vector<48x32xbf16>, vector<128x32xf32> -> vector<128x32xf32>
    %c0_9 = arith.constant 0 : index
    %c0_10 = arith.constant 0 : index
    %22 = vector.load %arg4[%c0_9, %c0_10] : memref<1x32xf32, #tpu.memory_space<vmem>>, vector<1x32xf32>
    %23 = vector.broadcast %22 : vector<1x32xf32> to vector<128x32xf32>
    %24 = arith.addf %21, %23 : vector<128x32xf32>
    %25 = vector.extract_strided_slice %24 {offsets = [0, 0], sizes = [128, 8], strides = [1, 1]} : vector<128x32xf32> to vector<128x8xf32>
    %26 = arith.negf %25 : vector<128x8xf32>
    %27 = math.exp %26 : vector<128x8xf32>
    %cst_11 = arith.constant 1.000000e+00 : f32
    %28 = vector.broadcast %cst_11 : f32 to vector<128x8xf32>
    %29 = arith.addf %28, %27 : vector<128x8xf32>
    %30 = arith.divf %28, %29 : vector<128x8xf32>
    %31 = vector.extract_strided_slice %24 {offsets = [0, 8], sizes = [128, 8], strides = [1, 1]} : vector<128x32xf32> to vector<128x8xf32>
    %32 = arith.negf %31 : vector<128x8xf32>
    %33 = math.exp %32 : vector<128x8xf32>
    %cst_12 = arith.constant 1.000000e+00 : f32
    %34 = vector.broadcast %cst_12 : f32 to vector<128x8xf32>
    %35 = arith.addf %34, %33 : vector<128x8xf32>
    %36 = arith.divf %34, %35 : vector<128x8xf32>
    %37 = vector.extract_strided_slice %24 {offsets = [0, 16], sizes = [128, 8], strides = [1, 1]} : vector<128x32xf32> to vector<128x8xf32>
    %38 = arith.negf %37 : vector<128x8xf32>
    %39 = math.exp %38 : vector<128x8xf32>
    %cst_13 = arith.constant 1.000000e+00 : f32
    %40 = vector.broadcast %cst_13 : f32 to vector<128x8xf32>
    %41 = arith.addf %40, %39 : vector<128x8xf32>
    %42 = arith.divf %40, %41 : vector<128x8xf32>
    %43 = vector.extract_strided_slice %24 {offsets = [0, 24], sizes = [128, 8], strides = [1, 1]} : vector<128x32xf32> to vector<128x8xf32>
    %44 = math.tanh %43 : vector<128x8xf32>
    %c0_14 = arith.constant 0 : index
    %c0_15 = arith.constant 0 : index
    %c0_16 = arith.constant 0 : index
    %45 = vector.load %arg6[%c0_14, %c0_15, %c0_16] : memref<8x16x8xf32, #tpu.memory_space<vmem>>, vector<8x16x8xf32>
    %46 = vector.shape_cast %45 : vector<8x16x8xf32> to vector<128x8xf32>
    %47 = arith.mulf %36, %46 : vector<128x8xf32>
    %48 = arith.mulf %30, %44 : vector<128x8xf32>
    %49 = arith.addf %47, %48 : vector<128x8xf32>
    %50 = math.tanh %49 : vector<128x8xf32>
    %51 = arith.mulf %42, %50 : vector<128x8xf32>
    %52 = vector.shape_cast %51 : vector<128x8xf32> to vector<8x16x8xf32>
    %53 = vector.shape_cast %49 : vector<128x8xf32> to vector<8x16x8xf32>
    %c0_17 = arith.constant 0 : index
    %c0_18 = arith.constant 0 : index
    %c0_19 = arith.constant 0 : index
    %54 = vector.load %arg6[%c0_17, %c0_18, %c0_19] : memref<8x16x8xf32, #tpu.memory_space<vmem>>, vector<8x16x8xf32>
    tpu.vector_store %arg6[%c0_17, %c0_18, %c0_19], %53 {strides = array<i32>} : memref<8x16x8xf32, #tpu.memory_space<vmem>>, vector<8x16x8xf32>,
    %c0_20 = arith.constant 0 : index
    %c1 = arith.constant 1 : index
    %c0_21 = arith.constant 0 : index
    %55 = vector.load %arg7[%c0_20, %c1, %c0_21] : memref<8x18x8xf32, #tpu.memory_space<vmem>>, vector<8x16x8xf32>
    tpu.vector_store %arg7[%c0_20, %c1, %c0_21], %52 {strides = array<i32>} : memref<8x18x8xf32, #tpu.memory_space<vmem>>, vector<8x16x8xf32>,
    %c0_22 = arith.constant 0 : index
    %c0_23 = arith.constant 0 : index
    %c0_24 = arith.constant 0 : index
    %c0_25 = arith.constant 0 : index
    %56 = vector.load %arg5[%c0_22, %c0_23, %c0_24, %c0_25] : memref<1x8x16x8xf32, #tpu.memory_space<vmem>>, vector<1x8x16x8xf32>
    %57 = vector.shape_cast %56 : vector<1x8x16x8xf32> to vector<8x16x8xf32>
    %58 = vector.shape_cast %52 : vector<8x16x8xf32> to vector<1x8x16x8xf32>
    tpu.vector_store %arg5[%c0_22, %c0_23, %c0_24, %c0_25], %58 {strides = array<i32>} : memref<1x8x16x8xf32, #tpu.memory_space<vmem>>, vector<1x8x16x8xf32>,
    return
  }
  func.func @transform_0(%arg0: i32, %arg1: i32) -> (i32, i32, i32, i32) {
    %c0_i32 = arith.constant 0 : i32
    %c0_i32_0 = arith.constant 0 : i32
    %c0_i32_1 = arith.constant 0 : i32
    return %arg1, %arg0, %c0_i32, %c0_i32_0 : i32, i32, i32, i32
  }
  func.func @transform_1(%arg0: i32, %arg1: i32) -> (i32, i32) {
    %c0_i32 = arith.constant 0 : i32
    %c0_i32_0 = arith.constant 0 : i32
    %c0_i32_1 = arith.constant 0 : i32
    return %c0_i32, %c0_i32_0 : i32, i32
  }
  func.func @transform_2(%arg0: i32, %arg1: i32) -> (i32, i32) {
    %c0_i32 = arith.constant 0 : i32
    %c0_i32_0 = arith.constant 0 : i32
    %c0_i32_1 = arith.constant 0 : i32
    return %c0_i32, %c0_i32_0 : i32, i32
  }
  func.func @transform_3(%arg0: i32, %arg1: i32) -> (i32, i32, i32, i32) {
    %c0_i32 = arith.constant 0 : i32
    %c0_i32_0 = arith.constant 0 : i32
    %c0_i32_1 = arith.constant 0 : i32
    return %arg1, %arg0, %c0_i32, %c0_i32_0 : i32, i32, i32, i32
  }
  func.func @transform_4(%arg0: i32, %arg1: i32) -> (i32, i32, i32) {
    %c0_i32 = arith.constant 0 : i32
    %c0_i32_0 = arith.constant 0 : i32
    %c0_i32_1 = arith.constant 0 : i32
    return %arg0, %c0_i32, %c0_i32_0 : i32, i32, i32
  }
}

</mosaic_0001>

<llo_original>
// kernel: conv_lstm_forward.2
$region0: #{conv_lstm_forward.2}
  #allocation0 [shape = 'u32[]', space=smem, size = 0x4, offset = 0x4, fixed_abs, tag = 'smem constant byte address 0x4 - core index']
  #allocation1 [shape = 'u32[144,128]{1,0:T(1,128)}', space=vmem, size = 0x12000, scoped, tag = 'internal scratch']
  #allocation2 [shape = 'f32[8,18,8]{2,1,0:T(8,128)}', space=vmem, size = 0x18000, scoped, tag = 'scratch operand']
  %s0 = inlined_call_operand.vmem [shape: bf16[8,8,18,4], index: 0, kind: input, shape index: {}]
  %s1 = inlined_call_operand.vmem [shape: bf16[36,32], index: 1, kind: input, shape index: {}]
  %s2 = inlined_call_operand.vmem [shape: f32[1,32], index: 2, kind: input, shape index: {}]
  %s3 = inlined_call_operand.vmem [shape: f32[8,8,16,8], index: 3, kind: output, shape index: {0}]
  %s4 = inlined_call_operand.hbm [shape: f32[8,16,8], index: 4, kind: output, shape index: {1}]
  %5 = xla_tuple %s3, %s4
  %s6 = sld [smem:[#allocation0]]
  $region57: #{conv_lstm_forward.2} parent=0
    _
  %s8 = ssub.s32 1, %s6
  %s9 = scalar_select 0, %s8, %s6
  $region1: #{conv_lstm_forward.2} parent=0
    #allocation3 [shape = 'u8[65536]{0}', space=vmem, size = 0x10000, scoped, tag = 'output window, operand 1, single buffered']
    #allocation4 [shape = 's32[2]{0}', space=sflag, size = 0x8, scoped, tag = 'scoped memory for conv_lstm_forward.2']
    %10 = vsyncpa [#allocation4], 0
    loop: start=0, step=1, limit=10
    $region2: #{conv_lstm_forward.2} parent=1 // loop_pre_header
      _
    $region3: #{conv_lstm_forward.2} parent=1 // loop_header
      %s12 = sphi 0, %s16
      %p13 = scmp.ge.s32.totalorder %s12, 10
      %s19 = sphi 0, %s31
      %s20 = sphi 0, %s27
      %s21 = sphi 0, %s19
      %s22 = sphi 0, %s20
      %s23 = sphi 0, %s21
      %s24 = sphi 0, %s22
      %s36 = sphi 0, %s38
      %s39 = sphi 0, %s36
      %s40 = sphi 0, %s39
      %s56 = sphi 0, %s40
      %s60 = sphi 0, %s60
      %s62 = sphi 0, %s60
      %s63 = sphi 0, %s62
      %s77 = sphi 0, %s63
      %s81 = sphi 0, %s81
      %s83 = sphi 0, %s81
      %s84 = sphi 0, %s83
      %s98 = sphi 0, %s84
      %s106 = sphi 0, %s108
      %s109 = sphi 0, %s106
      %s110 = sphi 0, %s109
      %s126 = sphi 0, %s110
      %s132 = sphi 0, %s134
      %s135 = sphi 0, %s132
      %s136 = sphi 0, %s135
      %s152 = sphi 0, %s136
    $region4: #{conv_lstm_forward.2} parent=1 // loop_header_branch
      %15 = sbr.rel (%p13) target = $region8
    $region5: #{conv_lstm_forward.2} parent=1 // loop_body
      %s17 = ssub.s32 %s12, 1
      %s18 = ssub.s32 %s12, 2
      %s25 = sadd.s32 1, %s20
      %p26 = scmp.ge.s32.totalorder %s25, 8
      %s27 = scalar_select %p26, 0, %s25
      %s28 = sadd.s32 1, %s19
      %s29 = scalar_select %p26, %s28, %s19
      %p30 = scmp.ge.s32.totalorder %s29, 1
      %s31 = scalar_select %p30, 0, %s29
      %s32 = ssub.s32 %s20, %s27
      %s33 = ssub.s32 %s19, %s31
      %s34 = sor.u32 %s32, %s33
      %p35 = scmp.eq.s32.totalorder %s34, 0
      %s37 = sadd.s32 %s36, 1
      %s38 = scalar_select %p35, %s36, %s37
      %p41 = pneg %p35
      %p42 = scmp.eq.s32.totalorder %s12, 7
      %p43 = por %p41, %p42
      %p44 = scmp.ne.s32.totalorder %s36, %s39
      %p45 = scmp.eq.s32.totalorder %s12, 0
      %p46 = por %p44, %p45
      %p47 = scmp.ne.s32.totalorder %s36, %s39
      %p48 = scmp.eq.s32.totalorder %s17, 7
      %p49 = por %p47, %p48
      %p50 = scmp.ne.s32.totalorder %s39, %s40
      %p51 = scmp.eq.s32.totalorder %s17, 0
      %p52 = por %p50, %p51
      %p53 = scmp.ne.s32.totalorder %s39, %s40
      %p54 = scmp.eq.s32.totalorder %s18, 7
      %p55 = por %p53, %p54
      %p57 = scmp.ne.s32.totalorder %s40, %s56
      %p58 = scmp.eq.s32.totalorder %s18, 0
      %p59 = por %p57, %p58
      %s61 = sadd.s32 %s60, 1
      %p64 = scmp.eq.s32.totalorder %s12, 7
      %p65 = scmp.ne.s32.totalorder %s60, %s62
      %p66 = scmp.eq.s32.totalorder %s12, 0
      %p67 = por %p65, %p66
      %p68 = scmp.ne.s32.totalorder %s60, %s62
      %p69 = scmp.eq.s32.totalorder %s17, 7
      %p70 = por %p68, %p69
      %p71 = scmp.ne.s32.totalorder %s62, %s63
      %p72 = scmp.eq.s32.totalorder %s17, 0
      %p73 = por %p71, %p72
      %p74 = scmp.ne.s32.totalorder %s62, %s63
      %p75 = scmp.eq.s32.totalorder %s18, 7
      %p76 = por %p74, %p75
      %p78 = scmp.ne.s32.totalorder %s63, %s77
      %p79 = scmp.eq.s32.totalorder %s18, 0
      %p80 = por %p78, %p79
      %s82 = sadd.s32 %s81, 1
      %p85 = scmp.eq.s32.totalorder %s12, 7
      %p86 = scmp.ne.s32.totalorder %s81, %s83
      %p87 = scmp.eq.s32.totalorder %s12, 0
      %p88 = por %p86, %p87
      %p89 = scmp.ne.s32.totalorder %s81, %s83
      %p90 = scmp.eq.s32.totalorder %s17, 7
      %p91 = por %p89, %p90
      %p92 = scmp.ne.s32.totalorder %s83, %s84
      %p93 = scmp.eq.s32.totalorder %s17, 0
      %p94 = por %p92, %p93
      %p95 = scmp.ne.s32.totalorder %s83, %s84
      %p96 = scmp.eq.s32.totalorder %s18, 7
      %p97 = por %p95, %p96
      %p99 = scmp.ne.s32.totalorder %s84, %s98
      %p100 = scmp.eq.s32.totalorder %s18, 0
      %p101 = por %p99, %p100
      %s102 = ssub.s32 %s20, %s27
      %s103 = ssub.s32 %s19, %s31
      %s104 = sor.u32 %s102, %s103
      %p105 = scmp.eq.s32.totalorder %s104, 0
      %s107 = sadd.s32 %s106, 1
      %s108 = scalar_select %p105, %s106, %s107
      %p111 = pneg %p105
      %p112 = scmp.eq.s32.totalorder %s12, 7
      %p113 = por %p111, %p112
      %p114 = scmp.ne.s32.totalorder %s106, %s109
      %p115 = scmp.eq.s32.totalorder %s12, 0
      %p116 = por %p114, %p115
      %p117 = scmp.ne.s32.totalorder %s106, %s109
      %p118 = scmp.eq.s32.totalorder %s17, 7
      %p119 = por %p117, %p118
      %p120 = scmp.ne.s32.totalorder %s109, %s110
      %p121 = scmp.eq.s32.totalorder %s17, 0
      %p122 = por %p120, %p121
      %p123 = scmp.ne.s32.totalorder %s109, %s110
      %p124 = scmp.eq.s32.totalorder %s18, 7
      %p125 = por %p123, %p124
      %p127 = scmp.ne.s32.totalorder %s110, %s126
      %p128 = scmp.eq.s32.totalorder %s18, 0
      %p129 = por %p127, %p128
      %s130 = ssub.s32 %s19, %s31
      %p131 = scmp.eq.s32.totalorder %s130, 0
      %s133 = sadd.s32 %s132, 1
      %s134 = scalar_select %p131, %s132, %s133
      %p137 = pneg %p131
      %p138 = scmp.eq.s32.totalorder %s12, 7
      %p139 = por %p137, %p138
      %p140 = scmp.ne.s32.totalorder %s132, %s135
      %p141 = scmp.eq.s32.totalorder %s12, 0
      %p142 = por %p140, %p141
      %p143 = scmp.ne.s32.totalorder %s132, %s135
      %p144 = scmp.eq.s32.totalorder %s17, 7
      %p145 = por %p143, %p144
      %p146 = scmp.ne.s32.totalorder %s135, %s136
      %p147 = scmp.eq.s32.totalorder %s17, 0
      %p148 = por %p146, %p147
      %p149 = scmp.ne.s32.totalorder %s135, %s136
      %p150 = scmp.eq.s32.totalorder %s18, 7
      %p151 = por %p149, %p150
      %p153 = scmp.ne.s32.totalorder %s136, %s152
      %p154 = scmp.eq.s32.totalorder %s18, 0
      %p155 = por %p153, %p154
      %p156 = scmp.le.s32.totalorder 1, %s12
      %p157 = scmp.lt.s32.totalorder %s12, 9
      %p158 = pnand %p156, %p157
      %p159 = pneg %p158
      // Predicated region
      $region9: #{conv_lstm_forward.2} parent=5 // pred_check
        _
      $region10: #{conv_lstm_forward.2} parent=5 // pred_check_branch
        %161 = sbr.rel (%p158) target = $region12
      $region11: #{conv_lstm_forward.2} parent=5 // pred_region
        %s162 = ssub.s32 %s12, 1
        // Predicated region
        $region13: #{conv_lstm_forward.2} parent=11 // pred_check
          %p163 = pneg %p73
        $region14: #{conv_lstm_forward.2} parent=11 // pred_check_branch
          %165 = sbr.rel (%p163) target = $region16
        $region15: #{conv_lstm_forward.2} parent=11 // pred_region
          _
        $region16: #{conv_lstm_forward.2} parent=11 // pred_fallthru
          _
        // Predicated region
        $region17: #{conv_lstm_forward.2} parent=11 // pred_check
          %p166 = pneg %p94
        $region18: #{conv_lstm_forward.2} parent=11 // pred_check_branch
          %168 = sbr.rel (%p166) target = $region20
        $region19: #{conv_lstm_forward.2} parent=11 // pred_region
          _
        $region20: #{conv_lstm_forward.2} parent=11 // pred_fallthru
          _
      $region12: #{conv_lstm_forward.2} parent=5 // pred_fallthru
        _
      %p169 = scmp.lt.s32.totalorder %s12, 8
      // Predicated region
      $region21: #{conv_lstm_forward.2} parent=5 // pred_check
        %p170 = pneg %p169
      $region22: #{conv_lstm_forward.2} parent=5 // pred_check_branch
        %172 = sbr.rel (%p170) target = $region24
      $region23: #{conv_lstm_forward.2} parent=5 // pred_region
        // Predicated region
        $region25: #{conv_lstm_forward.2} parent=23 // pred_check
          %p173 = pneg %p46
        $region26: #{conv_lstm_forward.2} parent=23 // pred_check_branch
          %175 = sbr.rel (%p173) target = $region28
        $region27: #{conv_lstm_forward.2} parent=23 // pred_region
          %s176 = smul.u32 8, %s19
          %p177 = scmp.lt.s32.totalorder %s20, 7
          %s178 = scalar_select %p177, %s20, 7
          %p179 = scmp.lt.s32.totalorder %s176, 7
          %s180 = scalar_select %p179, %s176, 7
          %s181 = smul.addr %s180, 3
          %s182 = smul.addr %s178, 24
          %s183 = sadd.s32 %s181, %s182
          %s184 = smul.addr %s183, 4
          %s185 = scalar_lea.vmem %s0, %s184
          %s186 = smul.u32 8, %s19
        $region28: #{conv_lstm_forward.2} parent=23 // pred_fallthru
          _
      $region24: #{conv_lstm_forward.2} parent=5 // pred_fallthru
        _
      %p187 = scmp.le.s32.totalorder 1, %s12
      %p188 = scmp.lt.s32.totalorder %s12, 9
      %p189 = pnand %p187, %p188
      %p190 = pneg %p189
      // Predicated region
      $region29: #{conv_lstm_forward.2} parent=5 // pred_check
        _
      $region30: #{conv_lstm_forward.2} parent=5 // pred_check_branch
        %192 = sbr.rel (%p189) target = $region32
      $region31: #{conv_lstm_forward.2} parent=5 // pred_region
        %s193 = ssub.s32 %s12, 1
        %s194 = smul.u32 8, %s21
        %p195 = scmp.lt.s32.totalorder %s22, 7
        %s196 = scalar_select %p195, %s22, 7
        %p197 = scmp.lt.s32.totalorder %s194, 7
        %s198 = scalar_select %p197, %s194, 7
        %s199 = smul.addr %s198, 3
        %s200 = smul.addr %s196, 24
        %s201 = sadd.s32 %s199, %s200
        %s202 = smul.addr %s201, 4
        %s203 = scalar_lea.vmem %s0, %s202
        %p204 = pneg %p52
        %p205 = pneg %p49
        %p206 = pneg %p73
        %p207 = pneg %p70
        %p208 = pneg %p94
        %p209 = pneg %p91
        %p210 = pneg %p122
        %p211 = pneg %p119
        %s212 = smul.u32 8, %s21
        %p213 = scmp.lt.s32.totalorder %s22, 7
        %s214 = scalar_select %p213, %s22, 7
        %p215 = scmp.lt.s32.totalorder %s212, 7
        %s216 = scalar_select %p215, %s212, 7
        %s217 = smul.addr %s216, 2
        %s218 = smul.addr %s214, 16
        %s219 = sadd.s32 %s217, %s218
        %s220 = smul.addr %s219, 8
        %s221 = scalar_lea.vmem %s3, %s220
        %p222 = pneg %p148
        %p223 = pneg %p145
        %s224 = smul.u32 8, %s21
        %p225 = scmp.lt.s32.totalorder %s22, 7
        %s226 = scalar_select %p225, %s22, 7
        %p227 = scmp.lt.s32.totalorder %s224, 7
        %s228 = scalar_select %p227, %s224, 7
        %s229 = smul.addr %s228, 3
        %s230 = smul.addr %s226, 24
        %s231 = sadd.s32 %s229, %s230
        %s232 = smul.addr %s231, 4
        %s233 = scalar_lea.vmem %s0, %s232
        %s234 = smul.u32 8, %s21
        %s235 = smul.u32 8, %s21
        %p236 = scmp.lt.s32.totalorder %s22, 7
        %s237 = scalar_select %p236, %s22, 7
        %p238 = scmp.lt.s32.totalorder %s235, 7
        %s239 = scalar_select %p238, %s235, 7
        %s240 = smul.addr %s239, 2
        %s241 = smul.addr %s237, 16
        %s242 = sadd.s32 %s240, %s241
        %s243 = smul.addr %s242, 8
        %s244 = scalar_lea.vmem %s3, %s243
        %s245 = smul.u32 8, %s21
        %s246 = smul.u32 8, %s21
        %p248 = scmp.eq.s32.totalorder %s22, 0
        // Predicated region
        $region33: #{conv_lstm_forward.2} parent=31 // pred_check
          %p249 = pneg %p248
        $region34: #{conv_lstm_forward.2} parent=31 // pred_check_branch
          %251 = sbr.rel (%p249) target = $region36
        $region35: #{conv_lstm_forward.2} parent=31 // pred_region
          %vm252 = vcmask 64512
          %253 = vst.msk [vmem:[#allocation2] sm:$0xff] %vm252, 0.0
          %254 = vst.msk [vmem:[#allocation2 + $0x8] sm:$0xff] %vm252, 0.0
          %vm255 = vcmask 58368
          %256 = vst.msk [vmem:[#allocation2 + $0x10] sm:$0x3] %vm255, 0.0
          %257 = vst.msk [vmem:[#allocation2 + $0x18] sm:$0xff] %vm252, 0.0
          %258 = vst.msk [vmem:[#allocation2 + $0x20] sm:$0xff] %vm252, 0.0
          %259 = vst.msk [vmem:[#allocation2 + $0x28] sm:$0x3] %vm255, 0.0
          %260 = vst.msk [vmem:[#allocation2 + $0x30] sm:$0xff] %vm252, 0.0
          %261 = vst.msk [vmem:[#allocation2 + $0x38] sm:$0xff] %vm252, 0.0
          %262 = vst.msk [vmem:[#allocation2 + $0x40] sm:$0x3] %vm255, 0.0
          %263 = vst.msk [vmem:[#allocation2 + $0x48] sm:$0xff] %vm252, 0.0
          %264 = vst.msk [vmem:[#allocation2 + $0x50] sm:$0xff] %vm252, 0.0
          %265 = vst.msk [vmem:[#allocation2 + $0x58] sm:$0x3] %vm255, 0.0
          %266 = vst.msk [vmem:[#allocation2 + $0x60] sm:$0xff] %vm252, 0.0
          %267 = vst.msk [vmem:[#allocation2 + $0x68] sm:$0xff] %vm252, 0.0
          %268 = vst.msk [vmem:[#allocation2 + $0x70] sm:$0x3] %vm255, 0.0
          %269 = vst.msk [vmem:[#allocation2 + $0x78] sm:$0xff] %vm252, 0.0
          %270 = vst.msk [vmem:[#allocation2 + $0x80] sm:$0xff] %vm252, 0.0
          %271 = vst.msk [vmem:[#allocation2 + $0x88] sm:$0x3] %vm255, 0.0
          %272 = vst.msk [vmem:[#allocation2 + $0x90] sm:$0xff] %vm252, 0.0
          %273 = vst.msk [vmem:[#allocation2 + $0x98] sm:$0xff] %vm252, 0.0
          %274 = vst.msk [vmem:[#allocation2 + $0xa0] sm:$0x3] %vm255, 0.0
          %275 = vst.msk [vmem:[#allocation2 + $0xa8] sm:$0xff] %vm252, 0.0
          %276 = vst.msk [vmem:[#allocation2 + $0xb0] sm:$0xff] %vm252, 0.0
          %277 = vst.msk [vmem:[#allocation2 + $0xb8] sm:$0x3] %vm255, 0.0
          %278 = vst.msk [vmem:[#allocation3] sm:$0xff] %vm252, 0.0
          %279 = vst.msk [vmem:[#allocation3 + $0x8] sm:$0xff] %vm252, 0.0
          %280 = vst.msk [vmem:[#allocation3 + $0x10] sm:$0xff] %vm252, 0.0
          %281 = vst.msk [vmem:[#allocation3 + $0x18] sm:$0xff] %vm252, 0.0
          %282 = vst.msk [vmem:[#allocation3 + $0x20] sm:$0xff] %vm252, 0.0
          %283 = vst.msk [vmem:[#allocation3 + $0x28] sm:$0xff] %vm252, 0.0
          %284 = vst.msk [vmem:[#allocation3 + $0x30] sm:$0xff] %vm252, 0.0
          %285 = vst.msk [vmem:[#allocation3 + $0x38] sm:$0xff] %vm252, 0.0
          %286 = vst.msk [vmem:[#allocation3 + $0x40] sm:$0xff] %vm252, 0.0
          %287 = vst.msk [vmem:[#allocation3 + $0x48] sm:$0xff] %vm252, 0.0
          %288 = vst.msk [vmem:[#allocation3 + $0x50] sm:$0xff] %vm252, 0.0
          %289 = vst.msk [vmem:[#allocation3 + $0x58] sm:$0xff] %vm252, 0.0
          %290 = vst.msk [vmem:[#allocation3 + $0x60] sm:$0xff] %vm252, 0.0
          %291 = vst.msk [vmem:[#allocation3 + $0x68] sm:$0xff] %vm252, 0.0
          %292 = vst.msk [vmem:[#allocation3 + $0x70] sm:$0xff] %vm252, 0.0
          %293 = vst.msk [vmem:[#allocation3 + $0x78] sm:$0xff] %vm252, 0.0
        $region36: #{conv_lstm_forward.2} parent=31 // pred_fallthru
          _
        %v294 = vld [vmem:[%s233] sm:$0xf]
        %v295 = vld [vmem:[%s233 + $0x4] sm:$0xf]
        %v296 = vld [vmem:[%s233 + $0x8] sm:$0x1]
        %v297 = vld [vmem:[%s233 + $0xc] sm:$0xf]
        %v298 = vld [vmem:[%s233 + $0x10] sm:$0xf]
        %v299 = vld [vmem:[%s233 + $0x14] sm:$0x1]
        %v300 = vld [vmem:[%s233 + $0x18] sm:$0xf]
        %v301 = vld [vmem:[%s233 + $0x1c] sm:$0xf]
        %v302 = vld [vmem:[%s233 + $0x20] sm:$0x1]
        %v303 = vld [vmem:[%s233 + $0x24] sm:$0xf]
        %v304 = vld [vmem:[%s233 + $0x28] sm:$0xf]
        %v305 = vld [vmem:[%s233 + $0x2c] sm:$0x1]
        %v306 = vld [vmem:[%s233 + $0x30] sm:$0xf]
        %v307 = vld [vmem:[%s233 + $0x34] sm:$0xf]
        %v308 = vld [vmem:[%s233 + $0x38] sm:$0x1]
        %v309 = vld [vmem:[%s233 + $0x3c] sm:$0xf]
        %v310 = vld [vmem:[%s233 + $0x40] sm:$0xf]
        %v311 = vld [vmem:[%s233 + $0x44] sm:$0x1]
        %v312 = vld [vmem:[%s233 + $0x48] sm:$0xf]
        %v313 = vld [vmem:[%s233 + $0x4c] sm:$0xf]
        %v314 = vld [vmem:[%s233 + $0x50] sm:$0x1]
        %v315 = vld [vmem:[%s233 + $0x54] sm:$0xf]
        %v316 = vld [vmem:[%s233 + $0x58] sm:$0xf]
        %v317 = vld [vmem:[%s233 + $0x5c] sm:$0x1]
        %v318 = vld [vmem:[#allocation2] sm:$0xff]
        %v319 = vld [vmem:[#allocation2 + $0x8] sm:$0xff]
        %v320 = vld [vmem:[#allocation2 + $0x10] sm:$0x3]
        %v321 = vld [vmem:[#allocation2 + $0x18] sm:$0xff]
        %v322 = vld [vmem:[#allocation2 + $0x20] sm:$0xff]
        %v323 = vld [vmem:[#allocation2 + $0x28] sm:$0x3]
        %v324 = vld [vmem:[#allocation2 + $0x30] sm:$0xff]
        %v325 = vld [vmem:[#allocation2 + $0x38] sm:$0xff]
        %v326 = vld [vmem:[#allocation2 + $0x40] sm:$0x3]
        %v327 = vld [vmem:[#allocation2 + $0x48] sm:$0xff]
        %v328 = vld [vmem:[#allocation2 + $0x50] sm:$0xff]
        %v329 = vld [vmem:[#allocation2 + $0x58] sm:$0x3]
        %v330 = vld [vmem:[#allocation2 + $0x60] sm:$0xff]
        %v331 = vld [vmem:[#allocation2 + $0x68] sm:$0xff]
        %v332 = vld [vmem:[#allocation2 + $0x70] sm:$0x3]
        %v333 = vld [vmem:[#allocation2 + $0x78] sm:$0xff]
        %v334 = vld [vmem:[#allocation2 + $0x80] sm:$0xff]
        %v335 = vld [vmem:[#allocation2 + $0x88] sm:$0x3]
        %v336 = vld [vmem:[#allocation2 + $0x90] sm:$0xff]
        %v337 = vld [vmem:[#allocation2 + $0x98] sm:$0xff]
        %v338 = vld [vmem:[#allocation2 + $0xa0] sm:$0x3]
        %v339 = vld [vmem:[#allocation2 + $0xa8] sm:$0xff]
        %v340 = vld [vmem:[#allocation2 + $0xb0] sm:$0xff]
        %v341 = vld [vmem:[#allocation2 + $0xb8] sm:$0x3]
        %v342 = vpack.c.bf16 %v319, %v318
        %v343 = vpack.c.bf16 %v320, %v320
        %v344 = vpack.c.bf16 %v322, %v321
        %v345 = vpack.c.bf16 %v323, %v323
        %v346 = vpack.c.bf16 %v325, %v324
        %v347 = vpack.c.bf16 %v326, %v326
        %v348 = vpack.c.bf16 %v328, %v327
        %v349 = vpack.c.bf16 %v329, %v329
        %v350 = vpack.c.bf16 %v331, %v330
        %v351 = vpack.c.bf16 %v332, %v332
        %v352 = vpack.c.bf16 %v334, %v333
        %v353 = vpack.c.bf16 %v335, %v335
        %v354 = vpack.c.bf16 %v337, %v336
        %v355 = vpack.c.bf16 %v338, %v338
        %v356 = vpack.c.bf16 %v340, %v339
        %v357 = vpack.c.bf16 %v341, %v341
        %vm358 = vsmask.f32 3328
        %vm359 = vsmask.f32 7440
        %vm360 = vmor %vm358, %vm359
        %v362 = vshrl.u32 %v294, 16
        %v364 = vrot.slane %v362, 4
        %v365 = vshll.u32 %v294, 16
        %v367 = vrot.slane %v365, 5
        %v368 = vor.u32 %v364, %v367
        %v369 = vrot.slane %v368, 4
        %v371 = vshll.u32 %v295, 16
        %v373 = vrot.slane %v371, 5
        %v374 = vsel %vm360, %v369, %v373
        %v375 = vshrl.u32 %v295, 16
        %v377 = vrot.slane %v375, 4
        %v378 = vor.u32 %v377, %v373
        %v379 = vrot.slane %v378, 4
        %v381 = vshll.u32 %v296, 16
        %v383 = vrot.slane %v381, 5
        %v384 = vsel %vm360, %v379, %v383
        %v386 = vshrl.u32 %v297, 16
        %v388 = vrot.slane %v386, 4
        %v389 = vshll.u32 %v297, 16
        %v391 = vrot.slane %v389, 5
        %v392 = vor.u32 %v388, %v391
        %v393 = vrot.slane %v392, 4
        %v395 = vshll.u32 %v298, 16
        %v397 = vrot.slane %v395, 5
        %v398 = vsel %vm360, %v393, %v397
        %v399 = vshrl.u32 %v298, 16
        %v401 = vrot.slane %v399, 4
        %v402 = vor.u32 %v401, %v397
        %v403 = vrot.slane %v402, 4
        %v405 = vshll.u32 %v299, 16
        %v407 = vrot.slane %v405, 5
        %v408 = vsel %vm360, %v403, %v407
        %v410 = vshrl.u32 %v300, 16
        %v412 = vrot.slane %v410, 4
        %v413 = vshll.u32 %v300, 16
        %v415 = vrot.slane %v413, 5
        %v416 = vor.u32 %v412, %v415
        %v417 = vrot.slane %v416, 4
        %v419 = vshll.u32 %v301, 16
        %v421 = vrot.slane %v419, 5
        %v422 = vsel %vm360, %v417, %v421
        %v423 = vshrl.u32 %v301, 16
        %v425 = vrot.slane %v423, 4
        %v426 = vor.u32 %v425, %v421
        %v427 = vrot.slane %v426, 4
        %v429 = vshll.u32 %v302, 16
        %v431 = vrot.slane %v429, 5
        %v432 = vsel %vm360, %v427, %v431
        %v434 = vshrl.u32 %v303, 16
        %v436 = vrot.slane %v434, 4
        %v437 = vshll.u32 %v303, 16
        %v439 = vrot.slane %v437, 5
        %v440 = vor.u32 %v436, %v439
        %v441 = vrot.slane %v440, 4
        %v443 = vshll.u32 %v304, 16
        %v445 = vrot.slane %v443, 5
        %v446 = vsel %vm360, %v441, %v445
        %v447 = vshrl.u32 %v304, 16
        %v449 = vrot.slane %v447, 4
        %v450 = vor.u32 %v449, %v445
        %v451 = vrot.slane %v450, 4
        %v453 = vshll.u32 %v305, 16
        %v455 = vrot.slane %v453, 5
        %v456 = vsel %vm360, %v451, %v455
        %v458 = vshrl.u32 %v306, 16
        %v460 = vrot.slane %v458, 4
        %v461 = vshll.u32 %v306, 16
        %v463 = vrot.slane %v461, 5
        %v464 = vor.u32 %v460, %v463
        %v465 = vrot.slane %v464, 4
        %v467 = vshll.u32 %v307, 16
        %v469 = vrot.slane %v467, 5
        %v470 = vsel %vm360, %v465, %v469
        %v471 = vshrl.u32 %v307, 16
        %v473 = vrot.slane %v471, 4
        %v474 = vor.u32 %v473, %v469
        %v475 = vrot.slane %v474, 4
        %v477 = vshll.u32 %v308, 16
        %v479 = vrot.slane %v477, 5
        %v480 = vsel %vm360, %v475, %v479
        %v482 = vshrl.u32 %v309, 16
        %v484 = vrot.slane %v482, 4
        %v485 = vshll.u32 %v309, 16
        %v487 = vrot.slane %v485, 5
        %v488 = vor.u32 %v484, %v487
        %v489 = vrot.slane %v488, 4
        %v491 = vshll.u32 %v310, 16
        %v493 = vrot.slane %v491, 5
        %v494 = vsel %vm360, %v489, %v493
        %v495 = vshrl.u32 %v310, 16
        %v497 = vrot.slane %v495, 4
        %v498 = vor.u32 %v497, %v493
        %v499 = vrot.slane %v498, 4
        %v501 = vshll.u32 %v311, 16
        %v503 = vrot.slane %v501, 5
        %v504 = vsel %vm360, %v499, %v503
        %v506 = vshrl.u32 %v312, 16
        %v508 = vrot.slane %v506, 4
        %v509 = vshll.u32 %v312, 16
        %v511 = vrot.slane %v509, 5
        %v512 = vor.u32 %v508, %v511
        %v513 = vrot.slane %v512, 4
        %v515 = vshll.u32 %v313, 16
        %v517 = vrot.slane %v515, 5
        %v518 = vsel %vm360, %v513, %v517
        %v519 = vshrl.u32 %v313, 16
        %v521 = vrot.slane %v519, 4
        %v522 = vor.u32 %v521, %v517
        %v523 = vrot.slane %v522, 4
        %v525 = vshll.u32 %v314, 16
        %v527 = vrot.slane %v525, 5
        %v528 = vsel %vm360, %v523, %v527
        %v530 = vshrl.u32 %v315, 16
        %v532 = vrot.slane %v530, 4
        %v533 = vshll.u32 %v315, 16
        %v535 = vrot.slane %v533, 5
        %v536 = vor.u32 %v532, %v535
        %v537 = vrot.slane %v536, 4
        %v539 = vshll.u32 %v316, 16
        %v541 = vrot.slane %v539, 5
        %v542 = vsel %vm360, %v537, %v541
        %v543 = vshrl.u32 %v316, 16
        %v545 = vrot.slane %v543, 4
        %v546 = vor.u32 %v545, %v541
        %v547 = vrot.slane %v546, 4
        %v549 = vshll.u32 %v317, 16
        %v551 = vrot.slane %v549, 5
        %v552 = vsel %vm360, %v547, %v551
        %vm577 = vcmask 1042432
        %vm578 = vcmask 1046532
        %vm579 = vmor %vm577, %vm578
        %v580 = vrot.slane %v294, 5
        %v581 = vrot.slane %v580, 4
        %v582 = vrot.slane %v295, 5
        %v583 = vsel %vm579, %v581, %v582
        %v584 = vrot.slane %v582, 4
        %v585 = vrot.slane %v296, 5
        %v586 = vsel %vm579, %v584, %v585
        %v587 = vrot.slane %v297, 5
        %v588 = vrot.slane %v587, 4
        %v589 = vrot.slane %v298, 5
        %v590 = vsel %vm579, %v588, %v589
        %v591 = vrot.slane %v589, 4
        %v592 = vrot.slane %v299, 5
        %v593 = vsel %vm579, %v591, %v592
        %v594 = vrot.slane %v300, 5
        %v595 = vrot.slane %v594, 4
        %v596 = vrot.slane %v301, 5
        %v597 = vsel %vm579, %v595, %v596
        %v598 = vrot.slane %v596, 4
        %v599 = vrot.slane %v302, 5
        %v600 = vsel %vm579, %v598, %v599
        %v601 = vrot.slane %v303, 5
        %v602 = vrot.slane %v601, 4
        %v603 = vrot.slane %v304, 5
        %v604 = vsel %vm579, %v602, %v603
        %v605 = vrot.slane %v603, 4
        %v606 = vrot.slane %v305, 5
        %v607 = vsel %vm579, %v605, %v606
        %v608 = vrot.slane %v306, 5
        %v609 = vrot.slane %v608, 4
        %v610 = vrot.slane %v307, 5
        %v611 = vsel %vm579, %v609, %v610
        %v612 = vrot.slane %v610, 4
        %v613 = vrot.slane %v308, 5
        %v614 = vsel %vm579, %v612, %v613
        %v615 = vrot.slane %v309, 5
        %v616 = vrot.slane %v615, 4
        %v617 = vrot.slane %v310, 5
        %v618 = vsel %vm579, %v616, %v617
        %v619 = vrot.slane %v617, 4
        %v620 = vrot.slane %v311, 5
        %v621 = vsel %vm579, %v619, %v620
        %v622 = vrot.slane %v312, 5
        %v623 = vrot.slane %v622, 4
        %v624 = vrot.slane %v313, 5
        %v625 = vsel %vm579, %v623, %v624
        %v626 = vrot.slane %v624, 4
        %v627 = vrot.slane %v314, 5
        %v628 = vsel %vm579, %v626, %v627
        %v629 = vrot.slane %v315, 5
        %v630 = vrot.slane %v629, 4
        %v631 = vrot.slane %v316, 5
        %v632 = vsel %vm579, %v630, %v631
        %v633 = vrot.slane %v631, 4
        %v634 = vrot.slane %v317, 5
        %v635 = vsel %vm579, %v633, %v634
        %vm636 = vsmask.f32 7424
        %v638 = vshrl.u32 %v342, 16
        %v640 = vshll.u32 %v342, 16
        %v642 = vrot.slane %v640, 1
        %v643 = vor.u32 %v638, %v642
        %v645 = vshll.u32 %v343, 16
        %v647 = vrot.slane %v645, 1
        %v648 = vsel %vm636, %v643, %v647
        %v650 = vshrl.u32 %v344, 16
        %v652 = vshll.u32 %v344, 16
        %v654 = vrot.slane %v652, 1
        %v655 = vor.u32 %v650, %v654
        %v657 = vshll.u32 %v345, 16
        %v659 = vrot.slane %v657, 1
        %v660 = vsel %vm636, %v655, %v659
        %v662 = vshrl.u32 %v346, 16
        %v664 = vshll.u32 %v346, 16
        %v666 = vrot.slane %v664, 1
        %v667 = vor.u32 %v662, %v666
        %v669 = vshll.u32 %v347, 16
        %v671 = vrot.slane %v669, 1
        %v672 = vsel %vm636, %v667, %v671
        %v674 = vshrl.u32 %v348, 16
        %v676 = vshll.u32 %v348, 16
        %v678 = vrot.slane %v676, 1
        %v679 = vor.u32 %v674, %v678
        %v681 = vshll.u32 %v349, 16
        %v683 = vrot.slane %v681, 1
        %v684 = vsel %vm636, %v679, %v683
        %v686 = vshrl.u32 %v350, 16
        %v688 = vshll.u32 %v350, 16
        %v690 = vrot.slane %v688, 1
        %v691 = vor.u32 %v686, %v690
        %v693 = vshll.u32 %v351, 16
        %v695 = vrot.slane %v693, 1
        %v696 = vsel %vm636, %v691, %v695
        %v698 = vshrl.u32 %v352, 16
        %v700 = vshll.u32 %v352, 16
        %v702 = vrot.slane %v700, 1
        %v703 = vor.u32 %v698, %v702
        %v705 = vshll.u32 %v353, 16
        %v707 = vrot.slane %v705, 1
        %v708 = vsel %vm636, %v703, %v707
        %v710 = vshrl.u32 %v354, 16
        %v712 = vshll.u32 %v354, 16
        %v714 = vrot.slane %v712, 1
        %v715 = vor.u32 %v710, %v714
        %v717 = vshll.u32 %v355, 16
        %v719 = vrot.slane %v717, 1
        %v720 = vsel %vm636, %v715, %v719
        %v722 = vshrl.u32 %v356, 16
        %v724 = vshll.u32 %v356, 16
        %v726 = vrot.slane %v724, 1
        %v727 = vor.u32 %v722, %v726
        %v729 = vshll.u32 %v357, 16
        %v731 = vrot.slane %v729, 1
        %v732 = vsel %vm636, %v727, %v731
        %vm749 = vcmask 1046528
        %v750 = vrot.slane %v342, 1
        %v751 = vrot.slane %v343, 1
        %v752 = vsel %vm749, %v750, %v751
        %v753 = vrot.slane %v344, 1
        %v754 = vrot.slane %v345, 1
        %v755 = vsel %vm749, %v753, %v754
        %v756 = vrot.slane %v346, 1
        %v757 = vrot.slane %v347, 1
        %v758 = vsel %vm749, %v756, %v757
        %v759 = vrot.slane %v348, 1
        %v760 = vrot.slane %v349, 1
        %v761 = vsel %vm749, %v759, %v760
        %v762 = vrot.slane %v350, 1
        %v763 = vrot.slane %v351, 1
        %v764 = vsel %vm749, %v762, %v763
        %v765 = vrot.slane %v352, 1
        %v766 = vrot.slane %v353, 1
        %v767 = vsel %vm749, %v765, %v766
        %v768 = vrot.slane %v354, 1
        %v769 = vrot.slane %v355, 1
        %v770 = vsel %vm749, %v768, %v769
        %v771 = vrot.slane %v356, 1
        %v772 = vrot.slane %v357, 1
        %v773 = vsel %vm749, %v771, %v772
        %v774 = vunpack.c.l.b16 %v294
        %v775 = vunpack.c.l.b16 %v295
        %v776 = vunpack.c.l.b16 %v297
        %v777 = vunpack.c.l.b16 %v298
        %v778 = vunpack.c.l.b16 %v300
        %v779 = vunpack.c.l.b16 %v301
        %v780 = vunpack.c.l.b16 %v303
        %v781 = vunpack.c.l.b16 %v304
        %v782 = vunpack.c.l.b16 %v306
        %v783 = vunpack.c.l.b16 %v307
        %v784 = vunpack.c.l.b16 %v309
        %v785 = vunpack.c.l.b16 %v310
        %v786 = vunpack.c.l.b16 %v312
        %v787 = vunpack.c.l.b16 %v313
        %v788 = vunpack.c.l.b16 %v315
        %v789 = vunpack.c.l.b16 %v316
        %v790 = vpack.c.b16 %v775, %v774
        %v791 = vpack.c.b16 %v777, %v776
        %v792 = vpack.c.b16 %v779, %v778
        %v793 = vpack.c.b16 %v781, %v780
        %v794 = vpack.c.b16 %v783, %v782
        %v795 = vpack.c.b16 %v785, %v784
        %v796 = vpack.c.b16 %v787, %v786
        %v797 = vpack.c.b16 %v789, %v788
        %v798 = vunpack.c.l.b16 %v374
        %v799 = vunpack.c.l.b16 %v384
        %v800 = vunpack.c.l.b16 %v398
        %v801 = vunpack.c.l.b16 %v408
        %v802 = vunpack.c.l.b16 %v422
        %v803 = vunpack.c.l.b16 %v432
        %v804 = vunpack.c.l.b16 %v446
        %v805 = vunpack.c.l.b16 %v456
        %v806 = vunpack.c.l.b16 %v470
        %v807 = vunpack.c.l.b16 %v480
        %v808 = vunpack.c.l.b16 %v494
        %v809 = vunpack.c.l.b16 %v504
        %v810 = vunpack.c.l.b16 %v518
        %v811 = vunpack.c.l.b16 %v528
        %v812 = vunpack.c.l.b16 %v542
        %v813 = vunpack.c.l.b16 %v552
        %v814 = vpack.c.b16 %v799, %v798
        %v815 = vpack.c.b16 %v801, %v800
        %v816 = vpack.c.b16 %v803, %v802
        %v817 = vpack.c.b16 %v805, %v804
        %v818 = vpack.c.b16 %v807, %v806
        %v819 = vpack.c.b16 %v809, %v808
        %v820 = vpack.c.b16 %v811, %v810
        %v821 = vpack.c.b16 %v813, %v812
        %822 = vrot.lane.b32.xlu0 %v814, 4
        %v823 = vpop.permute.xlu0 %822
        %824 = vrot.lane.b32.xlu0 %v815, 4
        %v825 = vpop.permute.xlu0 %824
        %826 = vrot.lane.b32.xlu0 %v816, 4
        %v827 = vpop.permute.xlu0 %826
        %828 = vrot.lane.b32.xlu0 %v817, 4
        %v829 = vpop.permute.xlu0 %828
        %830 = vrot.lane.b32.xlu0 %v818, 4
        %v831 = vpop.permute.xlu0 %830
        %832 = vrot.lane.b32.xlu0 %v819, 4
        %v833 = vpop.permute.xlu0 %832
        %834 = vrot.lane.b32.xlu0 %v820, 4
        %v835 = vpop.permute.xlu0 %834
        %836 = vrot.lane.b32.xlu0 %v821, 4
        %v837 = vpop.permute.xlu0 %836
        %v838 = vunpack.c.l.b16 %v583
        %v839 = vunpack.c.l.b16 %v586
        %v840 = vunpack.c.l.b16 %v590
        %v841 = vunpack.c.l.b16 %v593
        %v842 = vunpack.c.l.b16 %v597
        %v843 = vunpack.c.l.b16 %v600
        %v844 = vunpack.c.l.b16 %v604
        %v845 = vunpack.c.l.b16 %v607
        %v846 = vunpack.c.l.b16 %v611
        %v847 = vunpack.c.l.b16 %v614
        %v848 = vunpack.c.l.b16 %v618
        %v849 = vunpack.c.l.b16 %v621
        %v850 = vunpack.c.l.b16 %v625
        %v851 = vunpack.c.l.b16 %v628
        %v852 = vunpack.c.l.b16 %v632
        %v853 = vunpack.c.l.b16 %v635
        %v854 = vpack.c.b16 %v839, %v838
        %v855 = vpack.c.b16 %v841, %v840
        %v856 = vpack.c.b16 %v843, %v842
        %v857 = vpack.c.b16 %v845, %v844
        %v858 = vpack.c.b16 %v847, %v846
        %v859 = vpack.c.b16 %v849, %v848
        %v860 = vpack.c.b16 %v851, %v850
        %v861 = vpack.c.b16 %v853, %v852
        %862 = vrot.lane.b32.xlu0 %v854, 8
        %v863 = vpop.permute.xlu0 %862
        %864 = vrot.lane.b32.xlu0 %v855, 8
        %v865 = vpop.permute.xlu0 %864
        %866 = vrot.lane.b32.xlu0 %v856, 8
        %v867 = vpop.permute.xlu0 %866
        %868 = vrot.lane.b32.xlu0 %v857, 8
        %v869 = vpop.permute.xlu0 %868
        %870 = vrot.lane.b32.xlu0 %v858, 8
        %v871 = vpop.permute.xlu0 %870
        %872 = vrot.lane.b32.xlu0 %v859, 8
        %v873 = vpop.permute.xlu0 %872
        %874 = vrot.lane.b32.xlu0 %v860, 8
        %v875 = vpop.permute.xlu0 %874
        %876 = vrot.lane.b32.xlu0 %v861, 8
        %v877 = vpop.permute.xlu0 %876
        %878 = vrot.lane.b32.xlu0 %v342, 12
        %v879 = vpop.permute.xlu0 %878
        %880 = vrot.lane.b32.xlu0 %v344, 12
        %v881 = vpop.permute.xlu0 %880
        %882 = vrot.lane.b32.xlu0 %v346, 12
        %v883 = vpop.permute.xlu0 %882
        %884 = vrot.lane.b32.xlu0 %v348, 12
        %v885 = vpop.permute.xlu0 %884
        %886 = vrot.lane.b32.xlu0 %v350, 12
        %v887 = vpop.permute.xlu0 %886
        %888 = vrot.lane.b32.xlu0 %v352, 12
        %v889 = vpop.permute.xlu0 %888
        %890 = vrot.lane.b32.xlu0 %v354, 12
        %v891 = vpop.permute.xlu0 %890
        %892 = vrot.lane.b32.xlu0 %v356, 12
        %v893 = vpop.permute.xlu0 %892
        %894 = vrot.lane.b32.xlu0 %v648, 20
        %v895 = vpop.permute.xlu0 %894
        %896 = vrot.lane.b32.xlu0 %v660, 20
        %v897 = vpop.permute.xlu0 %896
        %898 = vrot.lane.b32.xlu0 %v672, 20
        %v899 = vpop.permute.xlu0 %898
        %900 = vrot.lane.b32.xlu0 %v684, 20
        %v901 = vpop.permute.xlu0 %900
        %902 = vrot.lane.b32.xlu0 %v696, 20
        %v903 = vpop.permute.xlu0 %902
        %904 = vrot.lane.b32.xlu0 %v708, 20
        %v905 = vpop.permute.xlu0 %904
        %906 = vrot.lane.b32.xlu0 %v720, 20
        %v907 = vpop.permute.xlu0 %906
        %908 = vrot.lane.b32.xlu0 %v732, 20
        %v909 = vpop.permute.xlu0 %908
        %910 = vrot.lane.b32.xlu0 %v752, 28
        %v911 = vpop.permute.xlu0 %910
        %912 = vrot.lane.b32.xlu0 %v755, 28
        %v913 = vpop.permute.xlu0 %912
        %914 = vrot.lane.b32.xlu0 %v758, 28
        %v915 = vpop.permute.xlu0 %914
        %916 = vrot.lane.b32.xlu0 %v761, 28
        %v917 = vpop.permute.xlu0 %916
        %918 = vrot.lane.b32.xlu0 %v764, 28
        %v919 = vpop.permute.xlu0 %918
        %920 = vrot.lane.b32.xlu0 %v767, 28
        %v921 = vpop.permute.xlu0 %920
        %922 = vrot.lane.b32.xlu0 %v770, 28
        %v923 = vpop.permute.xlu0 %922
        %924 = vrot.lane.b32.xlu0 %v773, 28
        %v925 = vpop.permute.xlu0 %924
        %vm926 = vcmask 31744
        %v929 = vsel %vm926, %v790, %v823
        %v932 = vsel %vm926, %v791, %v825
        %v935 = vsel %vm926, %v792, %v827
        %v938 = vsel %vm926, %v793, %v829
        %v941 = vsel %vm926, %v794, %v831
        %v944 = vsel %vm926, %v795, %v833
        %v947 = vsel %vm926, %v796, %v835
        %v950 = vsel %vm926, %v797, %v837
        %vm951 = vcmask 64512
        %v953 = vsel %vm951, %v929, %v863
        %v955 = vsel %vm951, %v932, %v865
        %v957 = vsel %vm951, %v935, %v867
        %v959 = vsel %vm951, %v938, %v869
        %v961 = vsel %vm951, %v941, %v871
        %v963 = vsel %vm951, %v944, %v873
        %v965 = vsel %vm951, %v947, %v875
        %v967 = vsel %vm951, %v950, %v877
        %vm968 = vcmask 97280
        %v970 = vsel %vm968, %v953, %v879
        %v972 = vsel %vm968, %v955, %v881
        %v974 = vsel %vm968, %v957, %v883
        %v976 = vsel %vm968, %v959, %v885
        %v978 = vsel %vm968, %v961, %v887
        %v980 = vsel %vm968, %v963, %v889
        %v982 = vsel %vm968, %v965, %v891
        %v984 = vsel %vm968, %v967, %v893
        %vm985 = vcmask 162816
        %v987 = vsel %vm985, %v970, %v895
        %v989 = vsel %vm985, %v972, %v897
        %v991 = vsel %vm985, %v974, %v899
        %v993 = vsel %vm985, %v976, %v901
        %v995 = vsel %vm985, %v978, %v903
        %v997 = vsel %vm985, %v980, %v905
        %v999 = vsel %vm985, %v982, %v907
        %v1001 = vsel %vm985, %v984, %v909
        %vm1002 = vcmask 228352
        %v1004 = vsel %vm1002, %v987, %v911
        %v1006 = vsel %vm1002, %v989, %v913
        %v1008 = vsel %vm1002, %v991, %v915
        %v1010 = vsel %vm1002, %v993, %v917
        %v1012 = vsel %vm1002, %v995, %v919
        %v1014 = vsel %vm1002, %v997, %v921
        %v1016 = vsel %vm1002, %v999, %v923
        %v1018 = vsel %vm1002, %v1001, %v925
        %v1019 = vld [vmem:[%s1] sm:$0xf]
        %v1020 = vld [vmem:[%s1 + $0x4] sm:$0xf]
        %v1021 = vld [vmem:[%s1 + $0x8] sm:$0xf]
        %v1022 = vld [vmem:[%s1 + $0xc] sm:$0xf]
        %v1023 = vld [vmem:[%s1 + $0x10] sm:$0x3]
        %v1024 = vld [vmem:[%s2] sm:$0x1]
        %v1026 = vlaneseq
        %v1027 = vshrl.u32 %v1026, 7
        %v1028 = vsub.s32 0, %v1027
        %v1029 = vrot.slane %v1024, %v1028
        %v1036 = vunpack.c.l.b16 %v1019
        %v1037 = vunpack.c.l.b16 %v1020
        %v1038 = vunpack.c.l.b16 %v1021
        %v1039 = vunpack.c.l.b16 %v1022
        %v1040 = vunpack.c.l.b16 %v1023
        %v1041 = vpack.c.b16 %v1037, %v1036
        %v1042 = vpack.c.b16 %v1039, %v1038
        %v1043 = vpack.c.b16 %v1040, %v1040
        %vm1046 = vcmask 293888
        %v1047 = vsel %vm1046, %v1004, 0
        %v1049 = vsel %vm1046, %v1006, 0
        %v1051 = vsel %vm1046, %v1008, 0
        %v1053 = vsel %vm1046, %v1010, 0
        %v1055 = vsel %vm1046, %v1012, 0
        %v1057 = vsel %vm1046, %v1014, 0
        %v1059 = vsel %vm1046, %v1016, 0
        %v1061 = vsel %vm1046, %v1018, 0
        %vm1063 = vcmask 1041408
        %v1065 = vsel %vm1063, %v1043, 0
        %1067 = vmatprep.subr.bf16.mxu0 0
        %1068 = vmatpush1.bf16.msra.mxu0 0
        %1069 = vmatprep.subr.bf16.mxu0 0
        %1070 = vmatpush1.bf16.msra.mxu0 0
        %1071 = vmatprep.subr.bf16.mxu0 0
        %1072 = vmatpush1.bf16.msra.mxu0 0
        %1073 = vmatprep.subr.bf16.mxu0 0
        %1074 = vmatpush1.bf16.msra.mxu0 0
        %1075 = vmatprep.subr.bf16.mxu0 0
        %1076 = vmatpush1.bf16.msra.mxu0 0
        %1077 = vmatprep.subr.bf16.mxu0 0
        %1078 = vmatpush1.bf16.msra.mxu0 %v1065
        %1079 = vmatprep.subr.bf16.mxu0 0
        %1080 = vmatpush1.bf16.msra.mxu0 %v1042
        %1081 = vmatprep.subr.bf16.mxu0 0
        %1082 = vmatpush1.bf16.msra.mxu0 %v1041
        %1083 = vmatprep.subr.bf16.mxu0 0
        %1084 = vmatpush2.bf16.msra.mxu0 0
        %1085 = vmatprep.subr.bf16.mxu0 0
        %1086 = vmatpush2.bf16.msra.mxu0 0
        %1087 = vmatprep.subr.bf16.mxu0 0
        %1088 = vmatpush2.bf16.msra.mxu0 0
        %1089 = vmatprep.subr.bf16.mxu0 0
        %1090 = vmatpush2.bf16.msra.mxu0 0
        %1091 = vmatprep.subr.bf16.mxu0 0
        %1092 = vmatpush2.bf16.msra.mxu0 0
        %1093 = vmatprep.subr.bf16.mxu0 0
        %1094 = vmatpush2.bf16.msra.mxu0 0
        %1095 = vmatprep.subr.bf16.mxu0 0
        %1096 = vmatpush2.bf16.msra.mxu0 0
        %1097 = vmatprep.subr.bf16.mxu0 0
        %1098 = vmatpush2.bf16.msra.mxu0 0
        %1099 = vmatprep.mubr.bf16.mxu0 0
        %1100 = vmatmul.mubr.bf16.gmra.mxu0 %v1047
        %v1101 = vpop.f32.mrf.mxu0
        %v1102 = vadd.f32 %v1029, %v1101
        %v1103 = vpop.f32.mrf.mxu0
        %v1104 = vpop.f32.mrf.mxu0
        %v1105 = vadd.f32 %v1029, %v1104
        %v1106 = vpop.f32.mrf.mxu0
        %1107 = vmatprep.mubr.bf16.mxu0 0
        %1108 = vmatmul.mubr.bf16.gmra.mxu0 %v1049
        %v1109 = vpop.f32.mrf.mxu0
        %v1110 = vadd.f32 %v1029, %v1109
        %v1111 = vpop.f32.mrf.mxu0
        %v1112 = vpop.f32.mrf.mxu0
        %v1113 = vadd.f32 %v1029, %v1112
        %v1114 = vpop.f32.mrf.mxu0
        %1115 = vmatprep.mubr.bf16.mxu0 0
        %1116 = vmatmul.mubr.bf16.gmra.mxu0 %v1051
        %v1117 = vpop.f32.mrf.mxu0
        %v1118 = vadd.f32 %v1029, %v1117
        %v1119 = vpop.f32.mrf.mxu0
        %v1120 = vpop.f32.mrf.mxu0
        %v1121 = vadd.f32 %v1029, %v1120
        %v1122 = vpop.f32.mrf.mxu0
        %1123 = vmatprep.mubr.bf16.mxu0 0
        %1124 = vmatmul.mubr.bf16.gmra.mxu0 %v1053
        %v1125 = vpop.f32.mrf.mxu0
        %v1126 = vadd.f32 %v1029, %v1125
        %v1127 = vpop.f32.mrf.mxu0
        %v1128 = vpop.f32.mrf.mxu0
        %v1129 = vadd.f32 %v1029, %v1128
        %v1130 = vpop.f32.mrf.mxu0
        %1131 = vmatprep.mubr.bf16.mxu0 0
        %1132 = vmatmul.mubr.bf16.gmra.mxu0 %v1055
        %v1133 = vpop.f32.mrf.mxu0
        %v1134 = vadd.f32 %v1029, %v1133
        %v1135 = vpop.f32.mrf.mxu0
        %v1136 = vpop.f32.mrf.mxu0
        %v1137 = vadd.f32 %v1029, %v1136
        %v1138 = vpop.f32.mrf.mxu0
        %1139 = vmatprep.mubr.bf16.mxu0 0
        %1140 = vmatmul.mubr.bf16.gmra.mxu0 %v1057
        %v1141 = vpop.f32.mrf.mxu0
        %v1142 = vadd.f32 %v1029, %v1141
        %v1143 = vpop.f32.mrf.mxu0
        %v1144 = vpop.f32.mrf.mxu0
        %v1145 = vadd.f32 %v1029, %v1144
        %v1146 = vpop.f32.mrf.mxu0
        %1147 = vmatprep.mubr.bf16.mxu0 0
        %1148 = vmatmul.mubr.bf16.gmra.mxu0 %v1059
        %v1149 = vpop.f32.mrf.mxu0
        %v1150 = vadd.f32 %v1029, %v1149
        %v1151 = vpop.f32.mrf.mxu0
        %v1152 = vpop.f32.mrf.mxu0
        %v1153 = vadd.f32 %v1029, %v1152
        %v1154 = vpop.f32.mrf.mxu0
        %1155 = vmatprep.mubr.bf16.mxu0 0
        %1156 = vmatmul.mubr.bf16.gmra.mxu0 %v1061
        %v1157 = vpop.f32.mrf.mxu0
        %v1158 = vadd.f32 %v1029, %v1157
        %v1159 = vpop.f32.mrf.mxu0
        %v1160 = vpop.f32.mrf.mxu0
        %v1161 = vadd.f32 %v1029, %v1160
        %v1162 = vpop.f32.mrf.mxu0
        %1163 = vdwg.mxu0
        %v1164 = vxor.u32 %v1102, 2147483648
        %v1165 = vxor.u32 %v1105, 2147483648
        %v1166 = vxor.u32 %v1110, 2147483648
        %v1167 = vxor.u32 %v1113, 2147483648
        %v1168 = vxor.u32 %v1118, 2147483648
        %v1169 = vxor.u32 %v1121, 2147483648
        %v1170 = vxor.u32 %v1126, 2147483648
        %v1171 = vxor.u32 %v1129, 2147483648
        %v1172 = vxor.u32 %v1134, 2147483648
        %v1173 = vxor.u32 %v1137, 2147483648
        %v1174 = vxor.u32 %v1142, 2147483648
        %v1175 = vxor.u32 %v1145, 2147483648
        %v1176 = vxor.u32 %v1150, 2147483648
        %v1177 = vxor.u32 %v1153, 2147483648
        %v1178 = vxor.u32 %v1158, 2147483648
        %v1179 = vxor.u32 %v1161, 2147483648
        %v1180 = vmul.f32 %v1164, 1.442695
        %v1181 = vpow.pop %v1180
        %v1182 = vmul.f32 %v1165, 1.442695
        %v1183 = vpow.pop %v1182
        %v1184 = vmul.f32 %v1166, 1.442695
        %v1185 = vpow.pop %v1184
        %v1186 = vmul.f32 %v1167, 1.442695
        %v1187 = vpow.pop %v1186
        %v1188 = vmul.f32 %v1168, 1.442695
        %v1189 = vpow.pop %v1188
        %v1190 = vmul.f32 %v1169, 1.442695
        %v1191 = vpow.pop %v1190
        %v1192 = vmul.f32 %v1170, 1.442695
        %v1193 = vpow.pop %v1192
        %v1194 = vmul.f32 %v1171, 1.442695
        %v1195 = vpow.pop %v1194
        %v1196 = vmul.f32 %v1172, 1.442695
        %v1197 = vpow.pop %v1196
        %v1198 = vmul.f32 %v1173, 1.442695
        %v1199 = vpow.pop %v1198
        %v1200 = vmul.f32 %v1174, 1.442695
        %v1201 = vpow.pop %v1200
        %v1202 = vmul.f32 %v1175, 1.442695
        %v1203 = vpow.pop %v1202
        %v1204 = vmul.f32 %v1176, 1.442695
        %v1205 = vpow.pop %v1204
        %v1206 = vmul.f32 %v1177, 1.442695
        %v1207 = vpow.pop %v1206
        %v1208 = vmul.f32 %v1178, 1.442695
        %v1209 = vpow.pop %v1208
        %v1210 = vmul.f32 %v1179, 1.442695
        %v1211 = vpow.pop %v1210
        %v1212 = vadd.f32 %v1181, 1.0
        %v1213 = vadd.f32 %v1183, 1.0
        %v1214 = vadd.f32 %v1185, 1.0
        %v1215 = vadd.f32 %v1187, 1.0
        %v1216 = vadd.f32 %v1189, 1.0
        %v1217 = vadd.f32 %v1191, 1.0
        %v1218 = vadd.f32 %v1193, 1.0
        %v1219 = vadd.f32 %v1195, 1.0
        %v1220 = vadd.f32 %v1197, 1.0
        %v1221 = vadd.f32 %v1199, 1.0
        %v1222 = vadd.f32 %v1201, 1.0
        %v1223 = vadd.f32 %v1203, 1.0
        %v1224 = vadd.f32 %v1205, 1.0
        %v1225 = vadd.f32 %v1207, 1.0
        %v1226 = vadd.f32 %v1209, 1.0
        %v1227 = vadd.f32 %v1211, 1.0
        %v1228 = vrcp.pop %v1212
        %v1229 = vmul.f32 1.0, %v1228
        %v1230 = vrcp.pop %v1213
        %v1231 = vmul.f32 1.0, %v1230
        %v1232 = vrcp.pop %v1214
        %v1233 = vmul.f32 1.0, %v1232
        %v1234 = vrcp.pop %v1215
        %v1235 = vmul.f32 1.0, %v1234
        %v1236 = vrcp.pop %v1216
        %v1237 = vmul.f32 1.0, %v1236
        %v1238 = vrcp.pop %v1217
        %v1239 = vmul.f32 1.0, %v1238
        %v1240 = vrcp.pop %v1218
        %v1241 = vmul.f32 1.0, %v1240
        %v1242 = vrcp.pop %v1219
        %v1243 = vmul.f32 1.0, %v1242
        %v1244 = vrcp.pop %v1220
        %v1245 = vmul.f32 1.0, %v1244
        %v1246 = vrcp.pop %v1221
        %v1247 = vmul.f32 1.0, %v1246
        %v1248 = vrcp.pop %v1222
        %v1249 = vmul.f32 1.0, %v1248
        %v1250 = vrcp.pop %v1223
        %v1251 = vmul.f32 1.0, %v1250
        %v1252 = vrcp.pop %v1224
        %v1253 = vmul.f32 1.0, %v1252
        %v1254 = vrcp.pop %v1225
        %v1255 = vmul.f32 1.0, %v1254
        %v1256 = vrcp.pop %v1226
        %v1257 = vmul.f32 1.0, %v1256
        %v1258 = vrcp.pop %v1227
        %v1259 = vmul.f32 1.0, %v1258
        %v1260 = vtanh.pop %v1102
        %v1261 = vtanh.pop %v1105
        %v1262 = vtanh.pop %v1110
        %v1263 = vtanh.pop %v1113
        %v1264 = vtanh.pop %v1118
        %v1265 = vtanh.pop %v1121
        %v1266 = vtanh.pop %v1126
        %v1267 = vtanh.pop %v1129
        %v1268 = vtanh.pop %v1134
        %v1269 = vtanh.pop %v1137
        %v1270 = vtanh.pop %v1142
        %v1271 = vtanh.pop %v1145
        %v1272 = vtanh.pop %v1150
        %v1273 = vtanh.pop %v1153
        %v1274 = vtanh.pop %v1158
        %v1275 = vtanh.pop %v1161
        %v1276 = vld [vmem:[#allocation3] sm:$0xff]
        %v1277 = vld [vmem:[#allocation3 + $0x8] sm:$0xff]
        %v1278 = vld [vmem:[#allocation3 + $0x10] sm:$0xff]
        %v1279 = vld [vmem:[#allocation3 + $0x18] sm:$0xff]
        %v1280 = vld [vmem:[#allocation3 + $0x20] sm:$0xff]
        %v1281 = vld [vmem:[#allocation3 + $0x28] sm:$0xff]
        %v1282 = vld [vmem:[#allocation3 + $0x30] sm:$0xff]
        %v1283 = vld [vmem:[#allocation3 + $0x38] sm:$0xff]
        %v1284 = vld [vmem:[#allocation3 + $0x40] sm:$0xff]
        %v1285 = vld [vmem:[#allocation3 + $0x48] sm:$0xff]
        %v1286 = vld [vmem:[#allocation3 + $0x50] sm:$0xff]
        %v1287 = vld [vmem:[#allocation3 + $0x58] sm:$0xff]
        %v1288 = vld [vmem:[#allocation3 + $0x60] sm:$0xff]
        %v1289 = vld [vmem:[#allocation3 + $0x68] sm:$0xff]
        %v1290 = vld [vmem:[#allocation3 + $0x70] sm:$0xff]
        %v1291 = vld [vmem:[#allocation3 + $0x78] sm:$0xff]
        %1308 = vrot.lane.b32.xlu0 %v1276, 8
        %v1309 = vpop.permute.xlu0 %1308
        %1310 = vrot.lane.b32.xlu0 %v1277, 8
        %v1311 = vpop.permute.xlu0 %1310
        %1312 = vrot.lane.b32.xlu0 %v1278, 8
        %v1313 = vpop.permute.xlu0 %1312
        %1314 = vrot.lane.b32.xlu0 %v1279, 8
        %v1315 = vpop.permute.xlu0 %1314
        %1316 = vrot.lane.b32.xlu0 %v1280, 8
        %v1317 = vpop.permute.xlu0 %1316
        %1318 = vrot.lane.b32.xlu0 %v1281, 8
        %v1319 = vpop.permute.xlu0 %1318
        %1320 = vrot.lane.b32.xlu0 %v1282, 8
        %v1321 = vpop.permute.xlu0 %1320
        %1322 = vrot.lane.b32.xlu0 %v1283, 8
        %v1323 = vpop.permute.xlu0 %1322
        %1324 = vrot.lane.b32.xlu0 %v1284, 8
        %v1325 = vpop.permute.xlu0 %1324
        %1326 = vrot.lane.b32.xlu0 %v1285, 8
        %v1327 = vpop.permute.xlu0 %1326
        %1328 = vrot.lane.b32.xlu0 %v1286, 8
        %v1329 = vpop.permute.xlu0 %1328
        %1330 = vrot.lane.b32.xlu0 %v1287, 8
        %v1331 = vpop.permute.xlu0 %1330
        %1332 = vrot.lane.b32.xlu0 %v1288, 8
        %v1333 = vpop.permute.xlu0 %1332
        %1334 = vrot.lane.b32.xlu0 %v1289, 8
        %v1335 = vpop.permute.xlu0 %1334
        %1336 = vrot.lane.b32.xlu0 %v1290, 8
        %v1337 = vpop.permute.xlu0 %1336
        %1338 = vrot.lane.b32.xlu0 %v1291, 8
        %v1339 = vpop.permute.xlu0 %1338
        %v1356 = vmul.f32 %v1229, %v1309
        %v1357 = vmul.f32 %v1231, %v1311
        %v1358 = vmul.f32 %v1233, %v1313
        %v1359 = vmul.f32 %v1235, %v1315
        %v1360 = vmul.f32 %v1237, %v1317
        %v1361 = vmul.f32 %v1239, %v1319
        %v1362 = vmul.f32 %v1241, %v1321
        %v1363 = vmul.f32 %v1243, %v1323
        %v1364 = vmul.f32 %v1245, %v1325
        %v1365 = vmul.f32 %v1247, %v1327
        %v1366 = vmul.f32 %v1249, %v1329
        %v1367 = vmul.f32 %v1251, %v1331
        %v1368 = vmul.f32 %v1253, %v1333
        %v1369 = vmul.f32 %v1255, %v1335
        %v1370 = vmul.f32 %v1257, %v1337
        %v1371 = vmul.f32 %v1259, %v1339
        %1388 = vrot.lane.b32.xlu0 %v1260, 104
        %v1389 = vpop.permute.xlu0 %1388
        %1390 = vrot.lane.b32.xlu0 %v1261, 104
        %v1391 = vpop.permute.xlu0 %1390
        %1392 = vrot.lane.b32.xlu0 %v1262, 104
        %v1393 = vpop.permute.xlu0 %1392
        %1394 = vrot.lane.b32.xlu0 %v1263, 104
        %v1395 = vpop.permute.xlu0 %1394
        %1396 = vrot.lane.b32.xlu0 %v1264, 104
        %v1397 = vpop.permute.xlu0 %1396
        %1398 = vrot.lane.b32.xlu0 %v1265, 104
        %v1399 = vpop.permute.xlu0 %1398
        %1400 = vrot.lane.b32.xlu0 %v1266, 104
        %v1401 = vpop.permute.xlu0 %1400
        %1402 = vrot.lane.b32.xlu0 %v1267, 104
        %v1403 = vpop.permute.xlu0 %1402
        %1404 = vrot.lane.b32.xlu0 %v1268, 104
        %v1405 = vpop.permute.xlu0 %1404
        %1406 = vrot.lane.b32.xlu0 %v1269, 104
        %v1407 = vpop.permute.xlu0 %1406
        %1408 = vrot.lane.b32.xlu0 %v1270, 104
        %v1409 = vpop.permute.xlu0 %1408
        %1410 = vrot.lane.b32.xlu0 %v1271, 104
        %v1411 = vpop.permute.xlu0 %1410
        %1412 = vrot.lane.b32.xlu0 %v1272, 104
        %v1413 = vpop.permute.xlu0 %1412
        %1414 = vrot.lane.b32.xlu0 %v1273, 104
        %v1415 = vpop.permute.xlu0 %1414
        %1416 = vrot.lane.b32.xlu0 %v1274, 104
        %v1417 = vpop.permute.xlu0 %1416
        %1418 = vrot.lane.b32.xlu0 %v1275, 104
        %v1419 = vpop.permute.xlu0 %1418
        %v1436 = vmul.f32 %v1229, %v1389
        %v1437 = vmul.f32 %v1231, %v1391
        %v1438 = vmul.f32 %v1233, %v1393
        %v1439 = vmul.f32 %v1235, %v1395
        %v1440 = vmul.f32 %v1237, %v1397
        %v1441 = vmul.f32 %v1239, %v1399
        %v1442 = vmul.f32 %v1241, %v1401
        %v1443 = vmul.f32 %v1243, %v1403
        %v1444 = vmul.f32 %v1245, %v1405
        %v1445 = vmul.f32 %v1247, %v1407
        %v1446 = vmul.f32 %v1249, %v1409
        %v1447 = vmul.f32 %v1251, %v1411
        %v1448 = vmul.f32 %v1253, %v1413
        %v1449 = vmul.f32 %v1255, %v1415
        %v1450 = vmul.f32 %v1257, %v1417
        %v1451 = vmul.f32 %v1259, %v1419
        %1468 = vrot.lane.b32.xlu0 %v1436, 8
        %v1469 = vpop.permute.xlu0 %1468
        %1470 = vrot.lane.b32.xlu0 %v1437, 8
        %v1471 = vpop.permute.xlu0 %1470
        %1472 = vrot.lane.b32.xlu0 %v1438, 8
        %v1473 = vpop.permute.xlu0 %1472
        %1474 = vrot.lane.b32.xlu0 %v1439, 8
        %v1475 = vpop.permute.xlu0 %1474
        %1476 = vrot.lane.b32.xlu0 %v1440, 8
        %v1477 = vpop.permute.xlu0 %1476
        %1478 = vrot.lane.b32.xlu0 %v1441, 8
        %v1479 = vpop.permute.xlu0 %1478
        %1480 = vrot.lane.b32.xlu0 %v1442, 8
        %v1481 = vpop.permute.xlu0 %1480
        %1482 = vrot.lane.b32.xlu0 %v1443, 8
        %v1483 = vpop.permute.xlu0 %1482
        %1484 = vrot.lane.b32.xlu0 %v1444, 8
        %v1485 = vpop.permute.xlu0 %1484
        %1486 = vrot.lane.b32.xlu0 %v1445, 8
        %v1487 = vpop.permute.xlu0 %1486
        %1488 = vrot.lane.b32.xlu0 %v1446, 8
        %v1489 = vpop.permute.xlu0 %1488
        %1490 = vrot.lane.b32.xlu0 %v1447, 8
        %v1491 = vpop.permute.xlu0 %1490
        %1492 = vrot.lane.b32.xlu0 %v1448, 8
        %v1493 = vpop.permute.xlu0 %1492
        %1494 = vrot.lane.b32.xlu0 %v1449, 8
        %v1495 = vpop.permute.xlu0 %1494
        %1496 = vrot.lane.b32.xlu0 %v1450, 8
        %v1497 = vpop.permute.xlu0 %1496
        %1498 = vrot.lane.b32.xlu0 %v1451, 8
        %v1499 = vpop.permute.xlu0 %1498
        %v1516 = vadd.f32 %v1356, %v1469
        %v1517 = vadd.f32 %v1357, %v1471
        %v1518 = vadd.f32 %v1358, %v1473
        %v1519 = vadd.f32 %v1359, %v1475
        %v1520 = vadd.f32 %v1360, %v1477
        %v1521 = vadd.f32 %v1361, %v1479
        %v1522 = vadd.f32 %v1362, %v1481
        %v1523 = vadd.f32 %v1363, %v1483
        %v1524 = vadd.f32 %v1364, %v1485
        %v1525 = vadd.f32 %v1365, %v1487
        %v1526 = vadd.f32 %v1366, %v1489
        %v1527 = vadd.f32 %v1367, %v1491
        %v1528 = vadd.f32 %v1368, %v1493
        %v1529 = vadd.f32 %v1369, %v1495
        %v1530 = vadd.f32 %v1370, %v1497
        %v1531 = vadd.f32 %v1371, %v1499
        %v1532 = vtanh.pop %v1516
        %v1533 = vtanh.pop %v1517
        %v1534 = vtanh.pop %v1518
        %v1535 = vtanh.pop %v1519
        %v1536 = vtanh.pop %v1520
        %v1537 = vtanh.pop %v1521
        %v1538 = vtanh.pop %v1522
        %v1539 = vtanh.pop %v1523
        %v1540 = vtanh.pop %v1524
        %v1541 = vtanh.pop %v1525
        %v1542 = vtanh.pop %v1526
        %v1543 = vtanh.pop %v1527
        %v1544 = vtanh.pop %v1528
        %v1545 = vtanh.pop %v1529
        %v1546 = vtanh.pop %v1530
        %v1547 = vtanh.pop %v1531
        %1564 = vrot.lane.b32.xlu0 %v1532, 8
        %v1565 = vpop.permute.xlu0 %1564
        %1566 = vrot.lane.b32.xlu0 %v1533, 8
        %v1567 = vpop.permute.xlu0 %1566
        %1568 = vrot.lane.b32.xlu0 %v1534, 8
        %v1569 = vpop.permute.xlu0 %1568
        %1570 = vrot.lane.b32.xlu0 %v1535, 8
        %v1571 = vpop.permute.xlu0 %1570
        %1572 = vrot.lane.b32.xlu0 %v1536, 8
        %v1573 = vpop.permute.xlu0 %1572
        %1574 = vrot.lane.b32.xlu0 %v1537, 8
        %v1575 = vpop.permute.xlu0 %1574
        %1576 = vrot.lane.b32.xlu0 %v1538, 8
        %v1577 = vpop.permute.xlu0 %1576
        %1578 = vrot.lane.b32.xlu0 %v1539, 8
        %v1579 = vpop.permute.xlu0 %1578
        %1580 = vrot.lane.b32.xlu0 %v1540, 8
        %v1581 = vpop.permute.xlu0 %1580
        %1582 = vrot.lane.b32.xlu0 %v1541, 8
        %v1583 = vpop.permute.xlu0 %1582
        %1584 = vrot.lane.b32.xlu0 %v1542, 8
        %v1585 = vpop.permute.xlu0 %1584
        %1586 = vrot.lane.b32.xlu0 %v1543, 8
        %v1587 = vpop.permute.xlu0 %1586
        %1588 = vrot.lane.b32.xlu0 %v1544, 8
        %v1589 = vpop.permute.xlu0 %1588
        %1590 = vrot.lane.b32.xlu0 %v1545, 8
        %v1591 = vpop.permute.xlu0 %1590
        %1592 = vrot.lane.b32.xlu0 %v1546, 8
        %v1593 = vpop.permute.xlu0 %1592
        %1594 = vrot.lane.b32.xlu0 %v1547, 8
        %v1595 = vpop.permute.xlu0 %1594
        %v1612 = vmul.f32 %v1229, %v1565
        %v1613 = vmul.f32 %v1231, %v1567
        %v1614 = vmul.f32 %v1233, %v1569
        %v1615 = vmul.f32 %v1235, %v1571
        %v1616 = vmul.f32 %v1237, %v1573
        %v1617 = vmul.f32 %v1239, %v1575
        %v1618 = vmul.f32 %v1241, %v1577
        %v1619 = vmul.f32 %v1243, %v1579
        %v1620 = vmul.f32 %v1245, %v1581
        %v1621 = vmul.f32 %v1247, %v1583
        %v1622 = vmul.f32 %v1249, %v1585
        %v1623 = vmul.f32 %v1251, %v1587
        %v1624 = vmul.f32 %v1253, %v1589
        %v1625 = vmul.f32 %v1255, %v1591
        %v1626 = vmul.f32 %v1257, %v1593
        %v1627 = vmul.f32 %v1259, %v1595
        %1644 = vrot.lane.b32.xlu0 %v1516, 120
        %v1645 = vpop.permute.xlu0 %1644
        %1646 = vrot.lane.b32.xlu0 %v1517, 120
        %v1647 = vpop.permute.xlu0 %1646
        %1648 = vrot.lane.b32.xlu0 %v1518, 120
        %v1649 = vpop.permute.xlu0 %1648
        %1650 = vrot.lane.b32.xlu0 %v1519, 120
        %v1651 = vpop.permute.xlu0 %1650
        %1652 = vrot.lane.b32.xlu0 %v1520, 120
        %v1653 = vpop.permute.xlu0 %1652
        %1654 = vrot.lane.b32.xlu0 %v1521, 120
        %v1655 = vpop.permute.xlu0 %1654
        %1656 = vrot.lane.b32.xlu0 %v1522, 120
        %v1657 = vpop.permute.xlu0 %1656
        %1658 = vrot.lane.b32.xlu0 %v1523, 120
        %v1659 = vpop.permute.xlu0 %1658
        %1660 = vrot.lane.b32.xlu0 %v1524, 120
        %v1661 = vpop.permute.xlu0 %1660
        %1662 = vrot.lane.b32.xlu0 %v1525, 120
        %v1663 = vpop.permute.xlu0 %1662
        %1664 = vrot.lane.b32.xlu0 %v1526, 120
        %v1665 = vpop.permute.xlu0 %1664
        %1666 = vrot.lane.b32.xlu0 %v1527, 120
        %v1667 = vpop.permute.xlu0 %1666
        %1668 = vrot.lane.b32.xlu0 %v1528, 120
        %v1669 = vpop.permute.xlu0 %1668
        %1670 = vrot.lane.b32.xlu0 %v1529, 120
        %v1671 = vpop.permute.xlu0 %1670
        %1672 = vrot.lane.b32.xlu0 %v1530, 120
        %v1673 = vpop.permute.xlu0 %1672
        %1674 = vrot.lane.b32.xlu0 %v1531, 120
        %v1675 = vpop.permute.xlu0 %1674
        %1692 = vst.msk [vmem:[#allocation3] sm:$0xff] %vm951, %v1645
        %1693 = vst.msk [vmem:[#allocation3 + $0x8] sm:$0xff] %vm951, %v1647
        %1694 = vst.msk [vmem:[#allocation3 + $0x10] sm:$0xff] %vm951, %v1649
        %1695 = vst.msk [vmem:[#allocation3 + $0x18] sm:$0xff] %vm951, %v1651
        %1696 = vst.msk [vmem:[#allocation3 + $0x20] sm:$0xff] %vm951, %v1653
        %1697 = vst.msk [vmem:[#allocation3 + $0x28] sm:$0xff] %vm951, %v1655
        %1698 = vst.msk [vmem:[#allocation3 + $0x30] sm:$0xff] %vm951, %v1657
        %1699 = vst.msk [vmem:[#allocation3 + $0x38] sm:$0xff] %vm951, %v1659
        %1700 = vst.msk [vmem:[#allocation3 + $0x40] sm:$0xff] %vm951, %v1661
        %1701 = vst.msk [vmem:[#allocation3 + $0x48] sm:$0xff] %vm951, %v1663
        %1702 = vst.msk [vmem:[#allocation3 + $0x50] sm:$0xff] %vm951, %v1665
        %1703 = vst.msk [vmem:[#allocation3 + $0x58] sm:$0xff] %vm951, %v1667
        %1704 = vst.msk [vmem:[#allocation3 + $0x60] sm:$0xff] %vm951, %v1669
        %1705 = vst.msk [vmem:[#allocation3 + $0x68] sm:$0xff] %vm951, %v1671
        %1706 = vst.msk [vmem:[#allocation3 + $0x70] sm:$0xff] %vm951, %v1673
        %1707 = vst.msk [vmem:[#allocation3 + $0x78] sm:$0xff] %vm951, %v1675
        %1724 = vrot.lane.b32.xlu0 %v1612, 112
        %v1725 = vpop.permute.xlu0 %1724
        %1726 = vrot.lane.b32.xlu0 %v1613, 112
        %v1727 = vpop.permute.xlu0 %1726
        %1728 = vrot.lane.b32.xlu0 %v1614, 112
        %v1729 = vpop.permute.xlu0 %1728
        %1730 = vrot.lane.b32.xlu0 %v1615, 112
        %v1731 = vpop.permute.xlu0 %1730
        %1732 = vrot.lane.b32.xlu0 %v1616, 112
        %v1733 = vpop.permute.xlu0 %1732
        %1734 = vrot.lane.b32.xlu0 %v1617, 112
        %v1735 = vpop.permute.xlu0 %1734
        %1736 = vrot.lane.b32.xlu0 %v1618, 112
        %v1737 = vpop.permute.xlu0 %1736
        %1738 = vrot.lane.b32.xlu0 %v1619, 112
        %v1739 = vpop.permute.xlu0 %1738
        %1740 = vrot.lane.b32.xlu0 %v1620, 112
        %v1741 = vpop.permute.xlu0 %1740
        %1742 = vrot.lane.b32.xlu0 %v1621, 112
        %v1743 = vpop.permute.xlu0 %1742
        %1744 = vrot.lane.b32.xlu0 %v1622, 112
        %v1745 = vpop.permute.xlu0 %1744
        %1746 = vrot.lane.b32.xlu0 %v1623, 112
        %v1747 = vpop.permute.xlu0 %1746
        %1748 = vrot.lane.b32.xlu0 %v1624, 112
        %v1749 = vpop.permute.xlu0 %1748
        %1750 = vrot.lane.b32.xlu0 %v1625, 112
        %v1751 = vpop.permute.xlu0 %1750
        %1752 = vrot.lane.b32.xlu0 %v1626, 112
        %v1753 = vpop.permute.xlu0 %1752
        %1754 = vrot.lane.b32.xlu0 %v1627, 112
        %v1755 = vpop.permute.xlu0 %1754
        %1772 = vst.msk [vmem:[#allocation2 + $0x1] sm:$0xff] %vm951, %v1725
        %1773 = vst.msk [vmem:[#allocation2 + $0x9] sm:$0xff] %vm951, %v1727
        %1774 = vst.msk [vmem:[#allocation2 + $0x19] sm:$0xff] %vm951, %v1729
        %1775 = vst.msk [vmem:[#allocation2 + $0x21] sm:$0xff] %vm951, %v1731
        %1776 = vst.msk [vmem:[#allocation2 + $0x31] sm:$0xff] %vm951, %v1733
        %1777 = vst.msk [vmem:[#allocation2 + $0x39] sm:$0xff] %vm951, %v1735
        %1778 = vst.msk [vmem:[#allocation2 + $0x49] sm:$0xff] %vm951, %v1737
        %1779 = vst.msk [vmem:[#allocation2 + $0x51] sm:$0xff] %vm951, %v1739
        %1780 = vst.msk [vmem:[#allocation2 + $0x61] sm:$0xff] %vm951, %v1741
        %1781 = vst.msk [vmem:[#allocation2 + $0x69] sm:$0xff] %vm951, %v1743
        %1782 = vst.msk [vmem:[#allocation2 + $0x79] sm:$0xff] %vm951, %v1745
        %1783 = vst.msk [vmem:[#allocation2 + $0x81] sm:$0xff] %vm951, %v1747
        %1784 = vst.msk [vmem:[#allocation2 + $0x91] sm:$0xff] %vm951, %v1749
        %1785 = vst.msk [vmem:[#allocation2 + $0x99] sm:$0xff] %vm951, %v1751
        %1786 = vst.msk [vmem:[#allocation2 + $0xa9] sm:$0xff] %vm951, %v1753
        %1787 = vst.msk [vmem:[#allocation2 + $0xb1] sm:$0xff] %vm951, %v1755
        %1788 = vst.msk [vmem:[%s244] sm:$0xff] %vm951, %v1725
        %1789 = vst.msk [vmem:[%s244 + $0x8] sm:$0xff] %vm951, %v1727
        %1790 = vst.msk [vmem:[%s244 + $0x10] sm:$0xff] %vm951, %v1729
        %1791 = vst.msk [vmem:[%s244 + $0x18] sm:$0xff] %vm951, %v1731
        %1792 = vst.msk [vmem:[%s244 + $0x20] sm:$0xff] %vm951, %v1733
        %1793 = vst.msk [vmem:[%s244 + $0x28] sm:$0xff] %vm951, %v1735
        %1794 = vst.msk [vmem:[%s244 + $0x30] sm:$0xff] %vm951, %v1737
        %1795 = vst.msk [vmem:[%s244 + $0x38] sm:$0xff] %vm951, %v1739
        %1796 = vst.msk [vmem:[%s244 + $0x40] sm:$0xff] %vm951, %v1741
        %1797 = vst.msk [vmem:[%s244 + $0x48] sm:$0xff] %vm951, %v1743
        %1798 = vst.msk [vmem:[%s244 + $0x50] sm:$0xff] %vm951, %v1745
        %1799 = vst.msk [vmem:[%s244 + $0x58] sm:$0xff] %vm951, %v1747
        %1800 = vst.msk [vmem:[%s244 + $0x60] sm:$0xff] %vm951, %v1749
        %1801 = vst.msk [vmem:[%s244 + $0x68] sm:$0xff] %vm951, %v1751
        %1802 = vst.msk [vmem:[%s244 + $0x70] sm:$0xff] %vm951, %v1753
        %1803 = vst.msk [vmem:[%s244 + $0x78] sm:$0xff] %vm951, %v1755
        %s1804 = smul.u32 8, %s21
        %p1805 = scmp.lt.s32.totalorder %s22, 7
        %s1806 = scalar_select %p1805, %s22, 7
        %p1807 = scmp.lt.s32.totalorder %s1804, 7
        %s1808 = scalar_select %p1807, %s1804, 7
        %s1809 = smul.addr %s1808, 2
        %s1810 = smul.addr %s1806, 16
        %s1811 = sadd.s32 %s1809, %s1810
        %s1812 = smul.addr %s1811, 8
        %s1813 = scalar_lea.vmem %s3, %s1812
        // Predicated region
        $region37: #{conv_lstm_forward.2} parent=31 // pred_check
          %p1814 = pneg %p119
        $region38: #{conv_lstm_forward.2} parent=31 // pred_check_branch
          %1816 = sbr.rel (%p1814) target = $region40
        $region39: #{conv_lstm_forward.2} parent=31 // pred_region
          %s1817 = smul.u32 8, %s21
        $region40: #{conv_lstm_forward.2} parent=31 // pred_fallthru
          _
        // Predicated region
        $region41: #{conv_lstm_forward.2} parent=31 // pred_check
          %p1818 = pneg %p145
        $region42: #{conv_lstm_forward.2} parent=31 // pred_check_branch
          %1820 = sbr.rel (%p1818) target = $region44
        $region43: #{conv_lstm_forward.2} parent=31 // pred_region
          %s1821 = smul.u32 8, %s21
          %s1823 = ssub.s32 2048, 2048
          %1824 = vsyncadd [#allocation4], %s1823
          %s1825 = smul.addr %s1821, 2
          %s1826 = smul.addr %s1825, 128
          %s1827 = scalar_lea.hbm %s4, %s1826
          %s1828 = sshll.u32 [#allocation3], 4
          %s1829 = int_to_ptr.vmem [resolvable:$true] %s1828
          %1834 = dma.vmem_to_hbm [thread:$0]  %s1829, 2048, %s1827, [#allocation4], 128, 128, 8
        $region44: #{conv_lstm_forward.2} parent=31 // pred_fallthru
          _
        // Predicated region
        $region45: #{conv_lstm_forward.2} parent=31 // pred_check
          %p1835 = pneg %p145
        $region46: #{conv_lstm_forward.2} parent=31 // pred_check_branch
          %1837 = sbr.rel (%p1835) target = $region48
        $region47: #{conv_lstm_forward.2} parent=31 // pred_region
          %1838 = dma.done [#allocation4], 2048
        $region48: #{conv_lstm_forward.2} parent=31 // pred_fallthru
          _
      $region32: #{conv_lstm_forward.2} parent=5 // pred_fallthru
        _
      %p1839 = scmp.le.s32.totalorder 2, %s12
      // Predicated region
      $region49: #{conv_lstm_forward.2} parent=5 // pred_check
        %p1840 = pneg %p1839
      $region50: #{conv_lstm_forward.2} parent=5 // pred_check_branch
        %1842 = sbr.rel (%p1840) target = $region52
      $region51: #{conv_lstm_forward.2} parent=5 // pred_region
        %s1843 = ssub.s32 %s12, 2
        // Predicated region
        $region53: #{conv_lstm_forward.2} parent=51 // pred_check
          %p1844 = pneg %p125
        $region54: #{conv_lstm_forward.2} parent=51 // pred_check_branch
          %1846 = sbr.rel (%p1844) target = $region56
        $region55: #{conv_lstm_forward.2} parent=51 // pred_region
          %s1847 = smul.u32 8, %s23
          %p1848 = scmp.lt.s32.totalorder %s24, 7
          %s1849 = scalar_select %p1848, %s24, 7
          %p1850 = scmp.lt.s32.totalorder %s1847, 7
          %s1851 = scalar_select %p1850, %s1847, 7
          %s1852 = smul.addr %s1851, 2
          %s1853 = smul.addr %s1849, 16
          %s1854 = sadd.s32 %s1852, %s1853
          %s1855 = smul.addr %s1854, 8
          %s1856 = scalar_lea.vmem %s3, %s1855
        $region56: #{conv_lstm_forward.2} parent=51 // pred_fallthru
          _
      $region52: #{conv_lstm_forward.2} parent=5 // pred_fallthru
        _
    $region6: #{conv_lstm_forward.2} parent=1 // loop_footer
      %s16 = sadd.s32 1, %s12
    $region7: #{conv_lstm_forward.2} parent=1 // loop_footer_branch
      %11 = sbr.rel target = $region3
    $region8: #{conv_lstm_forward.2} parent=1 // loop_exit
      _
    %1857 = vsyncpa [#allocation4], 1
    %s1858 = scalar_lea.sflag [#allocation4], 1
    %1859 = vsyncpa %s1858, 1

// kernel: conv_lstm_forward.3
$region0: #{conv_lstm_forward.3}
  #allocation0 [shape = 'u32[]', space=smem, size = 0x4, offset = 0x4, fixed_abs, tag = 'smem constant byte address 0x4 - core index']
  #allocation1 [shape = 'u32[144,128]{1,0:T(1,128)}', space=vmem, size = 0x12000, scoped, tag = 'internal scratch']
  #allocation2 [shape = 'f32[8,18,8]{2,1,0:T(8,128)}', space=vmem, size = 0x18000, scoped, tag = 'scratch operand']
  %s0 = inlined_call_operand.vmem [shape: bf16[8,8,18,8], index: 0, kind: input, shape index: {}]
  %s1 = inlined_call_operand.vmem [shape: bf16[48,32], index: 1, kind: input, shape index: {}]
  %s2 = inlined_call_operand.vmem [shape: f32[1,32], index: 2, kind: input, shape index: {}]
  %s3 = inlined_call_operand.vmem [shape: f32[8,8,16,8], index: 3, kind: output, shape index: {0}]
  %s4 = inlined_call_operand.vmem [shape: f32[8,16,8], index: 4, kind: output, shape index: {1}]
  %5 = xla_tuple %s3, %s4
  %s6 = sld [smem:[#allocation0]]
  $region57: #{conv_lstm_forward.3} parent=0
    _
  %s8 = ssub.s32 1, %s6
  %s9 = scalar_select 0, %s8, %s6
  loop: start=0, step=1, limit=10
  $region2: #{conv_lstm_forward.3} parent=0 // loop_pre_header
    _
  $region3: #{conv_lstm_forward.3} parent=0 // loop_header
    %s11 = sphi 0, %s15
    %p12 = scmp.ge.s32.totalorder %s11, 10
    %s18 = sphi 0, %s30
    %s19 = sphi 0, %s26
    %s20 = sphi 0, %s18
    %s21 = sphi 0, %s19
    %s22 = sphi 0, %s20
    %s23 = sphi 0, %s21
    %s35 = sphi 0, %s37
    %s38 = sphi 0, %s35
    %s39 = sphi 0, %s38
    %s55 = sphi 0, %s39
    %s59 = sphi 0, %s59
    %s61 = sphi 0, %s59
    %s62 = sphi 0, %s61
    %s76 = sphi 0, %s62
    %s80 = sphi 0, %s80
    %s82 = sphi 0, %s80
    %s83 = sphi 0, %s82
    %s97 = sphi 0, %s83
    %s105 = sphi 0, %s107
    %s108 = sphi 0, %s105
    %s109 = sphi 0, %s108
    %s125 = sphi 0, %s109
    %s131 = sphi 0, %s133
    %s134 = sphi 0, %s131
    %s135 = sphi 0, %s134
    %s151 = sphi 0, %s135
  $region4: #{conv_lstm_forward.3} parent=0 // loop_header_branch
    %14 = sbr.rel (%p12) target = $region8
  $region5: #{conv_lstm_forward.3} parent=0 // loop_body
    %s16 = ssub.s32 %s11, 1
    %s17 = ssub.s32 %s11, 2
    %s24 = sadd.s32 1, %s19
    %p25 = scmp.ge.s32.totalorder %s24, 8
    %s26 = scalar_select %p25, 0, %s24
    %s27 = sadd.s32 1, %s18
    %s28 = scalar_select %p25, %s27, %s18
    %p29 = scmp.ge.s32.totalorder %s28, 1
    %s30 = scalar_select %p29, 0, %s28
    %s31 = ssub.s32 %s19, %s26
    %s32 = ssub.s32 %s18, %s30
    %s33 = sor.u32 %s31, %s32
    %p34 = scmp.eq.s32.totalorder %s33, 0
    %s36 = sadd.s32 %s35, 1
    %s37 = scalar_select %p34, %s35, %s36
    %p40 = pneg %p34
    %p41 = scmp.eq.s32.totalorder %s11, 7
    %p42 = por %p40, %p41
    %p43 = scmp.ne.s32.totalorder %s35, %s38
    %p44 = scmp.eq.s32.totalorder %s11, 0
    %p45 = por %p43, %p44
    %p46 = scmp.ne.s32.totalorder %s35, %s38
    %p47 = scmp.eq.s32.totalorder %s16, 7
    %p48 = por %p46, %p47
    %p49 = scmp.ne.s32.totalorder %s38, %s39
    %p50 = scmp.eq.s32.totalorder %s16, 0
    %p51 = por %p49, %p50
    %p52 = scmp.ne.s32.totalorder %s38, %s39
    %p53 = scmp.eq.s32.totalorder %s17, 7
    %p54 = por %p52, %p53
    %p56 = scmp.ne.s32.totalorder %s39, %s55
    %p57 = scmp.eq.s32.totalorder %s17, 0
    %p58 = por %p56, %p57
    %s60 = sadd.s32 %s59, 1
    %p63 = scmp.eq.s32.totalorder %s11, 7
    %p64 = scmp.ne.s32.totalorder %s59, %s61
    %p65 = scmp.eq.s32.totalorder %s11, 0
    %p66 = por %p64, %p65
    %p67 = scmp.ne.s32.totalorder %s59, %s61
    %p68 = scmp.eq.s32.totalorder %s16, 7
    %p69 = por %p67, %p68
    %p70 = scmp.ne.s32.totalorder %s61, %s62
    %p71 = scmp.eq.s32.totalorder %s16, 0
    %p72 = por %p70, %p71
    %p73 = scmp.ne.s32.totalorder %s61, %s62
    %p74 = scmp.eq.s32.totalorder %s17, 7
    %p75 = por %p73, %p74
    %p77 = scmp.ne.s32.totalorder %s62, %s76
    %p78 = scmp.eq.s32.totalorder %s17, 0
    %p79 = por %p77, %p78
    %s81 = sadd.s32 %s80, 1
    %p84 = scmp.eq.s32.totalorder %s11, 7
    %p85 = scmp.ne.s32.totalorder %s80, %s82
    %p86 = scmp.eq.s32.totalorder %s11, 0
    %p87 = por %p85, %p86
    %p88 = scmp.ne.s32.totalorder %s80, %s82
    %p89 = scmp.eq.s32.totalorder %s16, 7
    %p90 = por %p88, %p89
    %p91 = scmp.ne.s32.totalorder %s82, %s83
    %p92 = scmp.eq.s32.totalorder %s16, 0
    %p93 = por %p91, %p92
    %p94 = scmp.ne.s32.totalorder %s82, %s83
    %p95 = scmp.eq.s32.totalorder %s17, 7
    %p96 = por %p94, %p95
    %p98 = scmp.ne.s32.totalorder %s83, %s97
    %p99 = scmp.eq.s32.totalorder %s17, 0
    %p100 = por %p98, %p99
    %s101 = ssub.s32 %s19, %s26
    %s102 = ssub.s32 %s18, %s30
    %s103 = sor.u32 %s101, %s102
    %p104 = scmp.eq.s32.totalorder %s103, 0
    %s106 = sadd.s32 %s105, 1
    %s107 = scalar_select %p104, %s105, %s106
    %p110 = pneg %p104
    %p111 = scmp.eq.s32.totalorder %s11, 7
    %p112 = por %p110, %p111
    %p113 = scmp.ne.s32.totalorder %s105, %s108
    %p114 = scmp.eq.s32.totalorder %s11, 0
    %p115 = por %p113, %p114
    %p116 = scmp.ne.s32.totalorder %s105, %s108
    %p117 = scmp.eq.s32.totalorder %s16, 7
    %p118 = por %p116, %p117
    %p119 = scmp.ne.s32.totalorder %s108, %s109
    %p120 = scmp.eq.s32.totalorder %s16, 0
    %p121 = por %p119, %p120
    %p122 = scmp.ne.s32.totalorder %s108, %s109
    %p123 = scmp.eq.s32.totalorder %s17, 7
    %p124 = por %p122, %p123
    %p126 = scmp.ne.s32.totalorder %s109, %s125
    %p127 = scmp.eq.s32.totalorder %s17, 0
    %p128 = por %p126, %p127
    %s129 = ssub.s32 %s18, %s30
    %p130 = scmp.eq.s32.totalorder %s129, 0
    %s132 = sadd.s32 %s131, 1
    %s133 = scalar_select %p130, %s131, %s132
    %p136 = pneg %p130
    %p137 = scmp.eq.s32.totalorder %s11, 7
    %p138 = por %p136, %p137
    %p139 = scmp.ne.s32.totalorder %s131, %s134
    %p140 = scmp.eq.s32.totalorder %s11, 0
    %p141 = por %p139, %p140
    %p142 = scmp.ne.s32.totalorder %s131, %s134
    %p143 = scmp.eq.s32.totalorder %s16, 7
    %p144 = por %p142, %p143
    %p145 = scmp.ne.s32.totalorder %s134, %s135
    %p146 = scmp.eq.s32.totalorder %s16, 0
    %p147 = por %p145, %p146
    %p148 = scmp.ne.s32.totalorder %s134, %s135
    %p149 = scmp.eq.s32.totalorder %s17, 7
    %p150 = por %p148, %p149
    %p152 = scmp.ne.s32.totalorder %s135, %s151
    %p153 = scmp.eq.s32.totalorder %s17, 0
    %p154 = por %p152, %p153
    %p155 = scmp.le.s32.totalorder 1, %s11
    %p156 = scmp.lt.s32.totalorder %s11, 9
    %p157 = pnand %p155, %p156
    %p158 = pneg %p157
    // Predicated region
    $region9: #{conv_lstm_forward.3} parent=5 // pred_check
      _
    $region10: #{conv_lstm_forward.3} parent=5 // pred_check_branch
      %160 = sbr.rel (%p157) target = $region12
    $region11: #{conv_lstm_forward.3} parent=5 // pred_region
      %s161 = ssub.s32 %s11, 1
      // Predicated region
      $region13: #{conv_lstm_forward.3} parent=11 // pred_check
        %p162 = pneg %p72
      $region14: #{conv_lstm_forward.3} parent=11 // pred_check_branch
        %164 = sbr.rel (%p162) target = $region16
      $region15: #{conv_lstm_forward.3} parent=11 // pred_region
        _
      $region16: #{conv_lstm_forward.3} parent=11 // pred_fallthru
        _
      // Predicated region
      $region17: #{conv_lstm_forward.3} parent=11 // pred_check
        %p165 = pneg %p93
      $region18: #{conv_lstm_forward.3} parent=11 // pred_check_branch
        %167 = sbr.rel (%p165) target = $region20
      $region19: #{conv_lstm_forward.3} parent=11 // pred_region
        _
      $region20: #{conv_lstm_forward.3} parent=11 // pred_fallthru
        _
    $region12: #{conv_lstm_forward.3} parent=5 // pred_fallthru
      _
    %p168 = scmp.lt.s32.totalorder %s11, 8
    // Predicated region
    $region21: #{conv_lstm_forward.3} parent=5 // pred_check
      %p169 = pneg %p168
    $region22: #{conv_lstm_forward.3} parent=5 // pred_check_branch
      %171 = sbr.rel (%p169) target = $region24
    $region23: #{conv_lstm_forward.3} parent=5 // pred_region
      // Predicated region
      $region25: #{conv_lstm_forward.3} parent=23 // pred_check
        %p172 = pneg %p45
      $region26: #{conv_lstm_forward.3} parent=23 // pred_check_branch
        %174 = sbr.rel (%p172) target = $region28
      $region27: #{conv_lstm_forward.3} parent=23 // pred_region
        %s175 = smul.u32 8, %s18
        %p176 = scmp.lt.s32.totalorder %s19, 7
        %s177 = scalar_select %p176, %s19, 7
        %p178 = scmp.lt.s32.totalorder %s175, 7
        %s179 = scalar_select %p178, %s175, 7
        %s180 = smul.addr %s179, 3
        %s181 = smul.addr %s177, 24
        %s182 = sadd.s32 %s180, %s181
        %s183 = smul.addr %s182, 4
        %s184 = scalar_lea.vmem %s0, %s183
        %s185 = smul.u32 8, %s18
      $region28: #{conv_lstm_forward.3} parent=23 // pred_fallthru
        _
    $region24: #{conv_lstm_forward.3} parent=5 // pred_fallthru
      _
    %p186 = scmp.le.s32.totalorder 1, %s11
    %p187 = scmp.lt.s32.totalorder %s11, 9
    %p188 = pnand %p186, %p187
    %p189 = pneg %p188
    // Predicated region
    $region29: #{conv_lstm_forward.3} parent=5 // pred_check
      _
    $region30: #{conv_lstm_forward.3} parent=5 // pred_check_branch
      %191 = sbr.rel (%p188) target = $region32
    $region31: #{conv_lstm_forward.3} parent=5 // pred_region
      %s192 = ssub.s32 %s11, 1
      %s193 = smul.u32 8, %s20
      %p194 = scmp.lt.s32.totalorder %s21, 7
      %s195 = scalar_select %p194, %s21, 7
      %p196 = scmp.lt.s32.totalorder %s193, 7
      %s197 = scalar_select %p196, %s193, 7
      %s198 = smul.addr %s197, 3
      %s199 = smul.addr %s195, 24
      %s200 = sadd.s32 %s198, %s199
      %s201 = smul.addr %s200, 4
      %s202 = scalar_lea.vmem %s0, %s201
      %p203 = pneg %p51
      %p204 = pneg %p48
      %p205 = pneg %p72
      %p206 = pneg %p69
      %p207 = pneg %p93
      %p208 = pneg %p90
      %p209 = pneg %p121
      %p210 = pneg %p118
      %s211 = smul.u32 8, %s20
      %p212 = scmp.lt.s32.totalorder %s21, 7
      %s213 = scalar_select %p212, %s21, 7
      %p214 = scmp.lt.s32.totalorder %s211, 7
      %s215 = scalar_select %p214, %s211, 7
      %s216 = smul.addr %s215, 2
      %s217 = smul.addr %s213, 16
      %s218 = sadd.s32 %s216, %s217
      %s219 = smul.addr %s218, 8
      %s220 = scalar_lea.vmem %s3, %s219
      %p221 = pneg %p147
      %p222 = pneg %p144
      %s223 = smul.u32 8, %s20
      %p224 = scmp.lt.s32.totalorder %s223, 7
      %s225 = scalar_select %p224, %s223, 7
      %s226 = smul.addr %s225, 2
      %s227 = smul.addr %s226, 8
      %s228 = scalar_lea.vmem %s4, %s227
      %s229 = smul.u32 8, %s20
      %p230 = scmp.lt.s32.totalorder %s21, 7
      %s231 = scalar_select %p230, %s21, 7
      %p232 = scmp.lt.s32.totalorder %s229, 7
      %s233 = scalar_select %p232, %s229, 7
      %s234 = smul.addr %s233, 3
      %s235 = smul.addr %s231, 24
      %s236 = sadd.s32 %s234, %s235
      %s237 = smul.addr %s236, 4
      %s238 = scalar_lea.vmem %s0, %s237
      %s239 = smul.u32 8, %s20
      %s240 = smul.u32 8, %s20
      %p241 = scmp.lt.s32.totalorder %s21, 7
      %s242 = scalar_select %p241, %s21, 7
      %p243 = scmp.lt.s32.totalorder %s240, 7
      %s244 = scalar_select %p243, %s240, 7
      %s245 = smul.addr %s244, 2
      %s246 = smul.addr %s242, 16
      %s247 = sadd.s32 %s245, %s246
      %s248 = smul.addr %s247, 8
      %s249 = scalar_lea.vmem %s3, %s248
      %s250 = smul.u32 8, %s20
      %s251 = smul.u32 8, %s20
      %p252 = scmp.lt.s32.totalorder %s251, 7
      %s253 = scalar_select %p252, %s251, 7
      %s254 = smul.addr %s253, 2
      %s255 = smul.addr %s254, 8
      %s256 = scalar_lea.vmem %s4, %s255
      %s257 = smul.u32 8, %s20
      %p259 = scmp.eq.s32.totalorder %s21, 0
      // Predicated region
      $region33: #{conv_lstm_forward.3} parent=31 // pred_check
        %p260 = pneg %p259
      $region34: #{conv_lstm_forward.3} parent=31 // pred_check_branch
        %262 = sbr.rel (%p260) target = $region36
      $region35: #{conv_lstm_forward.3} parent=31 // pred_region
        %vm263 = vcmask 64512
        %264 = vst.msk [vmem:[#allocation2] sm:$0xff] %vm263, 0.0
        %265 = vst.msk [vmem:[#allocation2 + $0x8] sm:$0xff] %vm263, 0.0
        %vm266 = vcmask 58368
        %267 = vst.msk [vmem:[#allocation2 + $0x10] sm:$0x3] %vm266, 0.0
        %268 = vst.msk [vmem:[#allocation2 + $0x18] sm:$0xff] %vm263, 0.0
        %269 = vst.msk [vmem:[#allocation2 + $0x20] sm:$0xff] %vm263, 0.0
        %270 = vst.msk [vmem:[#allocation2 + $0x28] sm:$0x3] %vm266, 0.0
        %271 = vst.msk [vmem:[#allocation2 + $0x30] sm:$0xff] %vm263, 0.0
        %272 = vst.msk [vmem:[#allocation2 + $0x38] sm:$0xff] %vm263, 0.0
        %273 = vst.msk [vmem:[#allocation2 + $0x40] sm:$0x3] %vm266, 0.0
        %274 = vst.msk [vmem:[#allocation2 + $0x48] sm:$0xff] %vm263, 0.0
        %275 = vst.msk [vmem:[#allocation2 + $0x50] sm:$0xff] %vm263, 0.0
        %276 = vst.msk [vmem:[#allocation2 + $0x58] sm:$0x3] %vm266, 0.0
        %277 = vst.msk [vmem:[#allocation2 + $0x60] sm:$0xff] %vm263, 0.0
        %278 = vst.msk [vmem:[#allocation2 + $0x68] sm:$0xff] %vm263, 0.0
        %279 = vst.msk [vmem:[#allocation2 + $0x70] sm:$0x3] %vm266, 0.0
        %280 = vst.msk [vmem:[#allocation2 + $0x78] sm:$0xff] %vm263, 0.0
        %281 = vst.msk [vmem:[#allocation2 + $0x80] sm:$0xff] %vm263, 0.0
        %282 = vst.msk [vmem:[#allocation2 + $0x88] sm:$0x3] %vm266, 0.0
        %283 = vst.msk [vmem:[#allocation2 + $0x90] sm:$0xff] %vm263, 0.0
        %284 = vst.msk [vmem:[#allocation2 + $0x98] sm:$0xff] %vm263, 0.0
        %285 = vst.msk [vmem:[#allocation2 + $0xa0] sm:$0x3] %vm266, 0.0
        %286 = vst.msk [vmem:[#allocation2 + $0xa8] sm:$0xff] %vm263, 0.0
        %287 = vst.msk [vmem:[#allocation2 + $0xb0] sm:$0xff] %vm263, 0.0
        %288 = vst.msk [vmem:[#allocation2 + $0xb8] sm:$0x3] %vm266, 0.0
        %289 = vst.msk [vmem:[%s256] sm:$0xff] %vm263, 0.0
        %290 = vst.msk [vmem:[%s256 + $0x8] sm:$0xff] %vm263, 0.0
        %291 = vst.msk [vmem:[%s256 + $0x10] sm:$0xff] %vm263, 0.0
        %292 = vst.msk [vmem:[%s256 + $0x18] sm:$0xff] %vm263, 0.0
        %293 = vst.msk [vmem:[%s256 + $0x20] sm:$0xff] %vm263, 0.0
        %294 = vst.msk [vmem:[%s256 + $0x28] sm:$0xff] %vm263, 0.0
        %295 = vst.msk [vmem:[%s256 + $0x30] sm:$0xff] %vm263, 0.0
        %296 = vst.msk [vmem:[%s256 + $0x38] sm:$0xff] %vm263, 0.0
        %297 = vst.msk [vmem:[%s256 + $0x40] sm:$0xff] %vm263, 0.0
        %298 = vst.msk [vmem:[%s256 + $0x48] sm:$0xff] %vm263, 0.0
        %299 = vst.msk [vmem:[%s256 + $0x50] sm:$0xff] %vm263, 0.0
        %300 = vst.msk [vmem:[%s256 + $0x58] sm:$0xff] %vm263, 0.0
        %301 = vst.msk [vmem:[%s256 + $0x60] sm:$0xff] %vm263, 0.0
        %302 = vst.msk [vmem:[%s256 + $0x68] sm:$0xff] %vm263, 0.0
        %303 = vst.msk [vmem:[%s256 + $0x70] sm:$0xff] %vm263, 0.0
        %304 = vst.msk [vmem:[%s256 + $0x78] sm:$0xff] %vm263, 0.0
      $region36: #{conv_lstm_forward.3} parent=31 // pred_fallthru
        _
      %v305 = vld [vmem:[%s238] sm:$0xf]
      %v306 = vld [vmem:[%s238 + $0x4] sm:$0xf]
      %v307 = vld [vmem:[%s238 + $0x8] sm:$0x1]
      %v308 = vld [vmem:[%s238 + $0xc] sm:$0xf]
      %v309 = vld [vmem:[%s238 + $0x10] sm:$0xf]
      %v310 = vld [vmem:[%s238 + $0x14] sm:$0x1]
      %v311 = vld [vmem:[%s238 + $0x18] sm:$0xf]
      %v312 = vld [vmem:[%s238 + $0x1c] sm:$0xf]
      %v313 = vld [vmem:[%s238 + $0x20] sm:$0x1]
      %v314 = vld [vmem:[%s238 + $0x24] sm:$0xf]
      %v315 = vld [vmem:[%s238 + $0x28] sm:$0xf]
      %v316 = vld [vmem:[%s238 + $0x2c] sm:$0x1]
      %v317 = vld [vmem:[%s238 + $0x30] sm:$0xf]
      %v318 = vld [vmem:[%s238 + $0x34] sm:$0xf]
      %v319 = vld [vmem:[%s238 + $0x38] sm:$0x1]
      %v320 = vld [vmem:[%s238 + $0x3c] sm:$0xf]
      %v321 = vld [vmem:[%s238 + $0x40] sm:$0xf]
      %v322 = vld [vmem:[%s238 + $0x44] sm:$0x1]
      %v323 = vld [vmem:[%s238 + $0x48] sm:$0xf]
      %v324 = vld [vmem:[%s238 + $0x4c] sm:$0xf]
      %v325 = vld [vmem:[%s238 + $0x50] sm:$0x1]
      %v326 = vld [vmem:[%s238 + $0x54] sm:$0xf]
      %v327 = vld [vmem:[%s238 + $0x58] sm:$0xf]
      %v328 = vld [vmem:[%s238 + $0x5c] sm:$0x1]
      %v329 = vld [vmem:[#allocation2] sm:$0xff]
      %v330 = vld [vmem:[#allocation2 + $0x8] sm:$0xff]
      %v331 = vld [vmem:[#allocation2 + $0x10] sm:$0x3]
      %v332 = vld [vmem:[#allocation2 + $0x18] sm:$0xff]
      %v333 = vld [vmem:[#allocation2 + $0x20] sm:$0xff]
      %v334 = vld [vmem:[#allocation2 + $0x28] sm:$0x3]
      %v335 = vld [vmem:[#allocation2 + $0x30] sm:$0xff]
      %v336 = vld [vmem:[#allocation2 + $0x38] sm:$0xff]
      %v337 = vld [vmem:[#allocation2 + $0x40] sm:$0x3]
      %v338 = vld [vmem:[#allocation2 + $0x48] sm:$0xff]
      %v339 = vld [vmem:[#allocation2 + $0x50] sm:$0xff]
      %v340 = vld [vmem:[#allocation2 + $0x58] sm:$0x3]
      %v341 = vld [vmem:[#allocation2 + $0x60] sm:$0xff]
      %v342 = vld [vmem:[#allocation2 + $0x68] sm:$0xff]
      %v343 = vld [vmem:[#allocation2 + $0x70] sm:$0x3]
      %v344 = vld [vmem:[#allocation2 + $0x78] sm:$0xff]
      %v345 = vld [vmem:[#allocation2 + $0x80] sm:$0xff]
      %v346 = vld [vmem:[#allocation2 + $0x88] sm:$0x3]
      %v347 = vld [vmem:[#allocation2 + $0x90] sm:$0xff]
      %v348 = vld [vmem:[#allocation2 + $0x98] sm:$0xff]
      %v349 = vld [vmem:[#allocation2 + $0xa0] sm:$0x3]
      %v350 = vld [vmem:[#allocation2 + $0xa8] sm:$0xff]
      %v351 = vld [vmem:[#allocation2 + $0xb0] sm:$0xff]
      %v352 = vld [vmem:[#allocation2 + $0xb8] sm:$0x3]
      %v353 = vpack.c.bf16 %v330, %v329
      %v354 = vpack.c.bf16 %v331, %v331
      %v355 = vpack.c.bf16 %v333, %v332
      %v356 = vpack.c.bf16 %v334, %v334
      %v357 = vpack.c.bf16 %v336, %v335
      %v358 = vpack.c.bf16 %v337, %v337
      %v359 = vpack.c.bf16 %v339, %v338
      %v360 = vpack.c.bf16 %v340, %v340
      %v361 = vpack.c.bf16 %v342, %v341
      %v362 = vpack.c.bf16 %v343, %v343
      %v363 = vpack.c.bf16 %v345, %v344
      %v364 = vpack.c.bf16 %v346, %v346
      %v365 = vpack.c.bf16 %v348, %v347
      %v366 = vpack.c.bf16 %v349, %v349
      %v367 = vpack.c.bf16 %v351, %v350
      %v368 = vpack.c.bf16 %v352, %v352
      %vm369 = vsmask.f32 3328
      %vm370 = vsmask.f32 7440
      %vm371 = vmor %vm369, %vm370
      %v373 = vshrl.u32 %v305, 16
      %v375 = vrot.slane %v373, 4
      %v376 = vshll.u32 %v305, 16
      %v378 = vrot.slane %v376, 5
      %v379 = vor.u32 %v375, %v378
      %v380 = vrot.slane %v379, 4
      %v382 = vshll.u32 %v306, 16
      %v384 = vrot.slane %v382, 5
      %v385 = vsel %vm371, %v380, %v384
      %v386 = vshrl.u32 %v306, 16
      %v388 = vrot.slane %v386, 4
      %v389 = vor.u32 %v388, %v384
      %v390 = vrot.slane %v389, 4
      %v392 = vshll.u32 %v307, 16
      %v394 = vrot.slane %v392, 5
      %v395 = vsel %vm371, %v390, %v394
      %v397 = vshrl.u32 %v308, 16
      %v399 = vrot.slane %v397, 4
      %v400 = vshll.u32 %v308, 16
      %v402 = vrot.slane %v400, 5
      %v403 = vor.u32 %v399, %v402
      %v404 = vrot.slane %v403, 4
      %v406 = vshll.u32 %v309, 16
      %v408 = vrot.slane %v406, 5
      %v409 = vsel %vm371, %v404, %v408
      %v410 = vshrl.u32 %v309, 16
      %v412 = vrot.slane %v410, 4
      %v413 = vor.u32 %v412, %v408
      %v414 = vrot.slane %v413, 4
      %v416 = vshll.u32 %v310, 16
      %v418 = vrot.slane %v416, 5
      %v419 = vsel %vm371, %v414, %v418
      %v421 = vshrl.u32 %v311, 16
      %v423 = vrot.slane %v421, 4
      %v424 = vshll.u32 %v311, 16
      %v426 = vrot.slane %v424, 5
      %v427 = vor.u32 %v423, %v426
      %v428 = vrot.slane %v427, 4
      %v430 = vshll.u32 %v312, 16
      %v432 = vrot.slane %v430, 5
      %v433 = vsel %vm371, %v428, %v432
      %v434 = vshrl.u32 %v312, 16
      %v436 = vrot.slane %v434, 4
      %v437 = vor.u32 %v436, %v432
      %v438 = vrot.slane %v437, 4
      %v440 = vshll.u32 %v313, 16
      %v442 = vrot.slane %v440, 5
      %v443 = vsel %vm371, %v438, %v442
      %v445 = vshrl.u32 %v314, 16
      %v447 = vrot.slane %v445, 4
      %v448 = vshll.u32 %v314, 16
      %v450 = vrot.slane %v448, 5
      %v451 = vor.u32 %v447, %v450
      %v452 = vrot.slane %v451, 4
      %v454 = vshll.u32 %v315, 16
      %v456 = vrot.slane %v454, 5
      %v457 = vsel %vm371, %v452, %v456
      %v458 = vshrl.u32 %v315, 16
      %v460 = vrot.slane %v458, 4
      %v461 = vor.u32 %v460, %v456
      %v462 = vrot.slane %v461, 4
      %v464 = vshll.u32 %v316, 16
      %v466 = vrot.slane %v464, 5
      %v467 = vsel %vm371, %v462, %v466
      %v469 = vshrl.u32 %v317, 16
      %v471 = vrot.slane %v469, 4
      %v472 = vshll.u32 %v317, 16
      %v474 = vrot.slane %v472, 5
      %v475 = vor.u32 %v471, %v474
      %v476 = vrot.slane %v475, 4
      %v478 = vshll.u32 %v318, 16
      %v480 = vrot.slane %v478, 5
      %v481 = vsel %vm371, %v476, %v480
      %v482 = vshrl.u32 %v318, 16
      %v484 = vrot.slane %v482, 4
      %v485 = vor.u32 %v484, %v480
      %v486 = vrot.slane %v485, 4
      %v488 = vshll.u32 %v319, 16
      %v490 = vrot.slane %v488, 5
      %v491 = vsel %vm371, %v486, %v490
      %v493 = vshrl.u32 %v320, 16
      %v495 = vrot.slane %v493, 4
      %v496 = vshll.u32 %v320, 16
      %v498 = vrot.slane %v496, 5
      %v499 = vor.u32 %v495, %v498
      %v500 = vrot.slane %v499, 4
      %v502 = vshll.u32 %v321, 16
      %v504 = vrot.slane %v502, 5
      %v505 = vsel %vm371, %v500, %v504
      %v506 = vshrl.u32 %v321, 16
      %v508 = vrot.slane %v506, 4
      %v509 = vor.u32 %v508, %v504
      %v510 = vrot.slane %v509, 4
      %v512 = vshll.u32 %v322, 16
      %v514 = vrot.slane %v512, 5
      %v515 = vsel %vm371, %v510, %v514
      %v517 = vshrl.u32 %v323, 16
      %v519 = vrot.slane %v517, 4
      %v520 = vshll.u32 %v323, 16
      %v522 = vrot.slane %v520, 5
      %v523 = vor.u32 %v519, %v522
      %v524 = vrot.slane %v523, 4
      %v526 = vshll.u32 %v324, 16
      %v528 = vrot.slane %v526, 5
      %v529 = vsel %vm371, %v524, %v528
      %v530 = vshrl.u32 %v324, 16
      %v532 = vrot.slane %v530, 4
      %v533 = vor.u32 %v532, %v528
      %v534 = vrot.slane %v533, 4
      %v536 = vshll.u32 %v325, 16
      %v538 = vrot.slane %v536, 5
      %v539 = vsel %vm371, %v534, %v538
      %v541 = vshrl.u32 %v326, 16
      %v543 = vrot.slane %v541, 4
      %v544 = vshll.u32 %v326, 16
      %v546 = vrot.slane %v544, 5
      %v547 = vor.u32 %v543, %v546
      %v548 = vrot.slane %v547, 4
      %v550 = vshll.u32 %v327, 16
      %v552 = vrot.slane %v550, 5
      %v553 = vsel %vm371, %v548, %v552
      %v554 = vshrl.u32 %v327, 16
      %v556 = vrot.slane %v554, 4
      %v557 = vor.u32 %v556, %v552
      %v558 = vrot.slane %v557, 4
      %v560 = vshll.u32 %v328, 16
      %v562 = vrot.slane %v560, 5
      %v563 = vsel %vm371, %v558, %v562
      %vm588 = vcmask 1042432
      %vm589 = vcmask 1046532
      %vm590 = vmor %vm588, %vm589
      %v591 = vrot.slane %v305, 5
      %v592 = vrot.slane %v591, 4
      %v593 = vrot.slane %v306, 5
      %v594 = vsel %vm590, %v592, %v593
      %v595 = vrot.slane %v593, 4
      %v596 = vrot.slane %v307, 5
      %v597 = vsel %vm590, %v595, %v596
      %v598 = vrot.slane %v308, 5
      %v599 = vrot.slane %v598, 4
      %v600 = vrot.slane %v309, 5
      %v601 = vsel %vm590, %v599, %v600
      %v602 = vrot.slane %v600, 4
      %v603 = vrot.slane %v310, 5
      %v604 = vsel %vm590, %v602, %v603
      %v605 = vrot.slane %v311, 5
      %v606 = vrot.slane %v605, 4
      %v607 = vrot.slane %v312, 5
      %v608 = vsel %vm590, %v606, %v607
      %v609 = vrot.slane %v607, 4
      %v610 = vrot.slane %v313, 5
      %v611 = vsel %vm590, %v609, %v610
      %v612 = vrot.slane %v314, 5
      %v613 = vrot.slane %v612, 4
      %v614 = vrot.slane %v315, 5
      %v615 = vsel %vm590, %v613, %v614
      %v616 = vrot.slane %v614, 4
      %v617 = vrot.slane %v316, 5
      %v618 = vsel %vm590, %v616, %v617
      %v619 = vrot.slane %v317, 5
      %v620 = vrot.slane %v619, 4
      %v621 = vrot.slane %v318, 5
      %v622 = vsel %vm590, %v620, %v621
      %v623 = vrot.slane %v621, 4
      %v624 = vrot.slane %v319, 5
      %v625 = vsel %vm590, %v623, %v624
      %v626 = vrot.slane %v320, 5
      %v627 = vrot.slane %v626, 4
      %v628 = vrot.slane %v321, 5
      %v629 = vsel %vm590, %v627, %v628
      %v630 = vrot.slane %v628, 4
      %v631 = vrot.slane %v322, 5
      %v632 = vsel %vm590, %v630, %v631
      %v633 = vrot.slane %v323, 5
      %v634 = vrot.slane %v633, 4
      %v635 = vrot.slane %v324, 5
      %v636 = vsel %vm590, %v634, %v635
      %v637 = vrot.slane %v635, 4
      %v638 = vrot.slane %v325, 5
      %v639 = vsel %vm590, %v637, %v638
      %v640 = vrot.slane %v326, 5
      %v641 = vrot.slane %v640, 4
      %v642 = vrot.slane %v327, 5
      %v643 = vsel %vm590, %v641, %v642
      %v644 = vrot.slane %v642, 4
      %v645 = vrot.slane %v328, 5
      %v646 = vsel %vm590, %v644, %v645
      %vm647 = vsmask.f32 7424
      %v649 = vshrl.u32 %v353, 16
      %v651 = vshll.u32 %v353, 16
      %v653 = vrot.slane %v651, 1
      %v654 = vor.u32 %v649, %v653
      %v656 = vshll.u32 %v354, 16
      %v658 = vrot.slane %v656, 1
      %v659 = vsel %vm647, %v654, %v658
      %v661 = vshrl.u32 %v355, 16
      %v663 = vshll.u32 %v355, 16
      %v665 = vrot.slane %v663, 1
      %v666 = vor.u32 %v661, %v665
      %v668 = vshll.u32 %v356, 16
      %v670 = vrot.slane %v668, 1
      %v671 = vsel %vm647, %v666, %v670
      %v673 = vshrl.u32 %v357, 16
      %v675 = vshll.u32 %v357, 16
      %v677 = vrot.slane %v675, 1
      %v678 = vor.u32 %v673, %v677
      %v680 = vshll.u32 %v358, 16
      %v682 = vrot.slane %v680, 1
      %v683 = vsel %vm647, %v678, %v682
      %v685 = vshrl.u32 %v359, 16
      %v687 = vshll.u32 %v359, 16
      %v689 = vrot.slane %v687, 1
      %v690 = vor.u32 %v685, %v689
      %v692 = vshll.u32 %v360, 16
      %v694 = vrot.slane %v692, 1
      %v695 = vsel %vm647, %v690, %v694
      %v697 = vshrl.u32 %v361, 16
      %v699 = vshll.u32 %v361, 16
      %v701 = vrot.slane %v699, 1
      %v702 = vor.u32 %v697, %v701
      %v704 = vshll.u32 %v362, 16
      %v706 = vrot.slane %v704, 1
      %v707 = vsel %vm647, %v702, %v706
      %v709 = vshrl.u32 %v363, 16
      %v711 = vshll.u32 %v363, 16
      %v713 = vrot.slane %v711, 1
      %v714 = vor.u32 %v709, %v713
      %v716 = vshll.u32 %v364, 16
      %v718 = vrot.slane %v716, 1
      %v719 = vsel %vm647, %v714, %v718
      %v721 = vshrl.u32 %v365, 16
      %v723 = vshll.u32 %v365, 16
      %v725 = vrot.slane %v723, 1
      %v726 = vor.u32 %v721, %v725
      %v728 = vshll.u32 %v366, 16
      %v730 = vrot.slane %v728, 1
      %v731 = vsel %vm647, %v726, %v730
      %v733 = vshrl.u32 %v367, 16
      %v735 = vshll.u32 %v367, 16
      %v737 = vrot.slane %v735, 1
      %v738 = vor.u32 %v733, %v737
      %v740 = vshll.u32 %v368, 16
      %v742 = vrot.slane %v740, 1
      %v743 = vsel %vm647, %v738, %v742
      %vm760 = vcmask 1046528
      %v761 = vrot.slane %v353, 1
      %v762 = vrot.slane %v354, 1
      %v763 = vsel %vm760, %v761, %v762
      %v764 = vrot.slane %v355, 1
      %v765 = vrot.slane %v356, 1
      %v766 = vsel %vm760, %v764, %v765
      %v767 = vrot.slane %v357, 1
      %v768 = vrot.slane %v358, 1
      %v769 = vsel %vm760, %v767, %v768
      %v770 = vrot.slane %v359, 1
      %v771 = vrot.slane %v360, 1
      %v772 = vsel %vm760, %v770, %v771
      %v773 = vrot.slane %v361, 1
      %v774 = vrot.slane %v362, 1
      %v775 = vsel %vm760, %v773, %v774
      %v776 = vrot.slane %v363, 1
      %v777 = vrot.slane %v364, 1
      %v778 = vsel %vm760, %v776, %v777
      %v779 = vrot.slane %v365, 1
      %v780 = vrot.slane %v366, 1
      %v781 = vsel %vm760, %v779, %v780
      %v782 = vrot.slane %v367, 1
      %v783 = vrot.slane %v368, 1
      %v784 = vsel %vm760, %v782, %v783
      %v785 = vunpack.c.l.b16 %v305
      %v786 = vunpack.c.l.b16 %v306
      %v787 = vunpack.c.l.b16 %v308
      %v788 = vunpack.c.l.b16 %v309
      %v789 = vunpack.c.l.b16 %v311
      %v790 = vunpack.c.l.b16 %v312
      %v791 = vunpack.c.l.b16 %v314
      %v792 = vunpack.c.l.b16 %v315
      %v793 = vunpack.c.l.b16 %v317
      %v794 = vunpack.c.l.b16 %v318
      %v795 = vunpack.c.l.b16 %v320
      %v796 = vunpack.c.l.b16 %v321
      %v797 = vunpack.c.l.b16 %v323
      %v798 = vunpack.c.l.b16 %v324
      %v799 = vunpack.c.l.b16 %v326
      %v800 = vunpack.c.l.b16 %v327
      %v801 = vpack.c.b16 %v786, %v785
      %v802 = vpack.c.b16 %v788, %v787
      %v803 = vpack.c.b16 %v790, %v789
      %v804 = vpack.c.b16 %v792, %v791
      %v805 = vpack.c.b16 %v794, %v793
      %v806 = vpack.c.b16 %v796, %v795
      %v807 = vpack.c.b16 %v798, %v797
      %v808 = vpack.c.b16 %v800, %v799
      %v809 = vunpack.c.l.b16 %v385
      %v810 = vunpack.c.l.b16 %v395
      %v811 = vunpack.c.l.b16 %v409
      %v812 = vunpack.c.l.b16 %v419
      %v813 = vunpack.c.l.b16 %v433
      %v814 = vunpack.c.l.b16 %v443
      %v815 = vunpack.c.l.b16 %v457
      %v816 = vunpack.c.l.b16 %v467
      %v817 = vunpack.c.l.b16 %v481
      %v818 = vunpack.c.l.b16 %v491
      %v819 = vunpack.c.l.b16 %v505
      %v820 = vunpack.c.l.b16 %v515
      %v821 = vunpack.c.l.b16 %v529
      %v822 = vunpack.c.l.b16 %v539
      %v823 = vunpack.c.l.b16 %v553
      %v824 = vunpack.c.l.b16 %v563
      %v825 = vpack.c.b16 %v810, %v809
      %v826 = vpack.c.b16 %v812, %v811
      %v827 = vpack.c.b16 %v814, %v813
      %v828 = vpack.c.b16 %v816, %v815
      %v829 = vpack.c.b16 %v818, %v817
      %v830 = vpack.c.b16 %v820, %v819
      %v831 = vpack.c.b16 %v822, %v821
      %v832 = vpack.c.b16 %v824, %v823
      %833 = vrot.lane.b32.xlu0 %v825, 8
      %v834 = vpop.permute.xlu0 %833
      %835 = vrot.lane.b32.xlu0 %v826, 8
      %v836 = vpop.permute.xlu0 %835
      %837 = vrot.lane.b32.xlu0 %v827, 8
      %v838 = vpop.permute.xlu0 %837
      %839 = vrot.lane.b32.xlu0 %v828, 8
      %v840 = vpop.permute.xlu0 %839
      %841 = vrot.lane.b32.xlu0 %v829, 8
      %v842 = vpop.permute.xlu0 %841
      %843 = vrot.lane.b32.xlu0 %v830, 8
      %v844 = vpop.permute.xlu0 %843
      %845 = vrot.lane.b32.xlu0 %v831, 8
      %v846 = vpop.permute.xlu0 %845
      %847 = vrot.lane.b32.xlu0 %v832, 8
      %v848 = vpop.permute.xlu0 %847
      %v849 = vunpack.c.l.b16 %v594
      %v850 = vunpack.c.l.b16 %v597
      %v851 = vunpack.c.l.b16 %v601
      %v852 = vunpack.c.l.b16 %v604
      %v853 = vunpack.c.l.b16 %v608
      %v854 = vunpack.c.l.b16 %v611
      %v855 = vunpack.c.l.b16 %v615
      %v856 = vunpack.c.l.b16 %v618
      %v857 = vunpack.c.l.b16 %v622
      %v858 = vunpack.c.l.b16 %v625
      %v859 = vunpack.c.l.b16 %v629
      %v860 = vunpack.c.l.b16 %v632
      %v861 = vunpack.c.l.b16 %v636
      %v862 = vunpack.c.l.b16 %v639
      %v863 = vunpack.c.l.b16 %v643
      %v864 = vunpack.c.l.b16 %v646
      %v865 = vpack.c.b16 %v850, %v849
      %v866 = vpack.c.b16 %v852, %v851
      %v867 = vpack.c.b16 %v854, %v853
      %v868 = vpack.c.b16 %v856, %v855
      %v869 = vpack.c.b16 %v858, %v857
      %v870 = vpack.c.b16 %v860, %v859
      %v871 = vpack.c.b16 %v862, %v861
      %v872 = vpack.c.b16 %v864, %v863
      %873 = vrot.lane.b32.xlu0 %v865, 16
      %v874 = vpop.permute.xlu0 %873
      %875 = vrot.lane.b32.xlu0 %v866, 16
      %v876 = vpop.permute.xlu0 %875
      %877 = vrot.lane.b32.xlu0 %v867, 16
      %v878 = vpop.permute.xlu0 %877
      %879 = vrot.lane.b32.xlu0 %v868, 16
      %v880 = vpop.permute.xlu0 %879
      %881 = vrot.lane.b32.xlu0 %v869, 16
      %v882 = vpop.permute.xlu0 %881
      %883 = vrot.lane.b32.xlu0 %v870, 16
      %v884 = vpop.permute.xlu0 %883
      %885 = vrot.lane.b32.xlu0 %v871, 16
      %v886 = vpop.permute.xlu0 %885
      %887 = vrot.lane.b32.xlu0 %v872, 16
      %v888 = vpop.permute.xlu0 %887
      %889 = vrot.lane.b32.xlu0 %v353, 24
      %v890 = vpop.permute.xlu0 %889
      %891 = vrot.lane.b32.xlu0 %v355, 24
      %v892 = vpop.permute.xlu0 %891
      %893 = vrot.lane.b32.xlu0 %v357, 24
      %v894 = vpop.permute.xlu0 %893
      %895 = vrot.lane.b32.xlu0 %v359, 24
      %v896 = vpop.permute.xlu0 %895
      %897 = vrot.lane.b32.xlu0 %v361, 24
      %v898 = vpop.permute.xlu0 %897
      %899 = vrot.lane.b32.xlu0 %v363, 24
      %v900 = vpop.permute.xlu0 %899
      %901 = vrot.lane.b32.xlu0 %v365, 24
      %v902 = vpop.permute.xlu0 %901
      %903 = vrot.lane.b32.xlu0 %v367, 24
      %v904 = vpop.permute.xlu0 %903
      %905 = vrot.lane.b32.xlu0 %v659, 32
      %v906 = vpop.permute.xlu0 %905
      %907 = vrot.lane.b32.xlu0 %v671, 32
      %v908 = vpop.permute.xlu0 %907
      %909 = vrot.lane.b32.xlu0 %v683, 32
      %v910 = vpop.permute.xlu0 %909
      %911 = vrot.lane.b32.xlu0 %v695, 32
      %v912 = vpop.permute.xlu0 %911
      %913 = vrot.lane.b32.xlu0 %v707, 32
      %v914 = vpop.permute.xlu0 %913
      %915 = vrot.lane.b32.xlu0 %v719, 32
      %v916 = vpop.permute.xlu0 %915
      %917 = vrot.lane.b32.xlu0 %v731, 32
      %v918 = vpop.permute.xlu0 %917
      %919 = vrot.lane.b32.xlu0 %v743, 32
      %v920 = vpop.permute.xlu0 %919
      %921 = vrot.lane.b32.xlu0 %v763, 40
      %v922 = vpop.permute.xlu0 %921
      %923 = vrot.lane.b32.xlu0 %v766, 40
      %v924 = vpop.permute.xlu0 %923
      %925 = vrot.lane.b32.xlu0 %v769, 40
      %v926 = vpop.permute.xlu0 %925
      %927 = vrot.lane.b32.xlu0 %v772, 40
      %v928 = vpop.permute.xlu0 %927
      %929 = vrot.lane.b32.xlu0 %v775, 40
      %v930 = vpop.permute.xlu0 %929
      %931 = vrot.lane.b32.xlu0 %v778, 40
      %v932 = vpop.permute.xlu0 %931
      %933 = vrot.lane.b32.xlu0 %v781, 40
      %v934 = vpop.permute.xlu0 %933
      %935 = vrot.lane.b32.xlu0 %v784, 40
      %v936 = vpop.permute.xlu0 %935
      %vm937 = vcmask 64512
      %v940 = vsel %vm937, %v801, %v834
      %v943 = vsel %vm937, %v802, %v836
      %v946 = vsel %vm937, %v803, %v838
      %v949 = vsel %vm937, %v804, %v840
      %v952 = vsel %vm937, %v805, %v842
      %v955 = vsel %vm937, %v806, %v844
      %v958 = vsel %vm937, %v807, %v846
      %v961 = vsel %vm937, %v808, %v848
      %vm962 = vcmask 130048
      %v964 = vsel %vm962, %v940, %v874
      %v966 = vsel %vm962, %v943, %v876
      %v968 = vsel %vm962, %v946, %v878
      %v970 = vsel %vm962, %v949, %v880
      %v972 = vsel %vm962, %v952, %v882
      %v974 = vsel %vm962, %v955, %v884
      %v976 = vsel %vm962, %v958, %v886
      %v978 = vsel %vm962, %v961, %v888
      %vm979 = vcmask 195584
      %v981 = vsel %vm979, %v964, %v890
      %v983 = vsel %vm979, %v966, %v892
      %v985 = vsel %vm979, %v968, %v894
      %v987 = vsel %vm979, %v970, %v896
      %v989 = vsel %vm979, %v972, %v898
      %v991 = vsel %vm979, %v974, %v900
      %v993 = vsel %vm979, %v976, %v902
      %v995 = vsel %vm979, %v978, %v904
      %vm996 = vcmask 261120
      %v998 = vsel %vm996, %v981, %v906
      %v1000 = vsel %vm996, %v983, %v908
      %v1002 = vsel %vm996, %v985, %v910
      %v1004 = vsel %vm996, %v987, %v912
      %v1006 = vsel %vm996, %v989, %v914
      %v1008 = vsel %vm996, %v991, %v916
      %v1010 = vsel %vm996, %v993, %v918
      %v1012 = vsel %vm996, %v995, %v920
      %vm1013 = vcmask 326656
      %v1015 = vsel %vm1013, %v998, %v922
      %v1017 = vsel %vm1013, %v1000, %v924
      %v1019 = vsel %vm1013, %v1002, %v926
      %v1021 = vsel %vm1013, %v1004, %v928
      %v1023 = vsel %vm1013, %v1006, %v930
      %v1025 = vsel %vm1013, %v1008, %v932
      %v1027 = vsel %vm1013, %v1010, %v934
      %v1029 = vsel %vm1013, %v1012, %v936
      %v1030 = vld [vmem:[%s1] sm:$0xf]
      %v1031 = vld [vmem:[%s1 + $0x4] sm:$0xf]
      %v1032 = vld [vmem:[%s1 + $0x8] sm:$0xf]
      %v1033 = vld [vmem:[%s1 + $0xc] sm:$0xf]
      %v1034 = vld [vmem:[%s1 + $0x10] sm:$0xf]
      %v1035 = vld [vmem:[%s1 + $0x14] sm:$0xf]
      %v1036 = vld [vmem:[%s2] sm:$0x1]
      %v1038 = vlaneseq
      %v1039 = vshrl.u32 %v1038, 7
      %v1040 = vsub.s32 0, %v1039
      %v1041 = vrot.slane %v1036, %v1040
      %v1049 = vunpack.c.l.b16 %v1030
      %v1050 = vunpack.c.l.b16 %v1031
      %v1051 = vunpack.c.l.b16 %v1032
      %v1052 = vunpack.c.l.b16 %v1033
      %v1053 = vunpack.c.l.b16 %v1034
      %v1054 = vunpack.c.l.b16 %v1035
      %v1055 = vpack.c.b16 %v1050, %v1049
      %v1056 = vpack.c.b16 %v1052, %v1051
      %v1057 = vpack.c.b16 %v1054, %v1053
      %vm1061 = vcmask 392192
      %v1062 = vsel %vm1061, %v1015, 0
      %v1064 = vsel %vm1061, %v1017, 0
      %v1066 = vsel %vm1061, %v1019, 0
      %v1068 = vsel %vm1061, %v1021, 0
      %v1070 = vsel %vm1061, %v1023, 0
      %v1072 = vsel %vm1061, %v1025, 0
      %v1074 = vsel %vm1061, %v1027, 0
      %v1076 = vsel %vm1061, %v1029, 0
      %1078 = vmatprep.subr.bf16.mxu0 0
      %1079 = vmatpush1.bf16.msra.mxu0 0
      %1080 = vmatprep.subr.bf16.mxu0 0
      %1081 = vmatpush1.bf16.msra.mxu0 0
      %1082 = vmatprep.subr.bf16.mxu0 0
      %1083 = vmatpush1.bf16.msra.mxu0 0
      %1084 = vmatprep.subr.bf16.mxu0 0
      %1085 = vmatpush1.bf16.msra.mxu0 0
      %1086 = vmatprep.subr.bf16.mxu0 0
      %1087 = vmatpush1.bf16.msra.mxu0 0
      %1088 = vmatprep.subr.bf16.mxu0 0
      %1089 = vmatpush1.bf16.msra.mxu0 %v1057
      %1090 = vmatprep.subr.bf16.mxu0 0
      %1091 = vmatpush1.bf16.msra.mxu0 %v1056
      %1092 = vmatprep.subr.bf16.mxu0 0
      %1093 = vmatpush1.bf16.msra.mxu0 %v1055
      %1094 = vmatprep.subr.bf16.mxu0 0
      %1095 = vmatpush2.bf16.msra.mxu0 0
      %1096 = vmatprep.subr.bf16.mxu0 0
      %1097 = vmatpush2.bf16.msra.mxu0 0
      %1098 = vmatprep.subr.bf16.mxu0 0
      %1099 = vmatpush2.bf16.msra.mxu0 0
      %1100 = vmatprep.subr.bf16.mxu0 0
      %1101 = vmatpush2.bf16.msra.mxu0 0
      %1102 = vmatprep.subr.bf16.mxu0 0
      %1103 = vmatpush2.bf16.msra.mxu0 0
      %1104 = vmatprep.subr.bf16.mxu0 0
      %1105 = vmatpush2.bf16.msra.mxu0 0
      %1106 = vmatprep.subr.bf16.mxu0 0
      %1107 = vmatpush2.bf16.msra.mxu0 0
      %1108 = vmatprep.subr.bf16.mxu0 0
      %1109 = vmatpush2.bf16.msra.mxu0 0
      %1110 = vmatprep.mubr.bf16.mxu0 0
      %1111 = vmatmul.mubr.bf16.gmra.mxu0 %v1062
      %v1112 = vpop.f32.mrf.mxu0
      %v1113 = vadd.f32 %v1041, %v1112
      %v1114 = vpop.f32.mrf.mxu0
      %v1115 = vpop.f32.mrf.mxu0
      %v1116 = vadd.f32 %v1041, %v1115
      %v1117 = vpop.f32.mrf.mxu0
      %1118 = vmatprep.mubr.bf16.mxu0 0
      %1119 = vmatmul.mubr.bf16.gmra.mxu0 %v1064
      %v1120 = vpop.f32.mrf.mxu0
      %v1121 = vadd.f32 %v1041, %v1120
      %v1122 = vpop.f32.mrf.mxu0
      %v1123 = vpop.f32.mrf.mxu0
      %v1124 = vadd.f32 %v1041, %v1123
      %v1125 = vpop.f32.mrf.mxu0
      %1126 = vmatprep.mubr.bf16.mxu0 0
      %1127 = vmatmul.mubr.bf16.gmra.mxu0 %v1066
      %v1128 = vpop.f32.mrf.mxu0
      %v1129 = vadd.f32 %v1041, %v1128
      %v1130 = vpop.f32.mrf.mxu0
      %v1131 = vpop.f32.mrf.mxu0
      %v1132 = vadd.f32 %v1041, %v1131
      %v1133 = vpop.f32.mrf.mxu0
      %1134 = vmatprep.mubr.bf16.mxu0 0
      %1135 = vmatmul.mubr.bf16.gmra.mxu0 %v1068
      %v1136 = vpop.f32.mrf.mxu0
      %v1137 = vadd.f32 %v1041, %v1136
      %v1138 = vpop.f32.mrf.mxu0
      %v1139 = vpop.f32.mrf.mxu0
      %v1140 = vadd.f32 %v1041, %v1139
      %v1141 = vpop.f32.mrf.mxu0
      %1142 = vmatprep.mubr.bf16.mxu0 0
      %1143 = vmatmul.mubr.bf16.gmra.mxu0 %v1070
      %v1144 = vpop.f32.mrf.mxu0
      %v1145 = vadd.f32 %v1041, %v1144
      %v1146 = vpop.f32.mrf.mxu0
      %v1147 = vpop.f32.mrf.mxu0
      %v1148 = vadd.f32 %v1041, %v1147
      %v1149 = vpop.f32.mrf.mxu0
      %1150 = vmatprep.mubr.bf16.mxu0 0
      %1151 = vmatmul.mubr.bf16.gmra.mxu0 %v1072
      %v1152 = vpop.f32.mrf.mxu0
      %v1153 = vadd.f32 %v1041, %v1152
      %v1154 = vpop.f32.mrf.mxu0
      %v1155 = vpop.f32.mrf.mxu0
      %v1156 = vadd.f32 %v1041, %v1155
      %v1157 = vpop.f32.mrf.mxu0
      %1158 = vmatprep.mubr.bf16.mxu0 0
      %1159 = vmatmul.mubr.bf16.gmra.mxu0 %v1074
      %v1160 = vpop.f32.mrf.mxu0
      %v1161 = vadd.f32 %v1041, %v1160
      %v1162 = vpop.f32.mrf.mxu0
      %v1163 = vpop.f32.mrf.mxu0
      %v1164 = vadd.f32 %v1041, %v1163
      %v1165 = vpop.f32.mrf.mxu0
      %1166 = vmatprep.mubr.bf16.mxu0 0
      %1167 = vmatmul.mubr.bf16.gmra.mxu0 %v1076
      %v1168 = vpop.f32.mrf.mxu0
      %v1169 = vadd.f32 %v1041, %v1168
      %v1170 = vpop.f32.mrf.mxu0
      %v1171 = vpop.f32.mrf.mxu0
      %v1172 = vadd.f32 %v1041, %v1171
      %v1173 = vpop.f32.mrf.mxu0
      %1174 = vdwg.mxu0
      %v1175 = vxor.u32 %v1113, 2147483648
      %v1176 = vxor.u32 %v1116, 2147483648
      %v1177 = vxor.u32 %v1121, 2147483648
      %v1178 = vxor.u32 %v1124, 2147483648
      %v1179 = vxor.u32 %v1129, 2147483648
      %v1180 = vxor.u32 %v1132, 2147483648
      %v1181 = vxor.u32 %v1137, 2147483648
      %v1182 = vxor.u32 %v1140, 2147483648
      %v1183 = vxor.u32 %v1145, 2147483648
      %v1184 = vxor.u32 %v1148, 2147483648
      %v1185 = vxor.u32 %v1153, 2147483648
      %v1186 = vxor.u32 %v1156, 2147483648
      %v1187 = vxor.u32 %v1161, 2147483648
      %v1188 = vxor.u32 %v1164, 2147483648
      %v1189 = vxor.u32 %v1169, 2147483648
      %v1190 = vxor.u32 %v1172, 2147483648
      %v1191 = vmul.f32 %v1175, 1.442695
      %v1192 = vpow.pop %v1191
      %v1193 = vmul.f32 %v1176, 1.442695
      %v1194 = vpow.pop %v1193
      %v1195 = vmul.f32 %v1177, 1.442695
      %v1196 = vpow.pop %v1195
      %v1197 = vmul.f32 %v1178, 1.442695
      %v1198 = vpow.pop %v1197
      %v1199 = vmul.f32 %v1179, 1.442695
      %v1200 = vpow.pop %v1199
      %v1201 = vmul.f32 %v1180, 1.442695
      %v1202 = vpow.pop %v1201
      %v1203 = vmul.f32 %v1181, 1.442695
      %v1204 = vpow.pop %v1203
      %v1205 = vmul.f32 %v1182, 1.442695
      %v1206 = vpow.pop %v1205
      %v1207 = vmul.f32 %v1183, 1.442695
      %v1208 = vpow.pop %v1207
      %v1209 = vmul.f32 %v1184, 1.442695
      %v1210 = vpow.pop %v1209
      %v1211 = vmul.f32 %v1185, 1.442695
      %v1212 = vpow.pop %v1211
      %v1213 = vmul.f32 %v1186, 1.442695
      %v1214 = vpow.pop %v1213
      %v1215 = vmul.f32 %v1187, 1.442695
      %v1216 = vpow.pop %v1215
      %v1217 = vmul.f32 %v1188, 1.442695
      %v1218 = vpow.pop %v1217
      %v1219 = vmul.f32 %v1189, 1.442695
      %v1220 = vpow.pop %v1219
      %v1221 = vmul.f32 %v1190, 1.442695
      %v1222 = vpow.pop %v1221
      %v1223 = vadd.f32 %v1192, 1.0
      %v1224 = vadd.f32 %v1194, 1.0
      %v1225 = vadd.f32 %v1196, 1.0
      %v1226 = vadd.f32 %v1198, 1.0
      %v1227 = vadd.f32 %v1200, 1.0
      %v1228 = vadd.f32 %v1202, 1.0
      %v1229 = vadd.f32 %v1204, 1.0
      %v1230 = vadd.f32 %v1206, 1.0
      %v1231 = vadd.f32 %v1208, 1.0
      %v1232 = vadd.f32 %v1210, 1.0
      %v1233 = vadd.f32 %v1212, 1.0
      %v1234 = vadd.f32 %v1214, 1.0
      %v1235 = vadd.f32 %v1216, 1.0
      %v1236 = vadd.f32 %v1218, 1.0
      %v1237 = vadd.f32 %v1220, 1.0
      %v1238 = vadd.f32 %v1222, 1.0
      %v1239 = vrcp.pop %v1223
      %v1240 = vmul.f32 1.0, %v1239
      %v1241 = vrcp.pop %v1224
      %v1242 = vmul.f32 1.0, %v1241
      %v1243 = vrcp.pop %v1225
      %v1244 = vmul.f32 1.0, %v1243
      %v1245 = vrcp.pop %v1226
      %v1246 = vmul.f32 1.0, %v1245
      %v1247 = vrcp.pop %v1227
      %v1248 = vmul.f32 1.0, %v1247
      %v1249 = vrcp.pop %v1228
      %v1250 = vmul.f32 1.0, %v1249
      %v1251 = vrcp.pop %v1229
      %v1252 = vmul.f32 1.0, %v1251
      %v1253 = vrcp.pop %v1230
      %v1254 = vmul.f32 1.0, %v1253
      %v1255 = vrcp.pop %v1231
      %v1256 = vmul.f32 1.0, %v1255
      %v1257 = vrcp.pop %v1232
      %v1258 = vmul.f32 1.0, %v1257
      %v1259 = vrcp.pop %v1233
      %v1260 = vmul.f32 1.0, %v1259
      %v1261 = vrcp.pop %v1234
      %v1262 = vmul.f32 1.0, %v1261
      %v1263 = vrcp.pop %v1235
      %v1264 = vmul.f32 1.0, %v1263
      %v1265 = vrcp.pop %v1236
      %v1266 = vmul.f32 1.0, %v1265
      %v1267 = vrcp.pop %v1237
      %v1268 = vmul.f32 1.0, %v1267
      %v1269 = vrcp.pop %v1238
      %v1270 = vmul.f32 1.0, %v1269
      %v1271 = vtanh.pop %v1113
      %v1272 = vtanh.pop %v1116
      %v1273 = vtanh.pop %v1121
      %v1274 = vtanh.pop %v1124
      %v1275 = vtanh.pop %v1129
      %v1276 = vtanh.pop %v1132
      %v1277 = vtanh.pop %v1137
      %v1278 = vtanh.pop %v1140
      %v1279 = vtanh.pop %v1145
      %v1280 = vtanh.pop %v1148
      %v1281 = vtanh.pop %v1153
      %v1282 = vtanh.pop %v1156
      %v1283 = vtanh.pop %v1161
      %v1284 = vtanh.pop %v1164
      %v1285 = vtanh.pop %v1169
      %v1286 = vtanh.pop %v1172
      %v1287 = vld [vmem:[%s256] sm:$0xff]
      %v1288 = vld [vmem:[%s256 + $0x8] sm:$0xff]
      %v1289 = vld [vmem:[%s256 + $0x10] sm:$0xff]
      %v1290 = vld [vmem:[%s256 + $0x18] sm:$0xff]
      %v1291 = vld [vmem:[%s256 + $0x20] sm:$0xff]
      %v1292 = vld [vmem:[%s256 + $0x28] sm:$0xff]
      %v1293 = vld [vmem:[%s256 + $0x30] sm:$0xff]
      %v1294 = vld [vmem:[%s256 + $0x38] sm:$0xff]
      %v1295 = vld [vmem:[%s256 + $0x40] sm:$0xff]
      %v1296 = vld [vmem:[%s256 + $0x48] sm:$0xff]
      %v1297 = vld [vmem:[%s256 + $0x50] sm:$0xff]
      %v1298 = vld [vmem:[%s256 + $0x58] sm:$0xff]
      %v1299 = vld [vmem:[%s256 + $0x60] sm:$0xff]
      %v1300 = vld [vmem:[%s256 + $0x68] sm:$0xff]
      %v1301 = vld [vmem:[%s256 + $0x70] sm:$0xff]
      %v1302 = vld [vmem:[%s256 + $0x78] sm:$0xff]
      %1319 = vrot.lane.b32.xlu0 %v1287, 8
      %v1320 = vpop.permute.xlu0 %1319
      %1321 = vrot.lane.b32.xlu0 %v1288, 8
      %v1322 = vpop.permute.xlu0 %1321
      %1323 = vrot.lane.b32.xlu0 %v1289, 8
      %v1324 = vpop.permute.xlu0 %1323
      %1325 = vrot.lane.b32.xlu0 %v1290, 8
      %v1326 = vpop.permute.xlu0 %1325
      %1327 = vrot.lane.b32.xlu0 %v1291, 8
      %v1328 = vpop.permute.xlu0 %1327
      %1329 = vrot.lane.b32.xlu0 %v1292, 8
      %v1330 = vpop.permute.xlu0 %1329
      %1331 = vrot.lane.b32.xlu0 %v1293, 8
      %v1332 = vpop.permute.xlu0 %1331
      %1333 = vrot.lane.b32.xlu0 %v1294, 8
      %v1334 = vpop.permute.xlu0 %1333
      %1335 = vrot.lane.b32.xlu0 %v1295, 8
      %v1336 = vpop.permute.xlu0 %1335
      %1337 = vrot.lane.b32.xlu0 %v1296, 8
      %v1338 = vpop.permute.xlu0 %1337
      %1339 = vrot.lane.b32.xlu0 %v1297, 8
      %v1340 = vpop.permute.xlu0 %1339
      %1341 = vrot.lane.b32.xlu0 %v1298, 8
      %v1342 = vpop.permute.xlu0 %1341
      %1343 = vrot.lane.b32.xlu0 %v1299, 8
      %v1344 = vpop.permute.xlu0 %1343
      %1345 = vrot.lane.b32.xlu0 %v1300, 8
      %v1346 = vpop.permute.xlu0 %1345
      %1347 = vrot.lane.b32.xlu0 %v1301, 8
      %v1348 = vpop.permute.xlu0 %1347
      %1349 = vrot.lane.b32.xlu0 %v1302, 8
      %v1350 = vpop.permute.xlu0 %1349
      %v1367 = vmul.f32 %v1240, %v1320
      %v1368 = vmul.f32 %v1242, %v1322
      %v1369 = vmul.f32 %v1244, %v1324
      %v1370 = vmul.f32 %v1246, %v1326
      %v1371 = vmul.f32 %v1248, %v1328
      %v1372 = vmul.f32 %v1250, %v1330
      %v1373 = vmul.f32 %v1252, %v1332
      %v1374 = vmul.f32 %v1254, %v1334
      %v1375 = vmul.f32 %v1256, %v1336
      %v1376 = vmul.f32 %v1258, %v1338
      %v1377 = vmul.f32 %v1260, %v1340
      %v1378 = vmul.f32 %v1262, %v1342
      %v1379 = vmul.f32 %v1264, %v1344
      %v1380 = vmul.f32 %v1266, %v1346
      %v1381 = vmul.f32 %v1268, %v1348
      %v1382 = vmul.f32 %v1270, %v1350
      %1399 = vrot.lane.b32.xlu0 %v1271, 104
      %v1400 = vpop.permute.xlu0 %1399
      %1401 = vrot.lane.b32.xlu0 %v1272, 104
      %v1402 = vpop.permute.xlu0 %1401
      %1403 = vrot.lane.b32.xlu0 %v1273, 104
      %v1404 = vpop.permute.xlu0 %1403
      %1405 = vrot.lane.b32.xlu0 %v1274, 104
      %v1406 = vpop.permute.xlu0 %1405
      %1407 = vrot.lane.b32.xlu0 %v1275, 104
      %v1408 = vpop.permute.xlu0 %1407
      %1409 = vrot.lane.b32.xlu0 %v1276, 104
      %v1410 = vpop.permute.xlu0 %1409
      %1411 = vrot.lane.b32.xlu0 %v1277, 104
      %v1412 = vpop.permute.xlu0 %1411
      %1413 = vrot.lane.b32.xlu0 %v1278, 104
      %v1414 = vpop.permute.xlu0 %1413
      %1415 = vrot.lane.b32.xlu0 %v1279, 104
      %v1416 = vpop.permute.xlu0 %1415
      %1417 = vrot.lane.b32.xlu0 %v1280, 104
      %v1418 = vpop.permute.xlu0 %1417
      %1419 = vrot.lane.b32.xlu0 %v1281, 104
      %v1420 = vpop.permute.xlu0 %1419
      %1421 = vrot.lane.b32.xlu0 %v1282, 104
      %v1422 = vpop.permute.xlu0 %1421
      %1423 = vrot.lane.b32.xlu0 %v1283, 104
      %v1424 = vpop.permute.xlu0 %1423
      %1425 = vrot.lane.b32.xlu0 %v1284, 104
      %v1426 = vpop.permute.xlu0 %1425
      %1427 = vrot.lane.b32.xlu0 %v1285, 104
      %v1428 = vpop.permute.xlu0 %1427
      %1429 = vrot.lane.b32.xlu0 %v1286, 104
      %v1430 = vpop.permute.xlu0 %1429
      %v1447 = vmul.f32 %v1240, %v1400
      %v1448 = vmul.f32 %v1242, %v1402
      %v1449 = vmul.f32 %v1244, %v1404
      %v1450 = vmul.f32 %v1246, %v1406
      %v1451 = vmul.f32 %v1248, %v1408
      %v1452 = vmul.f32 %v1250, %v1410
      %v1453 = vmul.f32 %v1252, %v1412
      %v1454 = vmul.f32 %v1254, %v1414
      %v1455 = vmul.f32 %v1256, %v1416
      %v1456 = vmul.f32 %v1258, %v1418
      %v1457 = vmul.f32 %v1260, %v1420
      %v1458 = vmul.f32 %v1262, %v1422
      %v1459 = vmul.f32 %v1264, %v1424
      %v1460 = vmul.f32 %v1266, %v1426
      %v1461 = vmul.f32 %v1268, %v1428
      %v1462 = vmul.f32 %v1270, %v1430
      %1479 = vrot.lane.b32.xlu0 %v1447, 8
      %v1480 = vpop.permute.xlu0 %1479
      %1481 = vrot.lane.b32.xlu0 %v1448, 8
      %v1482 = vpop.permute.xlu0 %1481
      %1483 = vrot.lane.b32.xlu0 %v1449, 8
      %v1484 = vpop.permute.xlu0 %1483
      %1485 = vrot.lane.b32.xlu0 %v1450, 8
      %v1486 = vpop.permute.xlu0 %1485
      %1487 = vrot.lane.b32.xlu0 %v1451, 8
      %v1488 = vpop.permute.xlu0 %1487
      %1489 = vrot.lane.b32.xlu0 %v1452, 8
      %v1490 = vpop.permute.xlu0 %1489
      %1491 = vrot.lane.b32.xlu0 %v1453, 8
      %v1492 = vpop.permute.xlu0 %1491
      %1493 = vrot.lane.b32.xlu0 %v1454, 8
      %v1494 = vpop.permute.xlu0 %1493
      %1495 = vrot.lane.b32.xlu0 %v1455, 8
      %v1496 = vpop.permute.xlu0 %1495
      %1497 = vrot.lane.b32.xlu0 %v1456, 8
      %v1498 = vpop.permute.xlu0 %1497
      %1499 = vrot.lane.b32.xlu0 %v1457, 8
      %v1500 = vpop.permute.xlu0 %1499
      %1501 = vrot.lane.b32.xlu0 %v1458, 8
      %v1502 = vpop.permute.xlu0 %1501
      %1503 = vrot.lane.b32.xlu0 %v1459, 8
      %v1504 = vpop.permute.xlu0 %1503
      %1505 = vrot.lane.b32.xlu0 %v1460, 8
      %v1506 = vpop.permute.xlu0 %1505
      %1507 = vrot.lane.b32.xlu0 %v1461, 8
      %v1508 = vpop.permute.xlu0 %1507
      %1509 = vrot.lane.b32.xlu0 %v1462, 8
      %v1510 = vpop.permute.xlu0 %1509
      %v1527 = vadd.f32 %v1367, %v1480
      %v1528 = vadd.f32 %v1368, %v1482
      %v1529 = vadd.f32 %v1369, %v1484
      %v1530 = vadd.f32 %v1370, %v1486
      %v1531 = vadd.f32 %v1371, %v1488
      %v1532 = vadd.f32 %v1372, %v1490
      %v1533 = vadd.f32 %v1373, %v1492
      %v1534 = vadd.f32 %v1374, %v1494
      %v1535 = vadd.f32 %v1375, %v1496
      %v1536 = vadd.f32 %v1376, %v1498
      %v1537 = vadd.f32 %v1377, %v1500
      %v1538 = vadd.f32 %v1378, %v1502
      %v1539 = vadd.f32 %v1379, %v1504
      %v1540 = vadd.f32 %v1380, %v1506
      %v1541 = vadd.f32 %v1381, %v1508
      %v1542 = vadd.f32 %v1382, %v1510
      %v1543 = vtanh.pop %v1527
      %v1544 = vtanh.pop %v1528
      %v1545 = vtanh.pop %v1529
      %v1546 = vtanh.pop %v1530
      %v1547 = vtanh.pop %v1531
      %v1548 = vtanh.pop %v1532
      %v1549 = vtanh.pop %v1533
      %v1550 = vtanh.pop %v1534
      %v1551 = vtanh.pop %v1535
      %v1552 = vtanh.pop %v1536
      %v1553 = vtanh.pop %v1537
      %v1554 = vtanh.pop %v1538
      %v1555 = vtanh.pop %v1539
      %v1556 = vtanh.pop %v1540
      %v1557 = vtanh.pop %v1541
      %v1558 = vtanh.pop %v1542
      %1575 = vrot.lane.b32.xlu0 %v1543, 8
      %v1576 = vpop.permute.xlu0 %1575
      %1577 = vrot.lane.b32.xlu0 %v1544, 8
      %v1578 = vpop.permute.xlu0 %1577
      %1579 = vrot.lane.b32.xlu0 %v1545, 8
      %v1580 = vpop.permute.xlu0 %1579
      %1581 = vrot.lane.b32.xlu0 %v1546, 8
      %v1582 = vpop.permute.xlu0 %1581
      %1583 = vrot.lane.b32.xlu0 %v1547, 8
      %v1584 = vpop.permute.xlu0 %1583
      %1585 = vrot.lane.b32.xlu0 %v1548, 8
      %v1586 = vpop.permute.xlu0 %1585
      %1587 = vrot.lane.b32.xlu0 %v1549, 8
      %v1588 = vpop.permute.xlu0 %1587
      %1589 = vrot.lane.b32.xlu0 %v1550, 8
      %v1590 = vpop.permute.xlu0 %1589
      %1591 = vrot.lane.b32.xlu0 %v1551, 8
      %v1592 = vpop.permute.xlu0 %1591
      %1593 = vrot.lane.b32.xlu0 %v1552, 8
      %v1594 = vpop.permute.xlu0 %1593
      %1595 = vrot.lane.b32.xlu0 %v1553, 8
      %v1596 = vpop.permute.xlu0 %1595
      %1597 = vrot.lane.b32.xlu0 %v1554, 8
      %v1598 = vpop.permute.xlu0 %1597
      %1599 = vrot.lane.b32.xlu0 %v1555, 8
      %v1600 = vpop.permute.xlu0 %1599
      %1601 = vrot.lane.b32.xlu0 %v1556, 8
      %v1602 = vpop.permute.xlu0 %1601
      %1603 = vrot.lane.b32.xlu0 %v1557, 8
      %v1604 = vpop.permute.xlu0 %1603
      %1605 = vrot.lane.b32.xlu0 %v1558, 8
      %v1606 = vpop.permute.xlu0 %1605
      %v1623 = vmul.f32 %v1240, %v1576
      %v1624 = vmul.f32 %v1242, %v1578
      %v1625 = vmul.f32 %v1244, %v1580
      %v1626 = vmul.f32 %v1246, %v1582
      %v1627 = vmul.f32 %v1248, %v1584
      %v1628 = vmul.f32 %v1250, %v1586
      %v1629 = vmul.f32 %v1252, %v1588
      %v1630 = vmul.f32 %v1254, %v1590
      %v1631 = vmul.f32 %v1256, %v1592
      %v1632 = vmul.f32 %v1258, %v1594
      %v1633 = vmul.f32 %v1260, %v1596
      %v1634 = vmul.f32 %v1262, %v1598
      %v1635 = vmul.f32 %v1264, %v1600
      %v1636 = vmul.f32 %v1266, %v1602
      %v1637 = vmul.f32 %v1268, %v1604
      %v1638 = vmul.f32 %v1270, %v1606
      %1655 = vrot.lane.b32.xlu0 %v1527, 120
      %v1656 = vpop.permute.xlu0 %1655
      %1657 = vrot.lane.b32.xlu0 %v1528, 120
      %v1658 = vpop.permute.xlu0 %1657
      %1659 = vrot.lane.b32.xlu0 %v1529, 120
      %v1660 = vpop.permute.xlu0 %1659
      %1661 = vrot.lane.b32.xlu0 %v1530, 120
      %v1662 = vpop.permute.xlu0 %1661
      %1663 = vrot.lane.b32.xlu0 %v1531, 120
      %v1664 = vpop.permute.xlu0 %1663
      %1665 = vrot.lane.b32.xlu0 %v1532, 120
      %v1666 = vpop.permute.xlu0 %1665
      %1667 = vrot.lane.b32.xlu0 %v1533, 120
      %v1668 = vpop.permute.xlu0 %1667
      %1669 = vrot.lane.b32.xlu0 %v1534, 120
      %v1670 = vpop.permute.xlu0 %1669
      %1671 = vrot.lane.b32.xlu0 %v1535, 120
      %v1672 = vpop.permute.xlu0 %1671
      %1673 = vrot.lane.b32.xlu0 %v1536, 120
      %v1674 = vpop.permute.xlu0 %1673
      %1675 = vrot.lane.b32.xlu0 %v1537, 120
      %v1676 = vpop.permute.xlu0 %1675
      %1677 = vrot.lane.b32.xlu0 %v1538, 120
      %v1678 = vpop.permute.xlu0 %1677
      %1679 = vrot.lane.b32.xlu0 %v1539, 120
      %v1680 = vpop.permute.xlu0 %1679
      %1681 = vrot.lane.b32.xlu0 %v1540, 120
      %v1682 = vpop.permute.xlu0 %1681
      %1683 = vrot.lane.b32.xlu0 %v1541, 120
      %v1684 = vpop.permute.xlu0 %1683
      %1685 = vrot.lane.b32.xlu0 %v1542, 120
      %v1686 = vpop.permute.xlu0 %1685
      %1703 = vst.msk [vmem:[%s256] sm:$0xff] %vm937, %v1656
      %1704 = vst.msk [vmem:[%s256 + $0x8] sm:$0xff] %vm937, %v1658
      %1705 = vst.msk [vmem:[%s256 + $0x10] sm:$0xff] %vm937, %v1660
      %1706 = vst.msk [vmem:[%s256 + $0x18] sm:$0xff] %vm937, %v1662
      %1707 = vst.msk [vmem:[%s256 + $0x20] sm:$0xff] %vm937, %v1664
      %1708 = vst.msk [vmem:[%s256 + $0x28] sm:$0xff] %vm937, %v1666
      %1709 = vst.msk [vmem:[%s256 + $0x30] sm:$0xff] %vm937, %v1668
      %1710 = vst.msk [vmem:[%s256 + $0x38] sm:$0xff] %vm937, %v1670
      %1711 = vst.msk [vmem:[%s256 + $0x40] sm:$0xff] %vm937, %v1672
      %1712 = vst.msk [vmem:[%s256 + $0x48] sm:$0xff] %vm937, %v1674
      %1713 = vst.msk [vmem:[%s256 + $0x50] sm:$0xff] %vm937, %v1676
      %1714 = vst.msk [vmem:[%s256 + $0x58] sm:$0xff] %vm937, %v1678
      %1715 = vst.msk [vmem:[%s256 + $0x60] sm:$0xff] %vm937, %v1680
      %1716 = vst.msk [vmem:[%s256 + $0x68] sm:$0xff] %vm937, %v1682
      %1717 = vst.msk [vmem:[%s256 + $0x70] sm:$0xff] %vm937, %v1684
      %1718 = vst.msk [vmem:[%s256 + $0x78] sm:$0xff] %vm937, %v1686
      %1735 = vrot.lane.b32.xlu0 %v1623, 112
      %v1736 = vpop.permute.xlu0 %1735
      %1737 = vrot.lane.b32.xlu0 %v1624, 112
      %v1738 = vpop.permute.xlu0 %1737
      %1739 = vrot.lane.b32.xlu0 %v1625, 112
      %v1740 = vpop.permute.xlu0 %1739
      %1741 = vrot.lane.b32.xlu0 %v1626, 112
      %v1742 = vpop.permute.xlu0 %1741
      %1743 = vrot.lane.b32.xlu0 %v1627, 112
      %v1744 = vpop.permute.xlu0 %1743
      %1745 = vrot.lane.b32.xlu0 %v1628, 112
      %v1746 = vpop.permute.xlu0 %1745
      %1747 = vrot.lane.b32.xlu0 %v1629, 112
      %v1748 = vpop.permute.xlu0 %1747
      %1749 = vrot.lane.b32.xlu0 %v1630, 112
      %v1750 = vpop.permute.xlu0 %1749
      %1751 = vrot.lane.b32.xlu0 %v1631, 112
      %v1752 = vpop.permute.xlu0 %1751
      %1753 = vrot.lane.b32.xlu0 %v1632, 112
      %v1754 = vpop.permute.xlu0 %1753
      %1755 = vrot.lane.b32.xlu0 %v1633, 112
      %v1756 = vpop.permute.xlu0 %1755
      %1757 = vrot.lane.b32.xlu0 %v1634, 112
      %v1758 = vpop.permute.xlu0 %1757
      %1759 = vrot.lane.b32.xlu0 %v1635, 112
      %v1760 = vpop.permute.xlu0 %1759
      %1761 = vrot.lane.b32.xlu0 %v1636, 112
      %v1762 = vpop.permute.xlu0 %1761
      %1763 = vrot.lane.b32.xlu0 %v1637, 112
      %v1764 = vpop.permute.xlu0 %1763
      %1765 = vrot.lane.b32.xlu0 %v1638, 112
      %v1766 = vpop.permute.xlu0 %1765
      %1783 = vst.msk [vmem:[#allocation2 + $0x1] sm:$0xff] %vm937, %v1736
      %1784 = vst.msk [vmem:[#allocation2 + $0x9] sm:$0xff] %vm937, %v1738
      %1785 = vst.msk [vmem:[#allocation2 + $0x19] sm:$0xff] %vm937, %v1740
      %1786 = vst.msk [vmem:[#allocation2 + $0x21] sm:$0xff] %vm937, %v1742
      %1787 = vst.msk [vmem:[#allocation2 + $0x31] sm:$0xff] %vm937, %v1744
      %1788 = vst.msk [vmem:[#allocation2 + $0x39] sm:$0xff] %vm937, %v1746
      %1789 = vst.msk [vmem:[#allocation2 + $0x49] sm:$0xff] %vm937, %v1748
      %1790 = vst.msk [vmem:[#allocation2 + $0x51] sm:$0xff] %vm937, %v1750
      %1791 = vst.msk [vmem:[#allocation2 + $0x61] sm:$0xff] %vm937, %v1752
      %1792 = vst.msk [vmem:[#allocation2 + $0x69] sm:$0xff] %vm937, %v1754
      %1793 = vst.msk [vmem:[#allocation2 + $0x79] sm:$0xff] %vm937, %v1756
      %1794 = vst.msk [vmem:[#allocation2 + $0x81] sm:$0xff] %vm937, %v1758
      %1795 = vst.msk [vmem:[#allocation2 + $0x91] sm:$0xff] %vm937, %v1760
      %1796 = vst.msk [vmem:[#allocation2 + $0x99] sm:$0xff] %vm937, %v1762
      %1797 = vst.msk [vmem:[#allocation2 + $0xa9] sm:$0xff] %vm937, %v1764
      %1798 = vst.msk [vmem:[#allocation2 + $0xb1] sm:$0xff] %vm937, %v1766
      %1799 = vst.msk [vmem:[%s249] sm:$0xff] %vm937, %v1736
      %1800 = vst.msk [vmem:[%s249 + $0x8] sm:$0xff] %vm937, %v1738
      %1801 = vst.msk [vmem:[%s249 + $0x10] sm:$0xff] %vm937, %v1740
      %1802 = vst.msk [vmem:[%s249 + $0x18] sm:$0xff] %vm937, %v1742
      %1803 = vst.msk [vmem:[%s249 + $0x20] sm:$0xff] %vm937, %v1744
      %1804 = vst.msk [vmem:[%s249 + $0x28] sm:$0xff] %vm937, %v1746
      %1805 = vst.msk [vmem:[%s249 + $0x30] sm:$0xff] %vm937, %v1748
      %1806 = vst.msk [vmem:[%s249 + $0x38] sm:$0xff] %vm937, %v1750
      %1807 = vst.msk [vmem:[%s249 + $0x40] sm:$0xff] %vm937, %v1752
      %1808 = vst.msk [vmem:[%s249 + $0x48] sm:$0xff] %vm937, %v1754
      %1809 = vst.msk [vmem:[%s249 + $0x50] sm:$0xff] %vm937, %v1756
      %1810 = vst.msk [vmem:[%s249 + $0x58] sm:$0xff] %vm937, %v1758
      %1811 = vst.msk [vmem:[%s249 + $0x60] sm:$0xff] %vm937, %v1760
      %1812 = vst.msk [vmem:[%s249 + $0x68] sm:$0xff] %vm937, %v1762
      %1813 = vst.msk [vmem:[%s249 + $0x70] sm:$0xff] %vm937, %v1764
      %1814 = vst.msk [vmem:[%s249 + $0x78] sm:$0xff] %vm937, %v1766
      %s1815 = smul.u32 8, %s20
      %p1816 = scmp.lt.s32.totalorder %s21, 7
      %s1817 = scalar_select %p1816, %s21, 7
      %p1818 = scmp.lt.s32.totalorder %s1815, 7
      %s1819 = scalar_select %p1818, %s1815, 7
      %s1820 = smul.addr %s1819, 2
      %s1821 = smul.addr %s1817, 16
      %s1822 = sadd.s32 %s1820, %s1821
      %s1823 = smul.addr %s1822, 8
      %s1824 = scalar_lea.vmem %s3, %s1823
      %s1825 = smul.u32 8, %s20
      %p1826 = scmp.lt.s32.totalorder %s1825, 7
      %s1827 = scalar_select %p1826, %s1825, 7
      %s1828 = smul.addr %s1827, 2
      %s1829 = smul.addr %s1828, 8
      %s1830 = scalar_lea.vmem %s4, %s1829
      // Predicated region
      $region37: #{conv_lstm_forward.3} parent=31 // pred_check
        %p1831 = pneg %p118
      $region38: #{conv_lstm_forward.3} parent=31 // pred_check_branch
        %1833 = sbr.rel (%p1831) target = $region40
      $region39: #{conv_lstm_forward.3} parent=31 // pred_region
        %s1834 = smul.u32 8, %s20
      $region40: #{conv_lstm_forward.3} parent=31 // pred_fallthru
        _
      // Predicated region
      $region41: #{conv_lstm_forward.3} parent=31 // pred_check
        %p1835 = pneg %p144
      $region42: #{conv_lstm_forward.3} parent=31 // pred_check_branch
        %1837 = sbr.rel (%p1835) target = $region44
      $region43: #{conv_lstm_forward.3} parent=31 // pred_region
        %s1838 = smul.u32 8, %s20
      $region44: #{conv_lstm_forward.3} parent=31 // pred_fallthru
        _
      // Predicated region
      $region45: #{conv_lstm_forward.3} parent=31 // pred_check
        %p1839 = pneg %p144
      $region46: #{conv_lstm_forward.3} parent=31 // pred_check_branch
        %1841 = sbr.rel (%p1839) target = $region48
      $region47: #{conv_lstm_forward.3} parent=31 // pred_region
        %s1842 = smul.u32 8, %s20
        %p1843 = scmp.lt.s32.totalorder %s1842, 7
        %s1844 = scalar_select %p1843, %s1842, 7
        %s1845 = smul.addr %s1844, 2
        %s1846 = smul.addr %s1845, 8
        %s1847 = scalar_lea.vmem %s4, %s1846
      $region48: #{conv_lstm_forward.3} parent=31 // pred_fallthru
        _
    $region32: #{conv_lstm_forward.3} parent=5 // pred_fallthru
      _
    %p1848 = scmp.le.s32.totalorder 2, %s11
    // Predicated region
    $region49: #{conv_lstm_forward.3} parent=5 // pred_check
      %p1849 = pneg %p1848
    $region50: #{conv_lstm_forward.3} parent=5 // pred_check_branch
      %1851 = sbr.rel (%p1849) target = $region52
    $region51: #{conv_lstm_forward.3} parent=5 // pred_region
      %s1852 = ssub.s32 %s11, 2
      // Predicated region
      $region53: #{conv_lstm_forward.3} parent=51 // pred_check
        %p1853 = pneg %p124
      $region54: #{conv_lstm_forward.3} parent=51 // pred_check_branch
        %1855 = sbr.rel (%p1853) target = $region56
      $region55: #{conv_lstm_forward.3} parent=51 // pred_region
        %s1856 = smul.u32 8, %s22
        %p1857 = scmp.lt.s32.totalorder %s23, 7
        %s1858 = scalar_select %p1857, %s23, 7
        %p1859 = scmp.lt.s32.totalorder %s1856, 7
        %s1860 = scalar_select %p1859, %s1856, 7
        %s1861 = smul.addr %s1860, 2
        %s1862 = smul.addr %s1858, 16
        %s1863 = sadd.s32 %s1861, %s1862
        %s1864 = smul.addr %s1863, 8
        %s1865 = scalar_lea.vmem %s3, %s1864
      $region56: #{conv_lstm_forward.3} parent=51 // pred_fallthru
        _
    $region52: #{conv_lstm_forward.3} parent=5 // pred_fallthru
      _
  $region6: #{conv_lstm_forward.3} parent=0 // loop_footer
    %s15 = sadd.s32 1, %s11
  $region7: #{conv_lstm_forward.3} parent=0 // loop_footer_branch
    %10 = sbr.rel target = $region3
  $region8: #{conv_lstm_forward.3} parent=0 // loop_exit
    _

</llo_original>
